<compile_context>
chip_gen: v6e
topology: v6e:2x2x1
jax: 0.10.0
libtpu: 0.0.40
codegen_flags: <defaults>
</compile_context>

<pallas_src>
import jax
import jax.numpy as jnp
from jax.experimental import pallas as pl
from jax.experimental.pallas import tpu as pltpu

HIDDEN_LAYERS = [800, 800]
IN_FEATURES = 28 * 28      # 784 (kept unpadded: 8-aligned, full-extent last dim)
OUT_FEATURES = 10

# Lane-aligned (multiple-of-128) padded output dims.
H_P = 896                  # 800 -> 896
OUT_P = 128                # 10  -> 128

TB_MAX = 512               # batch-tile cap (amortizes grid-step overhead,
                           # bounds h1/h2 f32 temps to ~1.75 MiB each)


def _round_up(x, m):
    return (x + m - 1) // m * m


def _choose_batch_tile(B):
    """Pick (TB, Bp): batch tile and padded batch size.

    - Tiny batches: one small tile (no 256-row padding for B=2).
    - Moderate batches: split into 2 tiles so v7x megacore gets both cores.
    - Large batches: TB_MAX-row tiles.
    """
    b = _round_up(B, 16)
    if b <= 16:
        return b, b
    if b <= 2 * TB_MAX:
        tb = _round_up((b + 1) // 2, 16)
        return tb, 2 * tb
    return TB_MAX, _round_up(b, TB_MAX)


def mlp_kernel(x_ref, w1_ref, b1_ref, w2_ref, b2_ref, w3_ref, b3_ref, o_ref):
    # Cast x to bf16 on the VPU (free slot under MXU-bound compute).
    x = x_ref[...].astype(jnp.bfloat16)
    # Layer 1: Linear(784 -> 896) + tanh   (bf16 operands, f32 accumulate)
    h1 = jnp.tanh(
        jnp.dot(x, w1_ref[...], preferred_element_type=jnp.float32)
        + b1_ref[...]
    )
    # Layer 2: Linear(896 -> 896) + tanh
    h2 = jnp.tanh(
        jnp.dot(h1.astype(jnp.bfloat16), w2_ref[...],
                preferred_element_type=jnp.float32)
        + b2_ref[...]
    )
    # Final: Linear(896 -> 128), no activation (cols 10..127 are zero).
    o_ref[...] = (
        jnp.dot(h2.astype(jnp.bfloat16), w3_ref[...],
                preferred_element_type=jnp.float32)
        + b3_ref[...]
    ).astype(o_ref.dtype)


def prepare_params(params):
    """One-time preprocessing: pad weights/biases to lane-aligned shapes and
    cast weights to bf16.  Call once, reuse across mlp_forward calls (this
    hoists the pad/cast HBM traffic out of the per-call path)."""
    w1, b1, w2, b2, w3, b3 = params
    w1p = jnp.pad(w1, ((0, 0), (0, H_P - HIDDEN_LAYERS[0]))).astype(jnp.bfloat16)
    b1p = jnp.pad(b1, ((0, 0), (0, H_P - HIDDEN_LAYERS[0]))).astype(jnp.float32)
    w2p = jnp.pad(w2, ((0, H_P - HIDDEN_LAYERS[0]),
                       (0, H_P - HIDDEN_LAYERS[1]))).astype(jnp.bfloat16)
    b2p = jnp.pad(b2, ((0, 0), (0, H_P - HIDDEN_LAYERS[1]))).astype(jnp.float32)
    w3p = jnp.pad(w3, ((0, H_P - HIDDEN_LAYERS[1]),
                       (0, OUT_P - OUT_FEATURES))).astype(jnp.bfloat16)
    b3p = jnp.pad(b3, ((0, 0), (0, OUT_P - OUT_FEATURES))).astype(jnp.float32)
    return (w1p, b1p, w2p, b2p, w3p, b3p)


def mlp_forward(x, prepared_params):
    """x: [B, 1, 28, 28] or [B, 784] float32. Returns logits [B, 10]."""
    B = x.shape[0]
    x2d = x.reshape(B, IN_FEATURES).astype(jnp.float32)
    w1p, b1p, w2p, b2p, w3p, b3p = prepared_params

    TB, Bp = _choose_batch_tile(B)
    grid_b = Bp // TB
    if Bp != B:
        x2d = jnp.pad(x2d, ((0, Bp - B), (0, 0)))   # batch pad only (f32, tiny)

    const = lambda shape: pl.BlockSpec(shape, lambda i: (0, 0))

    weight_bytes = ((w1p.size + w2p.size + w3p.size) * 2
                    + (b1p.size + b2p.size + b3p.size) * 4)
    cost = pl.CostEstimate(
        flops=2 * Bp * (IN_FEATURES * H_P + H_P * H_P + H_P * OUT_P),
        transcendentals=2 * Bp * H_P,
        bytes_accessed=weight_bytes + x2d.size * 4 + Bp * OUT_P * 4,
    )

    out = pl.pallas_call(
        mlp_kernel,
        out_shape=jax.ShapeDtypeStruct((Bp, OUT_P), jnp.float32),
        grid=(grid_b,),
        in_specs=[
            pl.BlockSpec((TB, IN_FEATURES), lambda i: (i, 0)),  # x: batch-tiled
            const(w1p.shape), const(b1p.shape),                 # weights: VMEM-resident
            const(w2p.shape), const(b2p.shape),
            const(w3p.shape), const(b3p.shape),
        ],
        out_specs=pl.BlockSpec((TB, OUT_P), lambda i: (i, 0)),  # lane-dense output
        compiler_params=pltpu.CompilerParams(
            dimension_semantics=("parallel",),
            vmem_limit_bytes=32 << 20,
        ),
        cost_estimate=cost,
    )(x2d, w1p, b1p, w2p, b2p, w3p, b3p)

    return out[:B, :OUT_FEATURES]


def init_params(key):
    """Deterministic init matching PyTorch nn.Linear default:
    U(-1/sqrt(fan_in), 1/sqrt(fan_in)) for both weight and bias.
    Weights stored as [in, out]."""
    dims = [IN_FEATURES, HIDDEN_LAYERS[0], HIDDEN_LAYERS[1], OUT_FEATURES]
    params = []
    for i in range(3):
        fan_in, fan_out = dims[i], dims[i + 1]
        key, kw, kb = jax.random.split(key, 3)
        bound = 1.0 / (fan_in ** 0.5)
        w = jax.random.uniform(kw, (fan_in, fan_out), jnp.float32, -bound, bound)
        b = jax.random.uniform(kb, (1, fan_out), jnp.float32, -bound, bound)
        params += [w, b]
    return tuple(params)


def reference_forward(x, params):
    B = x.shape[0]
    h = x.reshape(B, IN_FEATURES).astype(jnp.float32)
    w1, b1, w2, b2, w3, b3 = params
    h = jnp.tanh(h @ w1 + b1)
    h = jnp.tanh(h @ w2 + b2)
    return h @ w3 + b3


if __name__ == "__main__":
    key = jax.random.PRNGKey(0)
    key, kx = jax.random.split(key)
    # Small batch of MNIST-shaped inputs (NCHW): [2, 1, 28, 28]
    x = jax.random.normal(kx, (2, 1, 28, 28), jnp.float32)

    params = init_params(jax.random.PRNGKey(0))
    prepared = prepare_params(params)        # one-time pad + bf16 cast
    prepared = jax.block_until_ready(prepared)

    out = mlp_forward(x, prepared)
    out = jax.block_until_ready(out)

    ref = reference_forward(x, params)
    assert out.shape == (2, 10), out.shape
    # bf16 MXU operands with f32 accumulation -> relaxed tolerance vs f32 ref.
    max_err = float(jnp.max(jnp.abs(out - ref)))
    assert jnp.allclose(out, ref, atol=5e-2, rtol=5e-2), max_err
    print("KERNEL_OK")
</pallas_src>

<mosaic_0001>
module attributes {stable_mosaic.version = 11 : i64} {
  func.func @mlp_kernel(%arg0: i32, %arg1: memref<16x784xf32, #tpu.memory_space<vmem>>, %arg2: memref<784x896xbf16, #tpu.memory_space<vmem>>, %arg3: memref<1x896xf32, #tpu.memory_space<vmem>>, %arg4: memref<896x896xbf16, #tpu.memory_space<vmem>>, %arg5: memref<1x896xf32, #tpu.memory_space<vmem>>, %arg6: memref<896x128xbf16, #tpu.memory_space<vmem>>, %arg7: memref<1x128xf32, #tpu.memory_space<vmem>>, %arg8: memref<16x128xf32, #tpu.memory_space<vmem>>) attributes {dimension_semantics = [#tpu.dimension_semantics<parallel>], iteration_bounds = array<i64: 1>, scalar_prefetch = 0 : i64, scratch_operands = 0 : i64, tpu.core_type = #tpu.core_type<tc>, window_params = [{transform_indices = @transform_0, window_bounds = array<i64: 16, 784>}, {pipeline_mode = #tpu.pipeline_mode<synchronous>, transform_indices = @transform_1, window_bounds = array<i64: 784, 896>}, {pipeline_mode = #tpu.pipeline_mode<synchronous>, transform_indices = @transform_2, window_bounds = array<i64: 1, 896>}, {pipeline_mode = #tpu.pipeline_mode<synchronous>, transform_indices = @transform_3, window_bounds = array<i64: 896, 896>}, {pipeline_mode = #tpu.pipeline_mode<synchronous>, transform_indices = @transform_4, window_bounds = array<i64: 1, 896>}, {pipeline_mode = #tpu.pipeline_mode<synchronous>, transform_indices = @transform_5, window_bounds = array<i64: 896, 128>}, {pipeline_mode = #tpu.pipeline_mode<synchronous>, transform_indices = @transform_6, window_bounds = array<i64: 1, 128>}, {transform_indices = @transform_7, window_bounds = array<i64: 16, 128>}]} {
    %c0 = arith.constant 0 : index
    %c0_0 = arith.constant 0 : index
    %0 = vector.load %arg1[%c0, %c0_0] : memref<16x784xf32, #tpu.memory_space<vmem>>, vector<16x784xf32>
    %1 = arith.truncf %0 : vector<16x784xf32> to vector<16x784xbf16>
    %c0_1 = arith.constant 0 : index
    %c0_2 = arith.constant 0 : index
    %2 = vector.load %arg2[%c0_1, %c0_2] : memref<784x896xbf16, #tpu.memory_space<vmem>>, vector<784x896xbf16>
    %cst = arith.constant dense<0.000000e+00> : vector<16x896xf32>
    %3 = tpu.matmul %1, %2, %cst {dimension_numbers = #tpu.dot_dimension_numbers<[1], [0], [0], [1], [0, 0, 1, 1], [], []>} : vector<16x784xbf16>, vector<784x896xbf16>, vector<16x896xf32> -> vector<16x896xf32>
    %c0_3 = arith.constant 0 : index
    %c0_4 = arith.constant 0 : index
    %4 = vector.load %arg3[%c0_3, %c0_4] : memref<1x896xf32, #tpu.memory_space<vmem>>, vector<1x896xf32>
    %5 = vector.broadcast %4 : vector<1x896xf32> to vector<16x896xf32>
    %6 = arith.addf %3, %5 : vector<16x896xf32>
    %7 = math.tanh %6 : vector<16x896xf32>
    %8 = arith.truncf %7 : vector<16x896xf32> to vector<16x896xbf16>
    %c0_5 = arith.constant 0 : index
    %c0_6 = arith.constant 0 : index
    %9 = vector.load %arg4[%c0_5, %c0_6] : memref<896x896xbf16, #tpu.memory_space<vmem>>, vector<896x896xbf16>
    %cst_7 = arith.constant dense<0.000000e+00> : vector<16x896xf32>
    %10 = tpu.matmul %8, %9, %cst_7 {dimension_numbers = #tpu.dot_dimension_numbers<[1], [0], [0], [1], [0, 0, 1, 1], [], []>} : vector<16x896xbf16>, vector<896x896xbf16>, vector<16x896xf32> -> vector<16x896xf32>
    %c0_8 = arith.constant 0 : index
    %c0_9 = arith.constant 0 : index
    %11 = vector.load %arg5[%c0_8, %c0_9] : memref<1x896xf32, #tpu.memory_space<vmem>>, vector<1x896xf32>
    %12 = vector.broadcast %11 : vector<1x896xf32> to vector<16x896xf32>
    %13 = arith.addf %10, %12 : vector<16x896xf32>
    %14 = math.tanh %13 : vector<16x896xf32>
    %15 = arith.truncf %14 : vector<16x896xf32> to vector<16x896xbf16>
    %c0_10 = arith.constant 0 : index
    %c0_11 = arith.constant 0 : index
    %16 = vector.load %arg6[%c0_10, %c0_11] : memref<896x128xbf16, #tpu.memory_space<vmem>>, vector<896x128xbf16>
    %cst_12 = arith.constant dense<0.000000e+00> : vector<16x128xf32>
    %17 = tpu.matmul %15, %16, %cst_12 {dimension_numbers = #tpu.dot_dimension_numbers<[1], [0], [0], [1], [0, 0, 1, 1], [], []>} : vector<16x896xbf16>, vector<896x128xbf16>, vector<16x128xf32> -> vector<16x128xf32>
    %c0_13 = arith.constant 0 : index
    %c0_14 = arith.constant 0 : index
    %18 = vector.load %arg7[%c0_13, %c0_14] : memref<1x128xf32, #tpu.memory_space<vmem>>, vector<1x128xf32>
    %19 = vector.broadcast %18 : vector<1x128xf32> to vector<16x128xf32>
    %20 = arith.addf %17, %19 : vector<16x128xf32>
    %c0_15 = arith.constant 0 : index
    %c0_16 = arith.constant 0 : index
    %21 = vector.load %arg8[%c0_15, %c0_16] : memref<16x128xf32, #tpu.memory_space<vmem>>, vector<16x128xf32>
    tpu.vector_store %arg8[%c0_15, %c0_16], %20 {strides = array<i32>} : memref<16x128xf32, #tpu.memory_space<vmem>>, vector<16x128xf32>,
    return
  }
  func.func @transform_0(%arg0: i32) -> (i32, i32) {
    %c0_i32 = arith.constant 0 : i32
    %c0_i32_0 = arith.constant 0 : i32
    return %arg0, %c0_i32 : i32, i32
  }
  func.func @transform_1(%arg0: i32) -> (i32, i32) {
    %c0_i32 = arith.constant 0 : i32
    %c0_i32_0 = arith.constant 0 : i32
    %c0_i32_1 = arith.constant 0 : i32
    return %c0_i32, %c0_i32_0 : i32, i32
  }
  func.func @transform_2(%arg0: i32) -> (i32, i32) {
    %c0_i32 = arith.constant 0 : i32
    %c0_i32_0 = arith.constant 0 : i32
    %c0_i32_1 = arith.constant 0 : i32
    return %c0_i32, %c0_i32_0 : i32, i32
  }
  func.func @transform_3(%arg0: i32) -> (i32, i32) {
    %c0_i32 = arith.constant 0 : i32
    %c0_i32_0 = arith.constant 0 : i32
    %c0_i32_1 = arith.constant 0 : i32
    return %c0_i32, %c0_i32_0 : i32, i32
  }
  func.func @transform_4(%arg0: i32) -> (i32, i32) {
    %c0_i32 = arith.constant 0 : i32
    %c0_i32_0 = arith.constant 0 : i32
    %c0_i32_1 = arith.constant 0 : i32
    return %c0_i32, %c0_i32_0 : i32, i32
  }
  func.func @transform_5(%arg0: i32) -> (i32, i32) {
    %c0_i32 = arith.constant 0 : i32
    %c0_i32_0 = arith.constant 0 : i32
    %c0_i32_1 = arith.constant 0 : i32
    return %c0_i32, %c0_i32_0 : i32, i32
  }
  func.func @transform_6(%arg0: i32) -> (i32, i32) {
    %c0_i32 = arith.constant 0 : i32
    %c0_i32_0 = arith.constant 0 : i32
    %c0_i32_1 = arith.constant 0 : i32
    return %c0_i32, %c0_i32_0 : i32, i32
  }
  func.func @transform_7(%arg0: i32) -> (i32, i32) {
    %c0_i32 = arith.constant 0 : i32
    %c0_i32_0 = arith.constant 0 : i32
    return %arg0, %c0_i32 : i32, i32
  }
}

</mosaic_0001>

<llo_original>
// kernel: tpu_custom_call.1
$region0: #{tpu_custom_call.1}
  #allocation0 [shape = 'u32[]', space=smem, size = 0x4, offset = 0x4, fixed_abs, tag = 'smem constant byte address 0x4 - core index']
  #allocation1 [shape = 'u32[144,128]{1,0:T(1,128)}', space=vmem, size = 0x12000, scoped, tag = 'internal scratch']
  %s0 = inlined_call_operand.hbm [shape: f32[16,784], index: 0, kind: input, shape index: {}]
  %s1 = inlined_call_operand.hbm [shape: bf16[784,896], index: 1, kind: input, shape index: {}]
  %s2 = inlined_call_operand.hbm [shape: f32[1,896], index: 2, kind: input, shape index: {}]
  %s3 = inlined_call_operand.hbm [shape: bf16[896,896], index: 3, kind: input, shape index: {}]
  %s4 = inlined_call_operand.hbm [shape: f32[1,896], index: 4, kind: input, shape index: {}]
  %s5 = inlined_call_operand.hbm [shape: bf16[896,128], index: 5, kind: input, shape index: {}]
  %s6 = inlined_call_operand.hbm [shape: f32[1,128], index: 6, kind: input, shape index: {}]
  %s7 = inlined_call_operand.hbm [shape: f32[16,128], index: 7, kind: output, shape index: {}]
  %s8 = sld [smem:[#allocation0]]
  $region66: #{tpu_custom_call.1} parent=0
    _
  %s10 = ssub.s32 1, %s8
  %s11 = scalar_select 0, %s10, %s8
  $region1: #{tpu_custom_call.1} parent=0
    #allocation2 [shape = 'u8[57344]{0}', space=vmem, size = 0xe000, scoped, tag = 'input window, operand 0, single buffered']
    #allocation3 [shape = 's32[1]{0}', space=sflag, size = 0x4, scoped, tag = 'scoped memory for tpu_custom_call.1']
    #allocation4 [shape = 's32[1]{0}', space=sflag, size = 0x4, scoped, tag = 'scoped memory for tpu_custom_call.1']
    #allocation5 [shape = 'u8[1404928]{0}', space=vmem, size = 0x157000, scoped, tag = 'input window, operand 1, single buffered']
    #allocation6 [shape = 's32[1]{0}', space=sflag, size = 0x4, scoped, tag = 'scoped memory for tpu_custom_call.1']
    #allocation7 [shape = 'u8[3584]{0}', space=vmem, size = 0x1000, scoped, tag = 'input window, operand 2, single buffered']
    #allocation8 [shape = 'u8[1605632]{0}', space=vmem, size = 0x188000, scoped, tag = 'input window, operand 3, single buffered']
    #allocation9 [shape = 's32[1]{0}', space=sflag, size = 0x4, scoped, tag = 'scoped memory for tpu_custom_call.1']
    #allocation10 [shape = 'u8[3584]{0}', space=vmem, size = 0x1000, scoped, tag = 'input window, operand 4, single buffered']
    #allocation11 [shape = 'u8[229376]{0}', space=vmem, size = 0x38000, scoped, tag = 'input window, operand 5, single buffered']
    #allocation12 [shape = 's32[1]{0}', space=sflag, size = 0x4, scoped, tag = 'scoped memory for tpu_custom_call.1']
    #allocation13 [shape = 'u8[512]{0}', space=vmem, size = 0x400, scoped, tag = 'input window, operand 6, single buffered']
    #allocation14 [shape = 'u8[8192]{0}', space=vmem, size = 0x2000, scoped, tag = 'output window, operand 0, single buffered']
    %12 = vsyncpa [#allocation3], 0
    %13 = vsyncpa [#allocation6], 0
    %14 = vsyncpa [#allocation9], 0
    %15 = vsyncpa [#allocation12], 0
    %16 = vsyncpa [#allocation4], 0
    // Predicated region
    $region2: #{tpu_custom_call.1} parent=1 // pred_check
      _
    $region3: #{tpu_custom_call.1} parent=1 // pred_check_branch
      %18 = sbr.rel (0) target = $region5
    $region4: #{tpu_custom_call.1} parent=1 // pred_region
      %s20 = ssub.s32 1792, 1792
      %21 = vsyncadd [#allocation3], %s20
      %s22 = sshll.u32 [#allocation2], 4
      %s23 = int_to_ptr.vmem [resolvable:$true] %s22
      %28 = dma.hbm_to_vmem [thread:$0]  %s0, 1792, %s23, [#allocation3], 896, 896, 56
    $region5: #{tpu_custom_call.1} parent=1 // pred_fallthru
      _
    // Predicated region
    $region6: #{tpu_custom_call.1} parent=1 // pred_check
      _
    $region7: #{tpu_custom_call.1} parent=1 // pred_check_branch
      %30 = sbr.rel (0) target = $region9
    $region8: #{tpu_custom_call.1} parent=1 // pred_region
      %s32 = ssub.s32 43904, 43904
      %33 = vsyncadd [#allocation6], %s32
      %s34 = sshll.u32 [#allocation5], 4
      %s35 = int_to_ptr.vmem [resolvable:$true] %s34
      %40 = dma.hbm_to_vmem [thread:$0]  %s1, 43904, %s35, [#allocation6], 448, 448, 28
    $region9: #{tpu_custom_call.1} parent=1 // pred_fallthru
      _
    // Predicated region
    $region10: #{tpu_custom_call.1} parent=1 // pred_check
      _
    $region11: #{tpu_custom_call.1} parent=1 // pred_check_branch
      %42 = sbr.rel (0) target = $region13
    $region12: #{tpu_custom_call.1} parent=1 // pred_region
      %s44 = ssub.s32 112, 112
      %45 = vsyncadd [#allocation6], %s44
      %s47 = sshll.u32 [#allocation7], 4
      %s48 = int_to_ptr.vmem [resolvable:$true] %s47
      %50 = dma.hbm_to_vmem [thread:$0]  %s2, 112, %s48, [#allocation6]
    $region13: #{tpu_custom_call.1} parent=1 // pred_fallthru
      _
    // Predicated region
    $region14: #{tpu_custom_call.1} parent=1 // pred_check
      _
    $region15: #{tpu_custom_call.1} parent=1 // pred_check_branch
      %52 = sbr.rel (0) target = $region17
    $region16: #{tpu_custom_call.1} parent=1 // pred_region
      %s54 = ssub.s32 50176, 50176
      %55 = vsyncadd [#allocation9], %s54
      %s56 = sshll.u32 [#allocation8], 4
      %s57 = int_to_ptr.vmem [resolvable:$true] %s56
      %62 = dma.hbm_to_vmem [thread:$0]  %s3, 50176, %s57, [#allocation9], 448, 448, 28
    $region17: #{tpu_custom_call.1} parent=1 // pred_fallthru
      _
    // Predicated region
    $region18: #{tpu_custom_call.1} parent=1 // pred_check
      _
    $region19: #{tpu_custom_call.1} parent=1 // pred_check_branch
      %64 = sbr.rel (0) target = $region21
    $region20: #{tpu_custom_call.1} parent=1 // pred_region
      %s66 = ssub.s32 112, 112
      %67 = vsyncadd [#allocation9], %s66
      %s69 = sshll.u32 [#allocation10], 4
      %s70 = int_to_ptr.vmem [resolvable:$true] %s69
      %72 = dma.hbm_to_vmem [thread:$0]  %s4, 112, %s70, [#allocation9]
    $region21: #{tpu_custom_call.1} parent=1 // pred_fallthru
      _
    // Predicated region
    $region22: #{tpu_custom_call.1} parent=1 // pred_check
      _
    $region23: #{tpu_custom_call.1} parent=1 // pred_check_branch
      %74 = sbr.rel (0) target = $region25
    $region24: #{tpu_custom_call.1} parent=1 // pred_region
      %s76 = ssub.s32 7168, 7168
      %77 = vsyncadd [#allocation12], %s76
      %s78 = sshll.u32 [#allocation11], 4
      %s79 = int_to_ptr.vmem [resolvable:$true] %s78
      %84 = dma.hbm_to_vmem [thread:$0]  %s5, 7168, %s79, [#allocation12], 64, 64, 4
    $region25: #{tpu_custom_call.1} parent=1 // pred_fallthru
      _
    // Predicated region
    $region26: #{tpu_custom_call.1} parent=1 // pred_check
      _
    $region27: #{tpu_custom_call.1} parent=1 // pred_check_branch
      %86 = sbr.rel (0) target = $region29
    $region28: #{tpu_custom_call.1} parent=1 // pred_region
      %s88 = ssub.s32 16, 16
      %89 = vsyncadd [#allocation12], %s88
      %s91 = sshll.u32 [#allocation13], 4
      %s92 = int_to_ptr.vmem [resolvable:$true] %s91
      %94 = dma.hbm_to_vmem [thread:$0]  %s6, 16, %s92, [#allocation12]
    $region29: #{tpu_custom_call.1} parent=1 // pred_fallthru
      _
    // Predicated region
    $region30: #{tpu_custom_call.1} parent=1 // pred_check
      _
    $region31: #{tpu_custom_call.1} parent=1 // pred_check_branch
      %96 = sbr.rel (0) target = $region33
    $region32: #{tpu_custom_call.1} parent=1 // pred_region
      %97 = dma.done [#allocation3], 1792
    $region33: #{tpu_custom_call.1} parent=1 // pred_fallthru
      _
    // Predicated region
    $region34: #{tpu_custom_call.1} parent=1 // pred_check
      _
    $region35: #{tpu_custom_call.1} parent=1 // pred_check_branch
      %99 = sbr.rel (0) target = $region37
    $region36: #{tpu_custom_call.1} parent=1 // pred_region
      %100 = dma.done [#allocation6], 43904
    $region37: #{tpu_custom_call.1} parent=1 // pred_fallthru
      _
    // Predicated region
    $region38: #{tpu_custom_call.1} parent=1 // pred_check
      _
    $region39: #{tpu_custom_call.1} parent=1 // pred_check_branch
      %102 = sbr.rel (0) target = $region41
    $region40: #{tpu_custom_call.1} parent=1 // pred_region
      %103 = dma.done [#allocation6], 112
    $region41: #{tpu_custom_call.1} parent=1 // pred_fallthru
      _
    // Predicated region
    $region42: #{tpu_custom_call.1} parent=1 // pred_check
      _
    $region43: #{tpu_custom_call.1} parent=1 // pred_check_branch
      %105 = sbr.rel (0) target = $region45
    $region44: #{tpu_custom_call.1} parent=1 // pred_region
      %106 = dma.done [#allocation9], 50176
    $region45: #{tpu_custom_call.1} parent=1 // pred_fallthru
      _
    // Predicated region
    $region46: #{tpu_custom_call.1} parent=1 // pred_check
      _
    $region47: #{tpu_custom_call.1} parent=1 // pred_check_branch
      %108 = sbr.rel (0) target = $region49
    $region48: #{tpu_custom_call.1} parent=1 // pred_region
      %109 = dma.done [#allocation9], 112
    $region49: #{tpu_custom_call.1} parent=1 // pred_fallthru
      _
    // Predicated region
    $region50: #{tpu_custom_call.1} parent=1 // pred_check
      _
    $region51: #{tpu_custom_call.1} parent=1 // pred_check_branch
      %111 = sbr.rel (0) target = $region53
    $region52: #{tpu_custom_call.1} parent=1 // pred_region
      %112 = dma.done [#allocation12], 7168
    $region53: #{tpu_custom_call.1} parent=1 // pred_fallthru
      _
    // Predicated region
    $region54: #{tpu_custom_call.1} parent=1 // pred_check
      _
    $region55: #{tpu_custom_call.1} parent=1 // pred_check_branch
      %114 = sbr.rel (0) target = $region57
    $region56: #{tpu_custom_call.1} parent=1 // pred_region
      %115 = dma.done [#allocation12], 16
    $region57: #{tpu_custom_call.1} parent=1 // pred_fallthru
      _
    %v117 = vld [vmem:[#allocation2] sm:$0xff]
    %v118 = vld [vmem:[#allocation2 + $0x8] sm:$0xff]
    %v119 = vld [vmem:[#allocation2 + $0x10] sm:$0xff]
    %v120 = vld [vmem:[#allocation2 + $0x18] sm:$0xff]
    %v121 = vld [vmem:[#allocation2 + $0x20] sm:$0xff]
    %v122 = vld [vmem:[#allocation2 + $0x28] sm:$0xff]
    %v123 = vld [vmem:[#allocation2 + $0x30] sm:$0xff]
    %v124 = vld [vmem:[#allocation2 + $0x38] sm:$0xff]
    %v125 = vld [vmem:[#allocation2 + $0x40] sm:$0xff]
    %v126 = vld [vmem:[#allocation2 + $0x48] sm:$0xff]
    %v127 = vld [vmem:[#allocation2 + $0x50] sm:$0xff]
    %v128 = vld [vmem:[#allocation2 + $0x58] sm:$0xff]
    %v129 = vld [vmem:[#allocation2 + $0x60] sm:$0xff]
    %v130 = vld [vmem:[#allocation2 + $0x68] sm:$0xff]
    %v131 = vpack.c.bf16 %v124, %v117
    %v132 = vpack.c.bf16 %v125, %v118
    %v133 = vpack.c.bf16 %v126, %v119
    %v134 = vpack.c.bf16 %v127, %v120
    %v135 = vpack.c.bf16 %v128, %v121
    %v136 = vpack.c.bf16 %v129, %v122
    %v137 = vpack.c.bf16 %v130, %v123
    %v138 = vld [vmem:[#allocation5] sm:$0xff]
    %v139 = vld [vmem:[#allocation5 + $0x8] sm:$0xff]
    %v140 = vld [vmem:[#allocation5 + $0x10] sm:$0xff]
    %v141 = vld [vmem:[#allocation5 + $0x18] sm:$0xf]
    %v142 = vld [vmem:[#allocation5 + $0x1c] sm:$0xff]
    %v143 = vld [vmem:[#allocation5 + $0x24] sm:$0xff]
    %v144 = vld [vmem:[#allocation5 + $0x2c] sm:$0xff]
    %v145 = vld [vmem:[#allocation5 + $0x34] sm:$0xf]
    %v146 = vld [vmem:[#allocation5 + $0x38] sm:$0xff]
    %v147 = vld [vmem:[#allocation5 + $0x40] sm:$0xff]
    %v148 = vld [vmem:[#allocation5 + $0x48] sm:$0xff]
    %v149 = vld [vmem:[#allocation5 + $0x50] sm:$0xf]
    %v150 = vld [vmem:[#allocation5 + $0x54] sm:$0xff]
    %v151 = vld [vmem:[#allocation5 + $0x5c] sm:$0xff]
    %v152 = vld [vmem:[#allocation5 + $0x64] sm:$0xff]
    %v153 = vld [vmem:[#allocation5 + $0x6c] sm:$0xf]
    %v154 = vld [vmem:[#allocation5 + $0x70] sm:$0xff]
    %v155 = vld [vmem:[#allocation5 + $0x78] sm:$0xff]
    %v156 = vld [vmem:[#allocation5 + $0x80] sm:$0xff]
    %v157 = vld [vmem:[#allocation5 + $0x88] sm:$0xf]
    %v158 = vld [vmem:[#allocation5 + $0x8c] sm:$0xff]
    %v159 = vld [vmem:[#allocation5 + $0x94] sm:$0xff]
    %v160 = vld [vmem:[#allocation5 + $0x9c] sm:$0xff]
    %v161 = vld [vmem:[#allocation5 + $0xa4] sm:$0xf]
    %v162 = vld [vmem:[#allocation5 + $0xa8] sm:$0xff]
    %v163 = vld [vmem:[#allocation5 + $0xb0] sm:$0xff]
    %v164 = vld [vmem:[#allocation5 + $0xb8] sm:$0xff]
    %v165 = vld [vmem:[#allocation5 + $0xc0] sm:$0xf]
    %v166 = vld [vmem:[#allocation5 + $0xc4] sm:$0xff]
    %v167 = vld [vmem:[#allocation5 + $0xcc] sm:$0xff]
    %v168 = vld [vmem:[#allocation5 + $0xd4] sm:$0xff]
    %v169 = vld [vmem:[#allocation5 + $0xdc] sm:$0xf]
    %v170 = vld [vmem:[#allocation5 + $0xe0] sm:$0xff]
    %v171 = vld [vmem:[#allocation5 + $0xe8] sm:$0xff]
    %v172 = vld [vmem:[#allocation5 + $0xf0] sm:$0xff]
    %v173 = vld [vmem:[#allocation5 + $0xf8] sm:$0xf]
    %v174 = vld [vmem:[#allocation5 + $0xfc] sm:$0xff]
    %v175 = vld [vmem:[#allocation5 + $0x104] sm:$0xff]
    %v176 = vld [vmem:[#allocation5 + $0x10c] sm:$0xff]
    %v177 = vld [vmem:[#allocation5 + $0x114] sm:$0xf]
    %v178 = vld [vmem:[#allocation5 + $0x118] sm:$0xff]
    %v179 = vld [vmem:[#allocation5 + $0x120] sm:$0xff]
    %v180 = vld [vmem:[#allocation5 + $0x128] sm:$0xff]
    %v181 = vld [vmem:[#allocation5 + $0x130] sm:$0xf]
    %v182 = vld [vmem:[#allocation5 + $0x134] sm:$0xff]
    %v183 = vld [vmem:[#allocation5 + $0x13c] sm:$0xff]
    %v184 = vld [vmem:[#allocation5 + $0x144] sm:$0xff]
    %v185 = vld [vmem:[#allocation5 + $0x14c] sm:$0xf]
    %v186 = vld [vmem:[#allocation5 + $0x150] sm:$0xff]
    %v187 = vld [vmem:[#allocation5 + $0x158] sm:$0xff]
    %v188 = vld [vmem:[#allocation5 + $0x160] sm:$0xff]
    %v189 = vld [vmem:[#allocation5 + $0x168] sm:$0xf]
    %v190 = vld [vmem:[#allocation5 + $0x16c] sm:$0xff]
    %v191 = vld [vmem:[#allocation5 + $0x174] sm:$0xff]
    %v192 = vld [vmem:[#allocation5 + $0x17c] sm:$0xff]
    %v193 = vld [vmem:[#allocation5 + $0x184] sm:$0xf]
    %v194 = vld [vmem:[#allocation5 + $0x188] sm:$0xff]
    %v195 = vld [vmem:[#allocation5 + $0x190] sm:$0xff]
    %v196 = vld [vmem:[#allocation5 + $0x198] sm:$0xff]
    %v197 = vld [vmem:[#allocation5 + $0x1a0] sm:$0xf]
    %v198 = vld [vmem:[#allocation5 + $0x1a4] sm:$0xff]
    %v199 = vld [vmem:[#allocation5 + $0x1ac] sm:$0xff]
    %v200 = vld [vmem:[#allocation5 + $0x1b4] sm:$0xff]
    %v201 = vld [vmem:[#allocation5 + $0x1bc] sm:$0xf]
    %v202 = vld [vmem:[#allocation5 + $0x1c0] sm:$0xff]
    %v203 = vld [vmem:[#allocation5 + $0x1c8] sm:$0xff]
    %v204 = vld [vmem:[#allocation5 + $0x1d0] sm:$0xff]
    %v205 = vld [vmem:[#allocation5 + $0x1d8] sm:$0xf]
    %v206 = vld [vmem:[#allocation5 + $0x1dc] sm:$0xff]
    %v207 = vld [vmem:[#allocation5 + $0x1e4] sm:$0xff]
    %v208 = vld [vmem:[#allocation5 + $0x1ec] sm:$0xff]
    %v209 = vld [vmem:[#allocation5 + $0x1f4] sm:$0xf]
    %v210 = vld [vmem:[#allocation5 + $0x1f8] sm:$0xff]
    %v211 = vld [vmem:[#allocation5 + $0x200] sm:$0xff]
    %v212 = vld [vmem:[#allocation5 + $0x208] sm:$0xff]
    %v213 = vld [vmem:[#allocation5 + $0x210] sm:$0xf]
    %v214 = vld [vmem:[#allocation5 + $0x214] sm:$0xff]
    %v215 = vld [vmem:[#allocation5 + $0x21c] sm:$0xff]
    %v216 = vld [vmem:[#allocation5 + $0x224] sm:$0xff]
    %v217 = vld [vmem:[#allocation5 + $0x22c] sm:$0xf]
    %v218 = vld [vmem:[#allocation5 + $0x230] sm:$0xff]
    %v219 = vld [vmem:[#allocation5 + $0x238] sm:$0xff]
    %v220 = vld [vmem:[#allocation5 + $0x240] sm:$0xff]
    %v221 = vld [vmem:[#allocation5 + $0x248] sm:$0xf]
    %v222 = vld [vmem:[#allocation5 + $0x24c] sm:$0xff]
    %v223 = vld [vmem:[#allocation5 + $0x254] sm:$0xff]
    %v224 = vld [vmem:[#allocation5 + $0x25c] sm:$0xff]
    %v225 = vld [vmem:[#allocation5 + $0x264] sm:$0xf]
    %v226 = vld [vmem:[#allocation5 + $0x268] sm:$0xff]
    %v227 = vld [vmem:[#allocation5 + $0x270] sm:$0xff]
    %v228 = vld [vmem:[#allocation5 + $0x278] sm:$0xff]
    %v229 = vld [vmem:[#allocation5 + $0x280] sm:$0xf]
    %v230 = vld [vmem:[#allocation5 + $0x284] sm:$0xff]
    %v231 = vld [vmem:[#allocation5 + $0x28c] sm:$0xff]
    %v232 = vld [vmem:[#allocation5 + $0x294] sm:$0xff]
    %v233 = vld [vmem:[#allocation5 + $0x29c] sm:$0xf]
    %v234 = vld [vmem:[#allocation5 + $0x2a0] sm:$0xff]
    %v235 = vld [vmem:[#allocation5 + $0x2a8] sm:$0xff]
    %v236 = vld [vmem:[#allocation5 + $0x2b0] sm:$0xff]
    %v237 = vld [vmem:[#allocation5 + $0x2b8] sm:$0xf]
    %v238 = vld [vmem:[#allocation5 + $0x2bc] sm:$0xff]
    %v239 = vld [vmem:[#allocation5 + $0x2c4] sm:$0xff]
    %v240 = vld [vmem:[#allocation5 + $0x2cc] sm:$0xff]
    %v241 = vld [vmem:[#allocation5 + $0x2d4] sm:$0xf]
    %v242 = vld [vmem:[#allocation5 + $0x2d8] sm:$0xff]
    %v243 = vld [vmem:[#allocation5 + $0x2e0] sm:$0xff]
    %v244 = vld [vmem:[#allocation5 + $0x2e8] sm:$0xff]
    %v245 = vld [vmem:[#allocation5 + $0x2f0] sm:$0xf]
    %v246 = vld [vmem:[#allocation5 + $0x2f4] sm:$0xff]
    %v247 = vld [vmem:[#allocation5 + $0x2fc] sm:$0xff]
    %v248 = vld [vmem:[#allocation5 + $0x304] sm:$0xff]
    %v249 = vld [vmem:[#allocation5 + $0x30c] sm:$0xf]
    %v250 = vld [vmem:[#allocation5 + $0x310] sm:$0xff]
    %v251 = vld [vmem:[#allocation5 + $0x318] sm:$0xff]
    %v252 = vld [vmem:[#allocation5 + $0x320] sm:$0xff]
    %v253 = vld [vmem:[#allocation5 + $0x328] sm:$0xf]
    %v254 = vld [vmem:[#allocation5 + $0x32c] sm:$0xff]
    %v255 = vld [vmem:[#allocation5 + $0x334] sm:$0xff]
    %v256 = vld [vmem:[#allocation5 + $0x33c] sm:$0xff]
    %v257 = vld [vmem:[#allocation5 + $0x344] sm:$0xf]
    %v258 = vld [vmem:[#allocation5 + $0x348] sm:$0xff]
    %v259 = vld [vmem:[#allocation5 + $0x350] sm:$0xff]
    %v260 = vld [vmem:[#allocation5 + $0x358] sm:$0xff]
    %v261 = vld [vmem:[#allocation5 + $0x360] sm:$0xf]
    %v262 = vld [vmem:[#allocation5 + $0x364] sm:$0xff]
    %v263 = vld [vmem:[#allocation5 + $0x36c] sm:$0xff]
    %v264 = vld [vmem:[#allocation5 + $0x374] sm:$0xff]
    %v265 = vld [vmem:[#allocation5 + $0x37c] sm:$0xf]
    %v266 = vld [vmem:[#allocation5 + $0x380] sm:$0xff]
    %v267 = vld [vmem:[#allocation5 + $0x388] sm:$0xff]
    %v268 = vld [vmem:[#allocation5 + $0x390] sm:$0xff]
    %v269 = vld [vmem:[#allocation5 + $0x398] sm:$0xf]
    %v270 = vld [vmem:[#allocation5 + $0x39c] sm:$0xff]
    %v271 = vld [vmem:[#allocation5 + $0x3a4] sm:$0xff]
    %v272 = vld [vmem:[#allocation5 + $0x3ac] sm:$0xff]
    %v273 = vld [vmem:[#allocation5 + $0x3b4] sm:$0xf]
    %v274 = vld [vmem:[#allocation5 + $0x3b8] sm:$0xff]
    %v275 = vld [vmem:[#allocation5 + $0x3c0] sm:$0xff]
    %v276 = vld [vmem:[#allocation5 + $0x3c8] sm:$0xff]
    %v277 = vld [vmem:[#allocation5 + $0x3d0] sm:$0xf]
    %v278 = vld [vmem:[#allocation5 + $0x3d4] sm:$0xff]
    %v279 = vld [vmem:[#allocation5 + $0x3dc] sm:$0xff]
    %v280 = vld [vmem:[#allocation5 + $0x3e4] sm:$0xff]
    %v281 = vld [vmem:[#allocation5 + $0x3ec] sm:$0xf]
    %v282 = vld [vmem:[#allocation5 + $0x3f0] sm:$0xff]
    %v283 = vld [vmem:[#allocation5 + $0x3f8] sm:$0xff]
    %v284 = vld [vmem:[#allocation5 + $0x400] sm:$0xff]
    %v285 = vld [vmem:[#allocation5 + $0x408] sm:$0xf]
    %v286 = vld [vmem:[#allocation5 + $0x40c] sm:$0xff]
    %v287 = vld [vmem:[#allocation5 + $0x414] sm:$0xff]
    %v288 = vld [vmem:[#allocation5 + $0x41c] sm:$0xff]
    %v289 = vld [vmem:[#allocation5 + $0x424] sm:$0xf]
    %v290 = vld [vmem:[#allocation5 + $0x428] sm:$0xff]
    %v291 = vld [vmem:[#allocation5 + $0x430] sm:$0xff]
    %v292 = vld [vmem:[#allocation5 + $0x438] sm:$0xff]
    %v293 = vld [vmem:[#allocation5 + $0x440] sm:$0xf]
    %v294 = vld [vmem:[#allocation5 + $0x444] sm:$0xff]
    %v295 = vld [vmem:[#allocation5 + $0x44c] sm:$0xff]
    %v296 = vld [vmem:[#allocation5 + $0x454] sm:$0xff]
    %v297 = vld [vmem:[#allocation5 + $0x45c] sm:$0xf]
    %v298 = vld [vmem:[#allocation5 + $0x460] sm:$0xff]
    %v299 = vld [vmem:[#allocation5 + $0x468] sm:$0xff]
    %v300 = vld [vmem:[#allocation5 + $0x470] sm:$0xff]
    %v301 = vld [vmem:[#allocation5 + $0x478] sm:$0xf]
    %v302 = vld [vmem:[#allocation5 + $0x47c] sm:$0xff]
    %v303 = vld [vmem:[#allocation5 + $0x484] sm:$0xff]
    %v304 = vld [vmem:[#allocation5 + $0x48c] sm:$0xff]
    %v305 = vld [vmem:[#allocation5 + $0x494] sm:$0xf]
    %v306 = vld [vmem:[#allocation5 + $0x498] sm:$0xff]
    %v307 = vld [vmem:[#allocation5 + $0x4a0] sm:$0xff]
    %v308 = vld [vmem:[#allocation5 + $0x4a8] sm:$0xff]
    %v309 = vld [vmem:[#allocation5 + $0x4b0] sm:$0xf]
    %v310 = vld [vmem:[#allocation5 + $0x4b4] sm:$0xff]
    %v311 = vld [vmem:[#allocation5 + $0x4bc] sm:$0xff]
    %v312 = vld [vmem:[#allocation5 + $0x4c4] sm:$0xff]
    %v313 = vld [vmem:[#allocation5 + $0x4cc] sm:$0xf]
    %v314 = vld [vmem:[#allocation5 + $0x4d0] sm:$0xff]
    %v315 = vld [vmem:[#allocation5 + $0x4d8] sm:$0xff]
    %v316 = vld [vmem:[#allocation5 + $0x4e0] sm:$0xff]
    %v317 = vld [vmem:[#allocation5 + $0x4e8] sm:$0xf]
    %v318 = vld [vmem:[#allocation5 + $0x4ec] sm:$0xff]
    %v319 = vld [vmem:[#allocation5 + $0x4f4] sm:$0xff]
    %v320 = vld [vmem:[#allocation5 + $0x4fc] sm:$0xff]
    %v321 = vld [vmem:[#allocation5 + $0x504] sm:$0xf]
    %v322 = vld [vmem:[#allocation5 + $0x508] sm:$0xff]
    %v323 = vld [vmem:[#allocation5 + $0x510] sm:$0xff]
    %v324 = vld [vmem:[#allocation5 + $0x518] sm:$0xff]
    %v325 = vld [vmem:[#allocation5 + $0x520] sm:$0xf]
    %v326 = vld [vmem:[#allocation5 + $0x524] sm:$0xff]
    %v327 = vld [vmem:[#allocation5 + $0x52c] sm:$0xff]
    %v328 = vld [vmem:[#allocation5 + $0x534] sm:$0xff]
    %v329 = vld [vmem:[#allocation5 + $0x53c] sm:$0xf]
    %v330 = vld [vmem:[#allocation5 + $0x540] sm:$0xff]
    %v331 = vld [vmem:[#allocation5 + $0x548] sm:$0xff]
    %v332 = vld [vmem:[#allocation5 + $0x550] sm:$0xff]
    %v333 = vld [vmem:[#allocation5 + $0x558] sm:$0xf]
    %v334 = vld [vmem:[#allocation5 + $0x55c] sm:$0xff]
    %v335 = vld [vmem:[#allocation5 + $0x564] sm:$0xff]
    %v336 = vld [vmem:[#allocation5 + $0x56c] sm:$0xff]
    %v337 = vld [vmem:[#allocation5 + $0x574] sm:$0xf]
    %v338 = vld [vmem:[#allocation5 + $0x578] sm:$0xff]
    %v339 = vld [vmem:[#allocation5 + $0x580] sm:$0xff]
    %v340 = vld [vmem:[#allocation5 + $0x588] sm:$0xff]
    %v341 = vld [vmem:[#allocation5 + $0x590] sm:$0xf]
    %v342 = vld [vmem:[#allocation5 + $0x594] sm:$0xff]
    %v343 = vld [vmem:[#allocation5 + $0x59c] sm:$0xff]
    %v344 = vld [vmem:[#allocation5 + $0x5a4] sm:$0xff]
    %v345 = vld [vmem:[#allocation5 + $0x5ac] sm:$0xf]
    %v346 = vld [vmem:[#allocation5 + $0x5b0] sm:$0xff]
    %v347 = vld [vmem:[#allocation5 + $0x5b8] sm:$0xff]
    %v348 = vld [vmem:[#allocation5 + $0x5c0] sm:$0xff]
    %v349 = vld [vmem:[#allocation5 + $0x5c8] sm:$0xf]
    %v350 = vld [vmem:[#allocation5 + $0x5cc] sm:$0xff]
    %v351 = vld [vmem:[#allocation5 + $0x5d4] sm:$0xff]
    %v352 = vld [vmem:[#allocation5 + $0x5dc] sm:$0xff]
    %v353 = vld [vmem:[#allocation5 + $0x5e4] sm:$0xf]
    %v354 = vld [vmem:[#allocation5 + $0x5e8] sm:$0xff]
    %v355 = vld [vmem:[#allocation5 + $0x5f0] sm:$0xff]
    %v356 = vld [vmem:[#allocation5 + $0x5f8] sm:$0xff]
    %v357 = vld [vmem:[#allocation5 + $0x600] sm:$0xf]
    %v358 = vld [vmem:[#allocation5 + $0x604] sm:$0xff]
    %v359 = vld [vmem:[#allocation5 + $0x60c] sm:$0xff]
    %v360 = vld [vmem:[#allocation5 + $0x614] sm:$0xff]
    %v361 = vld [vmem:[#allocation5 + $0x61c] sm:$0xf]
    %v362 = vld [vmem:[#allocation5 + $0x620] sm:$0xff]
    %v363 = vld [vmem:[#allocation5 + $0x628] sm:$0xff]
    %v364 = vld [vmem:[#allocation5 + $0x630] sm:$0xff]
    %v365 = vld [vmem:[#allocation5 + $0x638] sm:$0xf]
    %v366 = vld [vmem:[#allocation5 + $0x63c] sm:$0xff]
    %v367 = vld [vmem:[#allocation5 + $0x644] sm:$0xff]
    %v368 = vld [vmem:[#allocation5 + $0x64c] sm:$0xff]
    %v369 = vld [vmem:[#allocation5 + $0x654] sm:$0xf]
    %v370 = vld [vmem:[#allocation5 + $0x658] sm:$0xff]
    %v371 = vld [vmem:[#allocation5 + $0x660] sm:$0xff]
    %v372 = vld [vmem:[#allocation5 + $0x668] sm:$0xff]
    %v373 = vld [vmem:[#allocation5 + $0x670] sm:$0xf]
    %v374 = vld [vmem:[#allocation5 + $0x674] sm:$0xff]
    %v375 = vld [vmem:[#allocation5 + $0x67c] sm:$0xff]
    %v376 = vld [vmem:[#allocation5 + $0x684] sm:$0xff]
    %v377 = vld [vmem:[#allocation5 + $0x68c] sm:$0xf]
    %v378 = vld [vmem:[#allocation5 + $0x690] sm:$0xff]
    %v379 = vld [vmem:[#allocation5 + $0x698] sm:$0xff]
    %v380 = vld [vmem:[#allocation5 + $0x6a0] sm:$0xff]
    %v381 = vld [vmem:[#allocation5 + $0x6a8] sm:$0xf]
    %v382 = vld [vmem:[#allocation5 + $0x6ac] sm:$0xff]
    %v383 = vld [vmem:[#allocation5 + $0x6b4] sm:$0xff]
    %v384 = vld [vmem:[#allocation5 + $0x6bc] sm:$0xff]
    %v385 = vld [vmem:[#allocation5 + $0x6c4] sm:$0xf]
    %v386 = vld [vmem:[#allocation5 + $0x6c8] sm:$0xff]
    %v387 = vld [vmem:[#allocation5 + $0x6d0] sm:$0xff]
    %v388 = vld [vmem:[#allocation5 + $0x6d8] sm:$0xff]
    %v389 = vld [vmem:[#allocation5 + $0x6e0] sm:$0xf]
    %v390 = vld [vmem:[#allocation5 + $0x6e4] sm:$0xff]
    %v391 = vld [vmem:[#allocation5 + $0x6ec] sm:$0xff]
    %v392 = vld [vmem:[#allocation5 + $0x6f4] sm:$0xff]
    %v393 = vld [vmem:[#allocation5 + $0x6fc] sm:$0xf]
    %v394 = vld [vmem:[#allocation5 + $0x700] sm:$0xff]
    %v395 = vld [vmem:[#allocation5 + $0x708] sm:$0xff]
    %v396 = vld [vmem:[#allocation5 + $0x710] sm:$0xff]
    %v397 = vld [vmem:[#allocation5 + $0x718] sm:$0xf]
    %v398 = vld [vmem:[#allocation5 + $0x71c] sm:$0xff]
    %v399 = vld [vmem:[#allocation5 + $0x724] sm:$0xff]
    %v400 = vld [vmem:[#allocation5 + $0x72c] sm:$0xff]
    %v401 = vld [vmem:[#allocation5 + $0x734] sm:$0xf]
    %v402 = vld [vmem:[#allocation5 + $0x738] sm:$0xff]
    %v403 = vld [vmem:[#allocation5 + $0x740] sm:$0xff]
    %v404 = vld [vmem:[#allocation5 + $0x748] sm:$0xff]
    %v405 = vld [vmem:[#allocation5 + $0x750] sm:$0xf]
    %v406 = vld [vmem:[#allocation5 + $0x754] sm:$0xff]
    %v407 = vld [vmem:[#allocation5 + $0x75c] sm:$0xff]
    %v408 = vld [vmem:[#allocation5 + $0x764] sm:$0xff]
    %v409 = vld [vmem:[#allocation5 + $0x76c] sm:$0xf]
    %v410 = vld [vmem:[#allocation5 + $0x770] sm:$0xff]
    %v411 = vld [vmem:[#allocation5 + $0x778] sm:$0xff]
    %v412 = vld [vmem:[#allocation5 + $0x780] sm:$0xff]
    %v413 = vld [vmem:[#allocation5 + $0x788] sm:$0xf]
    %v414 = vld [vmem:[#allocation5 + $0x78c] sm:$0xff]
    %v415 = vld [vmem:[#allocation5 + $0x794] sm:$0xff]
    %v416 = vld [vmem:[#allocation5 + $0x79c] sm:$0xff]
    %v417 = vld [vmem:[#allocation5 + $0x7a4] sm:$0xf]
    %v418 = vld [vmem:[#allocation5 + $0x7a8] sm:$0xff]
    %v419 = vld [vmem:[#allocation5 + $0x7b0] sm:$0xff]
    %v420 = vld [vmem:[#allocation5 + $0x7b8] sm:$0xff]
    %v421 = vld [vmem:[#allocation5 + $0x7c0] sm:$0xf]
    %v422 = vld [vmem:[#allocation5 + $0x7c4] sm:$0xff]
    %v423 = vld [vmem:[#allocation5 + $0x7cc] sm:$0xff]
    %v424 = vld [vmem:[#allocation5 + $0x7d4] sm:$0xff]
    %v425 = vld [vmem:[#allocation5 + $0x7dc] sm:$0xf]
    %v426 = vld [vmem:[#allocation5 + $0x7e0] sm:$0xff]
    %v427 = vld [vmem:[#allocation5 + $0x7e8] sm:$0xff]
    %v428 = vld [vmem:[#allocation5 + $0x7f0] sm:$0xff]
    %v429 = vld [vmem:[#allocation5 + $0x7f8] sm:$0xf]
    %v430 = vld [vmem:[#allocation5 + $0x7fc] sm:$0xff]
    %v431 = vld [vmem:[#allocation5 + $0x804] sm:$0xff]
    %v432 = vld [vmem:[#allocation5 + $0x80c] sm:$0xff]
    %v433 = vld [vmem:[#allocation5 + $0x814] sm:$0xf]
    %v434 = vld [vmem:[#allocation5 + $0x818] sm:$0xff]
    %v435 = vld [vmem:[#allocation5 + $0x820] sm:$0xff]
    %v436 = vld [vmem:[#allocation5 + $0x828] sm:$0xff]
    %v437 = vld [vmem:[#allocation5 + $0x830] sm:$0xf]
    %v438 = vld [vmem:[#allocation5 + $0x834] sm:$0xff]
    %v439 = vld [vmem:[#allocation5 + $0x83c] sm:$0xff]
    %v440 = vld [vmem:[#allocation5 + $0x844] sm:$0xff]
    %v441 = vld [vmem:[#allocation5 + $0x84c] sm:$0xf]
    %v442 = vld [vmem:[#allocation5 + $0x850] sm:$0xff]
    %v443 = vld [vmem:[#allocation5 + $0x858] sm:$0xff]
    %v444 = vld [vmem:[#allocation5 + $0x860] sm:$0xff]
    %v445 = vld [vmem:[#allocation5 + $0x868] sm:$0xf]
    %v446 = vld [vmem:[#allocation5 + $0x86c] sm:$0xff]
    %v447 = vld [vmem:[#allocation5 + $0x874] sm:$0xff]
    %v448 = vld [vmem:[#allocation5 + $0x87c] sm:$0xff]
    %v449 = vld [vmem:[#allocation5 + $0x884] sm:$0xf]
    %v450 = vld [vmem:[#allocation5 + $0x888] sm:$0xff]
    %v451 = vld [vmem:[#allocation5 + $0x890] sm:$0xff]
    %v452 = vld [vmem:[#allocation5 + $0x898] sm:$0xff]
    %v453 = vld [vmem:[#allocation5 + $0x8a0] sm:$0xf]
    %v454 = vld [vmem:[#allocation5 + $0x8a4] sm:$0xff]
    %v455 = vld [vmem:[#allocation5 + $0x8ac] sm:$0xff]
    %v456 = vld [vmem:[#allocation5 + $0x8b4] sm:$0xff]
    %v457 = vld [vmem:[#allocation5 + $0x8bc] sm:$0xf]
    %v458 = vld [vmem:[#allocation5 + $0x8c0] sm:$0xff]
    %v459 = vld [vmem:[#allocation5 + $0x8c8] sm:$0xff]
    %v460 = vld [vmem:[#allocation5 + $0x8d0] sm:$0xff]
    %v461 = vld [vmem:[#allocation5 + $0x8d8] sm:$0xf]
    %v462 = vld [vmem:[#allocation5 + $0x8dc] sm:$0xff]
    %v463 = vld [vmem:[#allocation5 + $0x8e4] sm:$0xff]
    %v464 = vld [vmem:[#allocation5 + $0x8ec] sm:$0xff]
    %v465 = vld [vmem:[#allocation5 + $0x8f4] sm:$0xf]
    %v466 = vld [vmem:[#allocation5 + $0x8f8] sm:$0xff]
    %v467 = vld [vmem:[#allocation5 + $0x900] sm:$0xff]
    %v468 = vld [vmem:[#allocation5 + $0x908] sm:$0xff]
    %v469 = vld [vmem:[#allocation5 + $0x910] sm:$0xf]
    %v470 = vld [vmem:[#allocation5 + $0x914] sm:$0xff]
    %v471 = vld [vmem:[#allocation5 + $0x91c] sm:$0xff]
    %v472 = vld [vmem:[#allocation5 + $0x924] sm:$0xff]
    %v473 = vld [vmem:[#allocation5 + $0x92c] sm:$0xf]
    %v474 = vld [vmem:[#allocation5 + $0x930] sm:$0xff]
    %v475 = vld [vmem:[#allocation5 + $0x938] sm:$0xff]
    %v476 = vld [vmem:[#allocation5 + $0x940] sm:$0xff]
    %v477 = vld [vmem:[#allocation5 + $0x948] sm:$0xf]
    %v478 = vld [vmem:[#allocation5 + $0x94c] sm:$0xff]
    %v479 = vld [vmem:[#allocation5 + $0x954] sm:$0xff]
    %v480 = vld [vmem:[#allocation5 + $0x95c] sm:$0xff]
    %v481 = vld [vmem:[#allocation5 + $0x964] sm:$0xf]
    %v482 = vld [vmem:[#allocation5 + $0x968] sm:$0xff]
    %v483 = vld [vmem:[#allocation5 + $0x970] sm:$0xff]
    %v484 = vld [vmem:[#allocation5 + $0x978] sm:$0xff]
    %v485 = vld [vmem:[#allocation5 + $0x980] sm:$0xf]
    %v486 = vld [vmem:[#allocation5 + $0x984] sm:$0xff]
    %v487 = vld [vmem:[#allocation5 + $0x98c] sm:$0xff]
    %v488 = vld [vmem:[#allocation5 + $0x994] sm:$0xff]
    %v489 = vld [vmem:[#allocation5 + $0x99c] sm:$0xf]
    %v490 = vld [vmem:[#allocation5 + $0x9a0] sm:$0xff]
    %v491 = vld [vmem:[#allocation5 + $0x9a8] sm:$0xff]
    %v492 = vld [vmem:[#allocation5 + $0x9b0] sm:$0xff]
    %v493 = vld [vmem:[#allocation5 + $0x9b8] sm:$0xf]
    %v494 = vld [vmem:[#allocation5 + $0x9bc] sm:$0xff]
    %v495 = vld [vmem:[#allocation5 + $0x9c4] sm:$0xff]
    %v496 = vld [vmem:[#allocation5 + $0x9cc] sm:$0xff]
    %v497 = vld [vmem:[#allocation5 + $0x9d4] sm:$0xf]
    %v498 = vld [vmem:[#allocation5 + $0x9d8] sm:$0xff]
    %v499 = vld [vmem:[#allocation5 + $0x9e0] sm:$0xff]
    %v500 = vld [vmem:[#allocation5 + $0x9e8] sm:$0xff]
    %v501 = vld [vmem:[#allocation5 + $0x9f0] sm:$0xf]
    %v502 = vld [vmem:[#allocation5 + $0x9f4] sm:$0xff]
    %v503 = vld [vmem:[#allocation5 + $0x9fc] sm:$0xff]
    %v504 = vld [vmem:[#allocation5 + $0xa04] sm:$0xff]
    %v505 = vld [vmem:[#allocation5 + $0xa0c] sm:$0xf]
    %v506 = vld [vmem:[#allocation5 + $0xa10] sm:$0xff]
    %v507 = vld [vmem:[#allocation5 + $0xa18] sm:$0xff]
    %v508 = vld [vmem:[#allocation5 + $0xa20] sm:$0xff]
    %v509 = vld [vmem:[#allocation5 + $0xa28] sm:$0xf]
    %v510 = vld [vmem:[#allocation5 + $0xa2c] sm:$0xff]
    %v511 = vld [vmem:[#allocation5 + $0xa34] sm:$0xff]
    %v512 = vld [vmem:[#allocation5 + $0xa3c] sm:$0xff]
    %v513 = vld [vmem:[#allocation5 + $0xa44] sm:$0xf]
    %v514 = vld [vmem:[#allocation5 + $0xa48] sm:$0xff]
    %v515 = vld [vmem:[#allocation5 + $0xa50] sm:$0xff]
    %v516 = vld [vmem:[#allocation5 + $0xa58] sm:$0xff]
    %v517 = vld [vmem:[#allocation5 + $0xa60] sm:$0xf]
    %v518 = vld [vmem:[#allocation5 + $0xa64] sm:$0xff]
    %v519 = vld [vmem:[#allocation5 + $0xa6c] sm:$0xff]
    %v520 = vld [vmem:[#allocation5 + $0xa74] sm:$0xff]
    %v521 = vld [vmem:[#allocation5 + $0xa7c] sm:$0xf]
    %v522 = vld [vmem:[#allocation5 + $0xa80] sm:$0xff]
    %v523 = vld [vmem:[#allocation5 + $0xa88] sm:$0xff]
    %v524 = vld [vmem:[#allocation5 + $0xa90] sm:$0xff]
    %v525 = vld [vmem:[#allocation5 + $0xa98] sm:$0xf]
    %v526 = vld [vmem:[#allocation5 + $0xa9c] sm:$0xff]
    %v527 = vld [vmem:[#allocation5 + $0xaa4] sm:$0xff]
    %v528 = vld [vmem:[#allocation5 + $0xaac] sm:$0xff]
    %v529 = vld [vmem:[#allocation5 + $0xab4] sm:$0xf]
    %v530 = vld [vmem:[#allocation7] sm:$0xff]
    %v532 = vlaneseq
    %v533 = vshrl.u32 %v532, 7
    %v534 = vsub.s32 0, %v533
    %v535 = vrot.slane %v530, %v534
    %v536 = vlaneseq
    %v537 = vshrl.u32 %v536, 7
    %v538 = vsub.s32 1, %v537
    %v539 = vrot.slane %v530, %v538
    %v540 = vlaneseq
    %v541 = vshrl.u32 %v540, 7
    %v542 = vsub.s32 2, %v541
    %v543 = vrot.slane %v530, %v542
    %v544 = vlaneseq
    %v545 = vshrl.u32 %v544, 7
    %v546 = vsub.s32 3, %v545
    %v547 = vrot.slane %v530, %v546
    %v548 = vlaneseq
    %v549 = vshrl.u32 %v548, 7
    %v550 = vsub.s32 4, %v549
    %v551 = vrot.slane %v530, %v550
    %v552 = vlaneseq
    %v553 = vshrl.u32 %v552, 7
    %v554 = vsub.s32 5, %v553
    %v555 = vrot.slane %v530, %v554
    %v556 = vlaneseq
    %v557 = vshrl.u32 %v556, 7
    %v558 = vsub.s32 6, %v557
    %v559 = vrot.slane %v530, %v558
    %v959 = vunpack.c.l.b16 %v138
    %v960 = vunpack.c.h.b16 %v138
    %v961 = vunpack.c.l.b16 %v139
    %v962 = vunpack.c.h.b16 %v139
    %v963 = vunpack.c.l.b16 %v140
    %v964 = vunpack.c.h.b16 %v140
    %v965 = vunpack.c.l.b16 %v141
    %v966 = vunpack.c.l.b16 %v142
    %v967 = vunpack.c.h.b16 %v142
    %v968 = vunpack.c.l.b16 %v143
    %v969 = vunpack.c.h.b16 %v143
    %v970 = vunpack.c.l.b16 %v144
    %v971 = vunpack.c.h.b16 %v144
    %v972 = vunpack.c.l.b16 %v145
    %v973 = vunpack.c.l.b16 %v146
    %v974 = vunpack.c.h.b16 %v146
    %v975 = vunpack.c.l.b16 %v147
    %v976 = vunpack.c.h.b16 %v147
    %v977 = vunpack.c.l.b16 %v148
    %v978 = vunpack.c.h.b16 %v148
    %v979 = vunpack.c.l.b16 %v149
    %v980 = vunpack.c.l.b16 %v150
    %v981 = vunpack.c.h.b16 %v150
    %v982 = vunpack.c.l.b16 %v151
    %v983 = vunpack.c.h.b16 %v151
    %v984 = vunpack.c.l.b16 %v152
    %v985 = vunpack.c.h.b16 %v152
    %v986 = vunpack.c.l.b16 %v153
    %v987 = vunpack.c.l.b16 %v154
    %v988 = vunpack.c.h.b16 %v154
    %v989 = vunpack.c.l.b16 %v155
    %v990 = vunpack.c.h.b16 %v155
    %v991 = vunpack.c.l.b16 %v156
    %v992 = vunpack.c.h.b16 %v156
    %v993 = vunpack.c.l.b16 %v157
    %v994 = vunpack.c.l.b16 %v158
    %v995 = vunpack.c.h.b16 %v158
    %v996 = vunpack.c.l.b16 %v159
    %v997 = vunpack.c.h.b16 %v159
    %v998 = vunpack.c.l.b16 %v160
    %v999 = vunpack.c.h.b16 %v160
    %v1000 = vunpack.c.l.b16 %v161
    %v1001 = vunpack.c.l.b16 %v162
    %v1002 = vunpack.c.h.b16 %v162
    %v1003 = vunpack.c.l.b16 %v163
    %v1004 = vunpack.c.h.b16 %v163
    %v1005 = vunpack.c.l.b16 %v164
    %v1006 = vunpack.c.h.b16 %v164
    %v1007 = vunpack.c.l.b16 %v165
    %v1008 = vunpack.c.l.b16 %v166
    %v1009 = vunpack.c.h.b16 %v166
    %v1010 = vunpack.c.l.b16 %v167
    %v1011 = vunpack.c.h.b16 %v167
    %v1012 = vunpack.c.l.b16 %v168
    %v1013 = vunpack.c.h.b16 %v168
    %v1014 = vunpack.c.l.b16 %v169
    %v1015 = vunpack.c.l.b16 %v170
    %v1016 = vunpack.c.h.b16 %v170
    %v1017 = vunpack.c.l.b16 %v171
    %v1018 = vunpack.c.h.b16 %v171
    %v1019 = vunpack.c.l.b16 %v172
    %v1020 = vunpack.c.h.b16 %v172
    %v1021 = vunpack.c.l.b16 %v173
    %v1022 = vunpack.c.l.b16 %v174
    %v1023 = vunpack.c.h.b16 %v174
    %v1024 = vunpack.c.l.b16 %v175
    %v1025 = vunpack.c.h.b16 %v175
    %v1026 = vunpack.c.l.b16 %v176
    %v1027 = vunpack.c.h.b16 %v176
    %v1028 = vunpack.c.l.b16 %v177
    %v1029 = vunpack.c.l.b16 %v178
    %v1030 = vunpack.c.h.b16 %v178
    %v1031 = vunpack.c.l.b16 %v179
    %v1032 = vunpack.c.h.b16 %v179
    %v1033 = vunpack.c.l.b16 %v180
    %v1034 = vunpack.c.h.b16 %v180
    %v1035 = vunpack.c.l.b16 %v181
    %v1036 = vunpack.c.l.b16 %v182
    %v1037 = vunpack.c.h.b16 %v182
    %v1038 = vunpack.c.l.b16 %v183
    %v1039 = vunpack.c.h.b16 %v183
    %v1040 = vunpack.c.l.b16 %v184
    %v1041 = vunpack.c.h.b16 %v184
    %v1042 = vunpack.c.l.b16 %v185
    %v1043 = vunpack.c.l.b16 %v186
    %v1044 = vunpack.c.h.b16 %v186
    %v1045 = vunpack.c.l.b16 %v187
    %v1046 = vunpack.c.h.b16 %v187
    %v1047 = vunpack.c.l.b16 %v188
    %v1048 = vunpack.c.h.b16 %v188
    %v1049 = vunpack.c.l.b16 %v189
    %v1050 = vunpack.c.l.b16 %v190
    %v1051 = vunpack.c.h.b16 %v190
    %v1052 = vunpack.c.l.b16 %v191
    %v1053 = vunpack.c.h.b16 %v191
    %v1054 = vunpack.c.l.b16 %v192
    %v1055 = vunpack.c.h.b16 %v192
    %v1056 = vunpack.c.l.b16 %v193
    %v1057 = vunpack.c.l.b16 %v194
    %v1058 = vunpack.c.h.b16 %v194
    %v1059 = vunpack.c.l.b16 %v195
    %v1060 = vunpack.c.h.b16 %v195
    %v1061 = vunpack.c.l.b16 %v196
    %v1062 = vunpack.c.h.b16 %v196
    %v1063 = vunpack.c.l.b16 %v197
    %v1064 = vunpack.c.l.b16 %v198
    %v1065 = vunpack.c.h.b16 %v198
    %v1066 = vunpack.c.l.b16 %v199
    %v1067 = vunpack.c.h.b16 %v199
    %v1068 = vunpack.c.l.b16 %v200
    %v1069 = vunpack.c.h.b16 %v200
    %v1070 = vunpack.c.l.b16 %v201
    %v1071 = vunpack.c.l.b16 %v202
    %v1072 = vunpack.c.h.b16 %v202
    %v1073 = vunpack.c.l.b16 %v203
    %v1074 = vunpack.c.h.b16 %v203
    %v1075 = vunpack.c.l.b16 %v204
    %v1076 = vunpack.c.h.b16 %v204
    %v1077 = vunpack.c.l.b16 %v205
    %v1078 = vunpack.c.l.b16 %v206
    %v1079 = vunpack.c.h.b16 %v206
    %v1080 = vunpack.c.l.b16 %v207
    %v1081 = vunpack.c.h.b16 %v207
    %v1082 = vunpack.c.l.b16 %v208
    %v1083 = vunpack.c.h.b16 %v208
    %v1084 = vunpack.c.l.b16 %v209
    %v1085 = vunpack.c.l.b16 %v210
    %v1086 = vunpack.c.h.b16 %v210
    %v1087 = vunpack.c.l.b16 %v211
    %v1088 = vunpack.c.h.b16 %v211
    %v1089 = vunpack.c.l.b16 %v212
    %v1090 = vunpack.c.h.b16 %v212
    %v1091 = vunpack.c.l.b16 %v213
    %v1092 = vunpack.c.l.b16 %v214
    %v1093 = vunpack.c.h.b16 %v214
    %v1094 = vunpack.c.l.b16 %v215
    %v1095 = vunpack.c.h.b16 %v215
    %v1096 = vunpack.c.l.b16 %v216
    %v1097 = vunpack.c.h.b16 %v216
    %v1098 = vunpack.c.l.b16 %v217
    %v1099 = vunpack.c.l.b16 %v218
    %v1100 = vunpack.c.h.b16 %v218
    %v1101 = vunpack.c.l.b16 %v219
    %v1102 = vunpack.c.h.b16 %v219
    %v1103 = vunpack.c.l.b16 %v220
    %v1104 = vunpack.c.h.b16 %v220
    %v1105 = vunpack.c.l.b16 %v221
    %v1106 = vunpack.c.l.b16 %v222
    %v1107 = vunpack.c.h.b16 %v222
    %v1108 = vunpack.c.l.b16 %v223
    %v1109 = vunpack.c.h.b16 %v223
    %v1110 = vunpack.c.l.b16 %v224
    %v1111 = vunpack.c.h.b16 %v224
    %v1112 = vunpack.c.l.b16 %v225
    %v1113 = vunpack.c.l.b16 %v226
    %v1114 = vunpack.c.h.b16 %v226
    %v1115 = vunpack.c.l.b16 %v227
    %v1116 = vunpack.c.h.b16 %v227
    %v1117 = vunpack.c.l.b16 %v228
    %v1118 = vunpack.c.h.b16 %v228
    %v1119 = vunpack.c.l.b16 %v229
    %v1120 = vunpack.c.l.b16 %v230
    %v1121 = vunpack.c.h.b16 %v230
    %v1122 = vunpack.c.l.b16 %v231
    %v1123 = vunpack.c.h.b16 %v231
    %v1124 = vunpack.c.l.b16 %v232
    %v1125 = vunpack.c.h.b16 %v232
    %v1126 = vunpack.c.l.b16 %v233
    %v1127 = vunpack.c.l.b16 %v234
    %v1128 = vunpack.c.h.b16 %v234
    %v1129 = vunpack.c.l.b16 %v235
    %v1130 = vunpack.c.h.b16 %v235
    %v1131 = vunpack.c.l.b16 %v236
    %v1132 = vunpack.c.h.b16 %v236
    %v1133 = vunpack.c.l.b16 %v237
    %v1134 = vunpack.c.l.b16 %v238
    %v1135 = vunpack.c.h.b16 %v238
    %v1136 = vunpack.c.l.b16 %v239
    %v1137 = vunpack.c.h.b16 %v239
    %v1138 = vunpack.c.l.b16 %v240
    %v1139 = vunpack.c.h.b16 %v240
    %v1140 = vunpack.c.l.b16 %v241
    %v1141 = vunpack.c.l.b16 %v242
    %v1142 = vunpack.c.h.b16 %v242
    %v1143 = vunpack.c.l.b16 %v243
    %v1144 = vunpack.c.h.b16 %v243
    %v1145 = vunpack.c.l.b16 %v244
    %v1146 = vunpack.c.h.b16 %v244
    %v1147 = vunpack.c.l.b16 %v245
    %v1148 = vunpack.c.l.b16 %v246
    %v1149 = vunpack.c.h.b16 %v246
    %v1150 = vunpack.c.l.b16 %v247
    %v1151 = vunpack.c.h.b16 %v247
    %v1152 = vunpack.c.l.b16 %v248
    %v1153 = vunpack.c.h.b16 %v248
    %v1154 = vunpack.c.l.b16 %v249
    %v1155 = vunpack.c.l.b16 %v250
    %v1156 = vunpack.c.h.b16 %v250
    %v1157 = vunpack.c.l.b16 %v251
    %v1158 = vunpack.c.h.b16 %v251
    %v1159 = vunpack.c.l.b16 %v252
    %v1160 = vunpack.c.h.b16 %v252
    %v1161 = vunpack.c.l.b16 %v253
    %v1162 = vunpack.c.l.b16 %v254
    %v1163 = vunpack.c.h.b16 %v254
    %v1164 = vunpack.c.l.b16 %v255
    %v1165 = vunpack.c.h.b16 %v255
    %v1166 = vunpack.c.l.b16 %v256
    %v1167 = vunpack.c.h.b16 %v256
    %v1168 = vunpack.c.l.b16 %v257
    %v1169 = vunpack.c.l.b16 %v258
    %v1170 = vunpack.c.h.b16 %v258
    %v1171 = vunpack.c.l.b16 %v259
    %v1172 = vunpack.c.h.b16 %v259
    %v1173 = vunpack.c.l.b16 %v260
    %v1174 = vunpack.c.h.b16 %v260
    %v1175 = vunpack.c.l.b16 %v261
    %v1176 = vunpack.c.l.b16 %v262
    %v1177 = vunpack.c.h.b16 %v262
    %v1178 = vunpack.c.l.b16 %v263
    %v1179 = vunpack.c.h.b16 %v263
    %v1180 = vunpack.c.l.b16 %v264
    %v1181 = vunpack.c.h.b16 %v264
    %v1182 = vunpack.c.l.b16 %v265
    %v1183 = vunpack.c.l.b16 %v266
    %v1184 = vunpack.c.h.b16 %v266
    %v1185 = vunpack.c.l.b16 %v267
    %v1186 = vunpack.c.h.b16 %v267
    %v1187 = vunpack.c.l.b16 %v268
    %v1188 = vunpack.c.h.b16 %v268
    %v1189 = vunpack.c.l.b16 %v269
    %v1190 = vunpack.c.l.b16 %v270
    %v1191 = vunpack.c.h.b16 %v270
    %v1192 = vunpack.c.l.b16 %v271
    %v1193 = vunpack.c.h.b16 %v271
    %v1194 = vunpack.c.l.b16 %v272
    %v1195 = vunpack.c.h.b16 %v272
    %v1196 = vunpack.c.l.b16 %v273
    %v1197 = vunpack.c.l.b16 %v274
    %v1198 = vunpack.c.h.b16 %v274
    %v1199 = vunpack.c.l.b16 %v275
    %v1200 = vunpack.c.h.b16 %v275
    %v1201 = vunpack.c.l.b16 %v276
    %v1202 = vunpack.c.h.b16 %v276
    %v1203 = vunpack.c.l.b16 %v277
    %v1204 = vunpack.c.l.b16 %v278
    %v1205 = vunpack.c.h.b16 %v278
    %v1206 = vunpack.c.l.b16 %v279
    %v1207 = vunpack.c.h.b16 %v279
    %v1208 = vunpack.c.l.b16 %v280
    %v1209 = vunpack.c.h.b16 %v280
    %v1210 = vunpack.c.l.b16 %v281
    %v1211 = vunpack.c.l.b16 %v282
    %v1212 = vunpack.c.h.b16 %v282
    %v1213 = vunpack.c.l.b16 %v283
    %v1214 = vunpack.c.h.b16 %v283
    %v1215 = vunpack.c.l.b16 %v284
    %v1216 = vunpack.c.h.b16 %v284
    %v1217 = vunpack.c.l.b16 %v285
    %v1218 = vunpack.c.l.b16 %v286
    %v1219 = vunpack.c.h.b16 %v286
    %v1220 = vunpack.c.l.b16 %v287
    %v1221 = vunpack.c.h.b16 %v287
    %v1222 = vunpack.c.l.b16 %v288
    %v1223 = vunpack.c.h.b16 %v288
    %v1224 = vunpack.c.l.b16 %v289
    %v1225 = vunpack.c.l.b16 %v290
    %v1226 = vunpack.c.h.b16 %v290
    %v1227 = vunpack.c.l.b16 %v291
    %v1228 = vunpack.c.h.b16 %v291
    %v1229 = vunpack.c.l.b16 %v292
    %v1230 = vunpack.c.h.b16 %v292
    %v1231 = vunpack.c.l.b16 %v293
    %v1232 = vunpack.c.l.b16 %v294
    %v1233 = vunpack.c.h.b16 %v294
    %v1234 = vunpack.c.l.b16 %v295
    %v1235 = vunpack.c.h.b16 %v295
    %v1236 = vunpack.c.l.b16 %v296
    %v1237 = vunpack.c.h.b16 %v296
    %v1238 = vunpack.c.l.b16 %v297
    %v1239 = vunpack.c.l.b16 %v298
    %v1240 = vunpack.c.h.b16 %v298
    %v1241 = vunpack.c.l.b16 %v299
    %v1242 = vunpack.c.h.b16 %v299
    %v1243 = vunpack.c.l.b16 %v300
    %v1244 = vunpack.c.h.b16 %v300
    %v1245 = vunpack.c.l.b16 %v301
    %v1246 = vunpack.c.l.b16 %v302
    %v1247 = vunpack.c.h.b16 %v302
    %v1248 = vunpack.c.l.b16 %v303
    %v1249 = vunpack.c.h.b16 %v303
    %v1250 = vunpack.c.l.b16 %v304
    %v1251 = vunpack.c.h.b16 %v304
    %v1252 = vunpack.c.l.b16 %v305
    %v1253 = vunpack.c.l.b16 %v306
    %v1254 = vunpack.c.h.b16 %v306
    %v1255 = vunpack.c.l.b16 %v307
    %v1256 = vunpack.c.h.b16 %v307
    %v1257 = vunpack.c.l.b16 %v308
    %v1258 = vunpack.c.h.b16 %v308
    %v1259 = vunpack.c.l.b16 %v309
    %v1260 = vunpack.c.l.b16 %v310
    %v1261 = vunpack.c.h.b16 %v310
    %v1262 = vunpack.c.l.b16 %v311
    %v1263 = vunpack.c.h.b16 %v311
    %v1264 = vunpack.c.l.b16 %v312
    %v1265 = vunpack.c.h.b16 %v312
    %v1266 = vunpack.c.l.b16 %v313
    %v1267 = vunpack.c.l.b16 %v314
    %v1268 = vunpack.c.h.b16 %v314
    %v1269 = vunpack.c.l.b16 %v315
    %v1270 = vunpack.c.h.b16 %v315
    %v1271 = vunpack.c.l.b16 %v316
    %v1272 = vunpack.c.h.b16 %v316
    %v1273 = vunpack.c.l.b16 %v317
    %v1274 = vunpack.c.l.b16 %v318
    %v1275 = vunpack.c.h.b16 %v318
    %v1276 = vunpack.c.l.b16 %v319
    %v1277 = vunpack.c.h.b16 %v319
    %v1278 = vunpack.c.l.b16 %v320
    %v1279 = vunpack.c.h.b16 %v320
    %v1280 = vunpack.c.l.b16 %v321
    %v1281 = vunpack.c.l.b16 %v322
    %v1282 = vunpack.c.h.b16 %v322
    %v1283 = vunpack.c.l.b16 %v323
    %v1284 = vunpack.c.h.b16 %v323
    %v1285 = vunpack.c.l.b16 %v324
    %v1286 = vunpack.c.h.b16 %v324
    %v1287 = vunpack.c.l.b16 %v325
    %v1288 = vunpack.c.l.b16 %v326
    %v1289 = vunpack.c.h.b16 %v326
    %v1290 = vunpack.c.l.b16 %v327
    %v1291 = vunpack.c.h.b16 %v327
    %v1292 = vunpack.c.l.b16 %v328
    %v1293 = vunpack.c.h.b16 %v328
    %v1294 = vunpack.c.l.b16 %v329
    %v1295 = vunpack.c.l.b16 %v330
    %v1296 = vunpack.c.h.b16 %v330
    %v1297 = vunpack.c.l.b16 %v331
    %v1298 = vunpack.c.h.b16 %v331
    %v1299 = vunpack.c.l.b16 %v332
    %v1300 = vunpack.c.h.b16 %v332
    %v1301 = vunpack.c.l.b16 %v333
    %v1302 = vunpack.c.l.b16 %v334
    %v1303 = vunpack.c.h.b16 %v334
    %v1304 = vunpack.c.l.b16 %v335
    %v1305 = vunpack.c.h.b16 %v335
    %v1306 = vunpack.c.l.b16 %v336
    %v1307 = vunpack.c.h.b16 %v336
    %v1308 = vunpack.c.l.b16 %v337
    %v1309 = vunpack.c.l.b16 %v338
    %v1310 = vunpack.c.h.b16 %v338
    %v1311 = vunpack.c.l.b16 %v339
    %v1312 = vunpack.c.h.b16 %v339
    %v1313 = vunpack.c.l.b16 %v340
    %v1314 = vunpack.c.h.b16 %v340
    %v1315 = vunpack.c.l.b16 %v341
    %v1316 = vunpack.c.l.b16 %v342
    %v1317 = vunpack.c.h.b16 %v342
    %v1318 = vunpack.c.l.b16 %v343
    %v1319 = vunpack.c.h.b16 %v343
    %v1320 = vunpack.c.l.b16 %v344
    %v1321 = vunpack.c.h.b16 %v344
    %v1322 = vunpack.c.l.b16 %v345
    %v1323 = vunpack.c.l.b16 %v346
    %v1324 = vunpack.c.h.b16 %v346
    %v1325 = vunpack.c.l.b16 %v347
    %v1326 = vunpack.c.h.b16 %v347
    %v1327 = vunpack.c.l.b16 %v348
    %v1328 = vunpack.c.h.b16 %v348
    %v1329 = vunpack.c.l.b16 %v349
    %v1330 = vunpack.c.l.b16 %v350
    %v1331 = vunpack.c.h.b16 %v350
    %v1332 = vunpack.c.l.b16 %v351
    %v1333 = vunpack.c.h.b16 %v351
    %v1334 = vunpack.c.l.b16 %v352
    %v1335 = vunpack.c.h.b16 %v352
    %v1336 = vunpack.c.l.b16 %v353
    %v1337 = vunpack.c.l.b16 %v354
    %v1338 = vunpack.c.h.b16 %v354
    %v1339 = vunpack.c.l.b16 %v355
    %v1340 = vunpack.c.h.b16 %v355
    %v1341 = vunpack.c.l.b16 %v356
    %v1342 = vunpack.c.h.b16 %v356
    %v1343 = vunpack.c.l.b16 %v357
    %v1344 = vunpack.c.l.b16 %v358
    %v1345 = vunpack.c.h.b16 %v358
    %v1346 = vunpack.c.l.b16 %v359
    %v1347 = vunpack.c.h.b16 %v359
    %v1348 = vunpack.c.l.b16 %v360
    %v1349 = vunpack.c.h.b16 %v360
    %v1350 = vunpack.c.l.b16 %v361
    %v1351 = vunpack.c.l.b16 %v362
    %v1352 = vunpack.c.h.b16 %v362
    %v1353 = vunpack.c.l.b16 %v363
    %v1354 = vunpack.c.h.b16 %v363
    %v1355 = vunpack.c.l.b16 %v364
    %v1356 = vunpack.c.h.b16 %v364
    %v1357 = vunpack.c.l.b16 %v365
    %v1358 = vunpack.c.l.b16 %v366
    %v1359 = vunpack.c.h.b16 %v366
    %v1360 = vunpack.c.l.b16 %v367
    %v1361 = vunpack.c.h.b16 %v367
    %v1362 = vunpack.c.l.b16 %v368
    %v1363 = vunpack.c.h.b16 %v368
    %v1364 = vunpack.c.l.b16 %v369
    %v1365 = vunpack.c.l.b16 %v370
    %v1366 = vunpack.c.h.b16 %v370
    %v1367 = vunpack.c.l.b16 %v371
    %v1368 = vunpack.c.h.b16 %v371
    %v1369 = vunpack.c.l.b16 %v372
    %v1370 = vunpack.c.h.b16 %v372
    %v1371 = vunpack.c.l.b16 %v373
    %v1372 = vunpack.c.l.b16 %v374
    %v1373 = vunpack.c.h.b16 %v374
    %v1374 = vunpack.c.l.b16 %v375
    %v1375 = vunpack.c.h.b16 %v375
    %v1376 = vunpack.c.l.b16 %v376
    %v1377 = vunpack.c.h.b16 %v376
    %v1378 = vunpack.c.l.b16 %v377
    %v1379 = vunpack.c.l.b16 %v378
    %v1380 = vunpack.c.h.b16 %v378
    %v1381 = vunpack.c.l.b16 %v379
    %v1382 = vunpack.c.h.b16 %v379
    %v1383 = vunpack.c.l.b16 %v380
    %v1384 = vunpack.c.h.b16 %v380
    %v1385 = vunpack.c.l.b16 %v381
    %v1386 = vunpack.c.l.b16 %v382
    %v1387 = vunpack.c.h.b16 %v382
    %v1388 = vunpack.c.l.b16 %v383
    %v1389 = vunpack.c.h.b16 %v383
    %v1390 = vunpack.c.l.b16 %v384
    %v1391 = vunpack.c.h.b16 %v384
    %v1392 = vunpack.c.l.b16 %v385
    %v1393 = vunpack.c.l.b16 %v386
    %v1394 = vunpack.c.h.b16 %v386
    %v1395 = vunpack.c.l.b16 %v387
    %v1396 = vunpack.c.h.b16 %v387
    %v1397 = vunpack.c.l.b16 %v388
    %v1398 = vunpack.c.h.b16 %v388
    %v1399 = vunpack.c.l.b16 %v389
    %v1400 = vunpack.c.l.b16 %v390
    %v1401 = vunpack.c.h.b16 %v390
    %v1402 = vunpack.c.l.b16 %v391
    %v1403 = vunpack.c.h.b16 %v391
    %v1404 = vunpack.c.l.b16 %v392
    %v1405 = vunpack.c.h.b16 %v392
    %v1406 = vunpack.c.l.b16 %v393
    %v1407 = vunpack.c.l.b16 %v394
    %v1408 = vunpack.c.h.b16 %v394
    %v1409 = vunpack.c.l.b16 %v395
    %v1410 = vunpack.c.h.b16 %v395
    %v1411 = vunpack.c.l.b16 %v396
    %v1412 = vunpack.c.h.b16 %v396
    %v1413 = vunpack.c.l.b16 %v397
    %v1414 = vunpack.c.l.b16 %v398
    %v1415 = vunpack.c.h.b16 %v398
    %v1416 = vunpack.c.l.b16 %v399
    %v1417 = vunpack.c.h.b16 %v399
    %v1418 = vunpack.c.l.b16 %v400
    %v1419 = vunpack.c.h.b16 %v400
    %v1420 = vunpack.c.l.b16 %v401
    %v1421 = vunpack.c.l.b16 %v402
    %v1422 = vunpack.c.h.b16 %v402
    %v1423 = vunpack.c.l.b16 %v403
    %v1424 = vunpack.c.h.b16 %v403
    %v1425 = vunpack.c.l.b16 %v404
    %v1426 = vunpack.c.h.b16 %v404
    %v1427 = vunpack.c.l.b16 %v405
    %v1428 = vunpack.c.l.b16 %v406
    %v1429 = vunpack.c.h.b16 %v406
    %v1430 = vunpack.c.l.b16 %v407
    %v1431 = vunpack.c.h.b16 %v407
    %v1432 = vunpack.c.l.b16 %v408
    %v1433 = vunpack.c.h.b16 %v408
    %v1434 = vunpack.c.l.b16 %v409
    %v1435 = vunpack.c.l.b16 %v410
    %v1436 = vunpack.c.h.b16 %v410
    %v1437 = vunpack.c.l.b16 %v411
    %v1438 = vunpack.c.h.b16 %v411
    %v1439 = vunpack.c.l.b16 %v412
    %v1440 = vunpack.c.h.b16 %v412
    %v1441 = vunpack.c.l.b16 %v413
    %v1442 = vunpack.c.l.b16 %v414
    %v1443 = vunpack.c.h.b16 %v414
    %v1444 = vunpack.c.l.b16 %v415
    %v1445 = vunpack.c.h.b16 %v415
    %v1446 = vunpack.c.l.b16 %v416
    %v1447 = vunpack.c.h.b16 %v416
    %v1448 = vunpack.c.l.b16 %v417
    %v1449 = vunpack.c.l.b16 %v418
    %v1450 = vunpack.c.h.b16 %v418
    %v1451 = vunpack.c.l.b16 %v419
    %v1452 = vunpack.c.h.b16 %v419
    %v1453 = vunpack.c.l.b16 %v420
    %v1454 = vunpack.c.h.b16 %v420
    %v1455 = vunpack.c.l.b16 %v421
    %v1456 = vunpack.c.l.b16 %v422
    %v1457 = vunpack.c.h.b16 %v422
    %v1458 = vunpack.c.l.b16 %v423
    %v1459 = vunpack.c.h.b16 %v423
    %v1460 = vunpack.c.l.b16 %v424
    %v1461 = vunpack.c.h.b16 %v424
    %v1462 = vunpack.c.l.b16 %v425
    %v1463 = vunpack.c.l.b16 %v426
    %v1464 = vunpack.c.h.b16 %v426
    %v1465 = vunpack.c.l.b16 %v427
    %v1466 = vunpack.c.h.b16 %v427
    %v1467 = vunpack.c.l.b16 %v428
    %v1468 = vunpack.c.h.b16 %v428
    %v1469 = vunpack.c.l.b16 %v429
    %v1470 = vunpack.c.l.b16 %v430
    %v1471 = vunpack.c.h.b16 %v430
    %v1472 = vunpack.c.l.b16 %v431
    %v1473 = vunpack.c.h.b16 %v431
    %v1474 = vunpack.c.l.b16 %v432
    %v1475 = vunpack.c.h.b16 %v432
    %v1476 = vunpack.c.l.b16 %v433
    %v1477 = vunpack.c.l.b16 %v434
    %v1478 = vunpack.c.h.b16 %v434
    %v1479 = vunpack.c.l.b16 %v435
    %v1480 = vunpack.c.h.b16 %v435
    %v1481 = vunpack.c.l.b16 %v436
    %v1482 = vunpack.c.h.b16 %v436
    %v1483 = vunpack.c.l.b16 %v437
    %v1484 = vunpack.c.l.b16 %v438
    %v1485 = vunpack.c.h.b16 %v438
    %v1486 = vunpack.c.l.b16 %v439
    %v1487 = vunpack.c.h.b16 %v439
    %v1488 = vunpack.c.l.b16 %v440
    %v1489 = vunpack.c.h.b16 %v440
    %v1490 = vunpack.c.l.b16 %v441
    %v1491 = vunpack.c.l.b16 %v442
    %v1492 = vunpack.c.h.b16 %v442
    %v1493 = vunpack.c.l.b16 %v443
    %v1494 = vunpack.c.h.b16 %v443
    %v1495 = vunpack.c.l.b16 %v444
    %v1496 = vunpack.c.h.b16 %v444
    %v1497 = vunpack.c.l.b16 %v445
    %v1498 = vunpack.c.l.b16 %v446
    %v1499 = vunpack.c.h.b16 %v446
    %v1500 = vunpack.c.l.b16 %v447
    %v1501 = vunpack.c.h.b16 %v447
    %v1502 = vunpack.c.l.b16 %v448
    %v1503 = vunpack.c.h.b16 %v448
    %v1504 = vunpack.c.l.b16 %v449
    %v1505 = vunpack.c.l.b16 %v450
    %v1506 = vunpack.c.h.b16 %v450
    %v1507 = vunpack.c.l.b16 %v451
    %v1508 = vunpack.c.h.b16 %v451
    %v1509 = vunpack.c.l.b16 %v452
    %v1510 = vunpack.c.h.b16 %v452
    %v1511 = vunpack.c.l.b16 %v453
    %v1512 = vunpack.c.l.b16 %v454
    %v1513 = vunpack.c.h.b16 %v454
    %v1514 = vunpack.c.l.b16 %v455
    %v1515 = vunpack.c.h.b16 %v455
    %v1516 = vunpack.c.l.b16 %v456
    %v1517 = vunpack.c.h.b16 %v456
    %v1518 = vunpack.c.l.b16 %v457
    %v1519 = vunpack.c.l.b16 %v458
    %v1520 = vunpack.c.h.b16 %v458
    %v1521 = vunpack.c.l.b16 %v459
    %v1522 = vunpack.c.h.b16 %v459
    %v1523 = vunpack.c.l.b16 %v460
    %v1524 = vunpack.c.h.b16 %v460
    %v1525 = vunpack.c.l.b16 %v461
    %v1526 = vunpack.c.l.b16 %v462
    %v1527 = vunpack.c.h.b16 %v462
    %v1528 = vunpack.c.l.b16 %v463
    %v1529 = vunpack.c.h.b16 %v463
    %v1530 = vunpack.c.l.b16 %v464
    %v1531 = vunpack.c.h.b16 %v464
    %v1532 = vunpack.c.l.b16 %v465
    %v1533 = vunpack.c.l.b16 %v466
    %v1534 = vunpack.c.h.b16 %v466
    %v1535 = vunpack.c.l.b16 %v467
    %v1536 = vunpack.c.h.b16 %v467
    %v1537 = vunpack.c.l.b16 %v468
    %v1538 = vunpack.c.h.b16 %v468
    %v1539 = vunpack.c.l.b16 %v469
    %v1540 = vunpack.c.l.b16 %v470
    %v1541 = vunpack.c.h.b16 %v470
    %v1542 = vunpack.c.l.b16 %v471
    %v1543 = vunpack.c.h.b16 %v471
    %v1544 = vunpack.c.l.b16 %v472
    %v1545 = vunpack.c.h.b16 %v472
    %v1546 = vunpack.c.l.b16 %v473
    %v1547 = vunpack.c.l.b16 %v474
    %v1548 = vunpack.c.h.b16 %v474
    %v1549 = vunpack.c.l.b16 %v475
    %v1550 = vunpack.c.h.b16 %v475
    %v1551 = vunpack.c.l.b16 %v476
    %v1552 = vunpack.c.h.b16 %v476
    %v1553 = vunpack.c.l.b16 %v477
    %v1554 = vunpack.c.l.b16 %v478
    %v1555 = vunpack.c.h.b16 %v478
    %v1556 = vunpack.c.l.b16 %v479
    %v1557 = vunpack.c.h.b16 %v479
    %v1558 = vunpack.c.l.b16 %v480
    %v1559 = vunpack.c.h.b16 %v480
    %v1560 = vunpack.c.l.b16 %v481
    %v1561 = vunpack.c.l.b16 %v482
    %v1562 = vunpack.c.h.b16 %v482
    %v1563 = vunpack.c.l.b16 %v483
    %v1564 = vunpack.c.h.b16 %v483
    %v1565 = vunpack.c.l.b16 %v484
    %v1566 = vunpack.c.h.b16 %v484
    %v1567 = vunpack.c.l.b16 %v485
    %v1568 = vunpack.c.l.b16 %v486
    %v1569 = vunpack.c.h.b16 %v486
    %v1570 = vunpack.c.l.b16 %v487
    %v1571 = vunpack.c.h.b16 %v487
    %v1572 = vunpack.c.l.b16 %v488
    %v1573 = vunpack.c.h.b16 %v488
    %v1574 = vunpack.c.l.b16 %v489
    %v1575 = vunpack.c.l.b16 %v490
    %v1576 = vunpack.c.h.b16 %v490
    %v1577 = vunpack.c.l.b16 %v491
    %v1578 = vunpack.c.h.b16 %v491
    %v1579 = vunpack.c.l.b16 %v492
    %v1580 = vunpack.c.h.b16 %v492
    %v1581 = vunpack.c.l.b16 %v493
    %v1582 = vunpack.c.l.b16 %v494
    %v1583 = vunpack.c.h.b16 %v494
    %v1584 = vunpack.c.l.b16 %v495
    %v1585 = vunpack.c.h.b16 %v495
    %v1586 = vunpack.c.l.b16 %v496
    %v1587 = vunpack.c.h.b16 %v496
    %v1588 = vunpack.c.l.b16 %v497
    %v1589 = vunpack.c.l.b16 %v498
    %v1590 = vunpack.c.h.b16 %v498
    %v1591 = vunpack.c.l.b16 %v499
    %v1592 = vunpack.c.h.b16 %v499
    %v1593 = vunpack.c.l.b16 %v500
    %v1594 = vunpack.c.h.b16 %v500
    %v1595 = vunpack.c.l.b16 %v501
    %v1596 = vunpack.c.l.b16 %v502
    %v1597 = vunpack.c.h.b16 %v502
    %v1598 = vunpack.c.l.b16 %v503
    %v1599 = vunpack.c.h.b16 %v503
    %v1600 = vunpack.c.l.b16 %v504
    %v1601 = vunpack.c.h.b16 %v504
    %v1602 = vunpack.c.l.b16 %v505
    %v1603 = vunpack.c.l.b16 %v506
    %v1604 = vunpack.c.h.b16 %v506
    %v1605 = vunpack.c.l.b16 %v507
    %v1606 = vunpack.c.h.b16 %v507
    %v1607 = vunpack.c.l.b16 %v508
    %v1608 = vunpack.c.h.b16 %v508
    %v1609 = vunpack.c.l.b16 %v509
    %v1610 = vunpack.c.l.b16 %v510
    %v1611 = vunpack.c.h.b16 %v510
    %v1612 = vunpack.c.l.b16 %v511
    %v1613 = vunpack.c.h.b16 %v511
    %v1614 = vunpack.c.l.b16 %v512
    %v1615 = vunpack.c.h.b16 %v512
    %v1616 = vunpack.c.l.b16 %v513
    %v1617 = vunpack.c.l.b16 %v514
    %v1618 = vunpack.c.h.b16 %v514
    %v1619 = vunpack.c.l.b16 %v515
    %v1620 = vunpack.c.h.b16 %v515
    %v1621 = vunpack.c.l.b16 %v516
    %v1622 = vunpack.c.h.b16 %v516
    %v1623 = vunpack.c.l.b16 %v517
    %v1624 = vunpack.c.l.b16 %v518
    %v1625 = vunpack.c.h.b16 %v518
    %v1626 = vunpack.c.l.b16 %v519
    %v1627 = vunpack.c.h.b16 %v519
    %v1628 = vunpack.c.l.b16 %v520
    %v1629 = vunpack.c.h.b16 %v520
    %v1630 = vunpack.c.l.b16 %v521
    %v1631 = vunpack.c.l.b16 %v522
    %v1632 = vunpack.c.h.b16 %v522
    %v1633 = vunpack.c.l.b16 %v523
    %v1634 = vunpack.c.h.b16 %v523
    %v1635 = vunpack.c.l.b16 %v524
    %v1636 = vunpack.c.h.b16 %v524
    %v1637 = vunpack.c.l.b16 %v525
    %v1638 = vunpack.c.l.b16 %v526
    %v1639 = vunpack.c.h.b16 %v526
    %v1640 = vunpack.c.l.b16 %v527
    %v1641 = vunpack.c.h.b16 %v527
    %v1642 = vunpack.c.l.b16 %v528
    %v1643 = vunpack.c.h.b16 %v528
    %v1644 = vunpack.c.l.b16 %v529
    %v1645 = vpack.c.b16 %v966, %v959
    %v1646 = vpack.c.b16 %v967, %v960
    %v1647 = vpack.c.b16 %v968, %v961
    %v1648 = vpack.c.b16 %v969, %v962
    %v1649 = vpack.c.b16 %v970, %v963
    %v1650 = vpack.c.b16 %v971, %v964
    %v1651 = vpack.c.b16 %v972, %v965
    %v1652 = vpack.c.b16 %v980, %v973
    %v1653 = vpack.c.b16 %v981, %v974
    %v1654 = vpack.c.b16 %v982, %v975
    %v1655 = vpack.c.b16 %v983, %v976
    %v1656 = vpack.c.b16 %v984, %v977
    %v1657 = vpack.c.b16 %v985, %v978
    %v1658 = vpack.c.b16 %v986, %v979
    %v1659 = vpack.c.b16 %v994, %v987
    %v1660 = vpack.c.b16 %v995, %v988
    %v1661 = vpack.c.b16 %v996, %v989
    %v1662 = vpack.c.b16 %v997, %v990
    %v1663 = vpack.c.b16 %v998, %v991
    %v1664 = vpack.c.b16 %v999, %v992
    %v1665 = vpack.c.b16 %v1000, %v993
    %v1666 = vpack.c.b16 %v1008, %v1001
    %v1667 = vpack.c.b16 %v1009, %v1002
    %v1668 = vpack.c.b16 %v1010, %v1003
    %v1669 = vpack.c.b16 %v1011, %v1004
    %v1670 = vpack.c.b16 %v1012, %v1005
    %v1671 = vpack.c.b16 %v1013, %v1006
    %v1672 = vpack.c.b16 %v1014, %v1007
    %v1673 = vpack.c.b16 %v1022, %v1015
    %v1674 = vpack.c.b16 %v1023, %v1016
    %v1675 = vpack.c.b16 %v1024, %v1017
    %v1676 = vpack.c.b16 %v1025, %v1018
    %v1677 = vpack.c.b16 %v1026, %v1019
    %v1678 = vpack.c.b16 %v1027, %v1020
    %v1679 = vpack.c.b16 %v1028, %v1021
    %v1680 = vpack.c.b16 %v1036, %v1029
    %v1681 = vpack.c.b16 %v1037, %v1030
    %v1682 = vpack.c.b16 %v1038, %v1031
    %v1683 = vpack.c.b16 %v1039, %v1032
    %v1684 = vpack.c.b16 %v1040, %v1033
    %v1685 = vpack.c.b16 %v1041, %v1034
    %v1686 = vpack.c.b16 %v1042, %v1035
    %v1687 = vpack.c.b16 %v1050, %v1043
    %v1688 = vpack.c.b16 %v1051, %v1044
    %v1689 = vpack.c.b16 %v1052, %v1045
    %v1690 = vpack.c.b16 %v1053, %v1046
    %v1691 = vpack.c.b16 %v1054, %v1047
    %v1692 = vpack.c.b16 %v1055, %v1048
    %v1693 = vpack.c.b16 %v1056, %v1049
    %v1694 = vpack.c.b16 %v1064, %v1057
    %v1695 = vpack.c.b16 %v1065, %v1058
    %v1696 = vpack.c.b16 %v1066, %v1059
    %v1697 = vpack.c.b16 %v1067, %v1060
    %v1698 = vpack.c.b16 %v1068, %v1061
    %v1699 = vpack.c.b16 %v1069, %v1062
    %v1700 = vpack.c.b16 %v1070, %v1063
    %v1701 = vpack.c.b16 %v1078, %v1071
    %v1702 = vpack.c.b16 %v1079, %v1072
    %v1703 = vpack.c.b16 %v1080, %v1073
    %v1704 = vpack.c.b16 %v1081, %v1074
    %v1705 = vpack.c.b16 %v1082, %v1075
    %v1706 = vpack.c.b16 %v1083, %v1076
    %v1707 = vpack.c.b16 %v1084, %v1077
    %v1708 = vpack.c.b16 %v1092, %v1085
    %v1709 = vpack.c.b16 %v1093, %v1086
    %v1710 = vpack.c.b16 %v1094, %v1087
    %v1711 = vpack.c.b16 %v1095, %v1088
    %v1712 = vpack.c.b16 %v1096, %v1089
    %v1713 = vpack.c.b16 %v1097, %v1090
    %v1714 = vpack.c.b16 %v1098, %v1091
    %v1715 = vpack.c.b16 %v1106, %v1099
    %v1716 = vpack.c.b16 %v1107, %v1100
    %v1717 = vpack.c.b16 %v1108, %v1101
    %v1718 = vpack.c.b16 %v1109, %v1102
    %v1719 = vpack.c.b16 %v1110, %v1103
    %v1720 = vpack.c.b16 %v1111, %v1104
    %v1721 = vpack.c.b16 %v1112, %v1105
    %v1722 = vpack.c.b16 %v1120, %v1113
    %v1723 = vpack.c.b16 %v1121, %v1114
    %v1724 = vpack.c.b16 %v1122, %v1115
    %v1725 = vpack.c.b16 %v1123, %v1116
    %v1726 = vpack.c.b16 %v1124, %v1117
    %v1727 = vpack.c.b16 %v1125, %v1118
    %v1728 = vpack.c.b16 %v1126, %v1119
    %v1729 = vpack.c.b16 %v1134, %v1127
    %v1730 = vpack.c.b16 %v1135, %v1128
    %v1731 = vpack.c.b16 %v1136, %v1129
    %v1732 = vpack.c.b16 %v1137, %v1130
    %v1733 = vpack.c.b16 %v1138, %v1131
    %v1734 = vpack.c.b16 %v1139, %v1132
    %v1735 = vpack.c.b16 %v1140, %v1133
    %v1736 = vpack.c.b16 %v1148, %v1141
    %v1737 = vpack.c.b16 %v1149, %v1142
    %v1738 = vpack.c.b16 %v1150, %v1143
    %v1739 = vpack.c.b16 %v1151, %v1144
    %v1740 = vpack.c.b16 %v1152, %v1145
    %v1741 = vpack.c.b16 %v1153, %v1146
    %v1742 = vpack.c.b16 %v1154, %v1147
    %v1743 = vpack.c.b16 %v1162, %v1155
    %v1744 = vpack.c.b16 %v1163, %v1156
    %v1745 = vpack.c.b16 %v1164, %v1157
    %v1746 = vpack.c.b16 %v1165, %v1158
    %v1747 = vpack.c.b16 %v1166, %v1159
    %v1748 = vpack.c.b16 %v1167, %v1160
    %v1749 = vpack.c.b16 %v1168, %v1161
    %v1750 = vpack.c.b16 %v1176, %v1169
    %v1751 = vpack.c.b16 %v1177, %v1170
    %v1752 = vpack.c.b16 %v1178, %v1171
    %v1753 = vpack.c.b16 %v1179, %v1172
    %v1754 = vpack.c.b16 %v1180, %v1173
    %v1755 = vpack.c.b16 %v1181, %v1174
    %v1756 = vpack.c.b16 %v1182, %v1175
    %v1757 = vpack.c.b16 %v1190, %v1183
    %v1758 = vpack.c.b16 %v1191, %v1184
    %v1759 = vpack.c.b16 %v1192, %v1185
    %v1760 = vpack.c.b16 %v1193, %v1186
    %v1761 = vpack.c.b16 %v1194, %v1187
    %v1762 = vpack.c.b16 %v1195, %v1188
    %v1763 = vpack.c.b16 %v1196, %v1189
    %v1764 = vpack.c.b16 %v1204, %v1197
    %v1765 = vpack.c.b16 %v1205, %v1198
    %v1766 = vpack.c.b16 %v1206, %v1199
    %v1767 = vpack.c.b16 %v1207, %v1200
    %v1768 = vpack.c.b16 %v1208, %v1201
    %v1769 = vpack.c.b16 %v1209, %v1202
    %v1770 = vpack.c.b16 %v1210, %v1203
    %v1771 = vpack.c.b16 %v1218, %v1211
    %v1772 = vpack.c.b16 %v1219, %v1212
    %v1773 = vpack.c.b16 %v1220, %v1213
    %v1774 = vpack.c.b16 %v1221, %v1214
    %v1775 = vpack.c.b16 %v1222, %v1215
    %v1776 = vpack.c.b16 %v1223, %v1216
    %v1777 = vpack.c.b16 %v1224, %v1217
    %v1778 = vpack.c.b16 %v1232, %v1225
    %v1779 = vpack.c.b16 %v1233, %v1226
    %v1780 = vpack.c.b16 %v1234, %v1227
    %v1781 = vpack.c.b16 %v1235, %v1228
    %v1782 = vpack.c.b16 %v1236, %v1229
    %v1783 = vpack.c.b16 %v1237, %v1230
    %v1784 = vpack.c.b16 %v1238, %v1231
    %v1785 = vpack.c.b16 %v1246, %v1239
    %v1786 = vpack.c.b16 %v1247, %v1240
    %v1787 = vpack.c.b16 %v1248, %v1241
    %v1788 = vpack.c.b16 %v1249, %v1242
    %v1789 = vpack.c.b16 %v1250, %v1243
    %v1790 = vpack.c.b16 %v1251, %v1244
    %v1791 = vpack.c.b16 %v1252, %v1245
    %v1792 = vpack.c.b16 %v1260, %v1253
    %v1793 = vpack.c.b16 %v1261, %v1254
    %v1794 = vpack.c.b16 %v1262, %v1255
    %v1795 = vpack.c.b16 %v1263, %v1256
    %v1796 = vpack.c.b16 %v1264, %v1257
    %v1797 = vpack.c.b16 %v1265, %v1258
    %v1798 = vpack.c.b16 %v1266, %v1259
    %v1799 = vpack.c.b16 %v1274, %v1267
    %v1800 = vpack.c.b16 %v1275, %v1268
    %v1801 = vpack.c.b16 %v1276, %v1269
    %v1802 = vpack.c.b16 %v1277, %v1270
    %v1803 = vpack.c.b16 %v1278, %v1271
    %v1804 = vpack.c.b16 %v1279, %v1272
    %v1805 = vpack.c.b16 %v1280, %v1273
    %v1806 = vpack.c.b16 %v1288, %v1281
    %v1807 = vpack.c.b16 %v1289, %v1282
    %v1808 = vpack.c.b16 %v1290, %v1283
    %v1809 = vpack.c.b16 %v1291, %v1284
    %v1810 = vpack.c.b16 %v1292, %v1285
    %v1811 = vpack.c.b16 %v1293, %v1286
    %v1812 = vpack.c.b16 %v1294, %v1287
    %v1813 = vpack.c.b16 %v1302, %v1295
    %v1814 = vpack.c.b16 %v1303, %v1296
    %v1815 = vpack.c.b16 %v1304, %v1297
    %v1816 = vpack.c.b16 %v1305, %v1298
    %v1817 = vpack.c.b16 %v1306, %v1299
    %v1818 = vpack.c.b16 %v1307, %v1300
    %v1819 = vpack.c.b16 %v1308, %v1301
    %v1820 = vpack.c.b16 %v1316, %v1309
    %v1821 = vpack.c.b16 %v1317, %v1310
    %v1822 = vpack.c.b16 %v1318, %v1311
    %v1823 = vpack.c.b16 %v1319, %v1312
    %v1824 = vpack.c.b16 %v1320, %v1313
    %v1825 = vpack.c.b16 %v1321, %v1314
    %v1826 = vpack.c.b16 %v1322, %v1315
    %v1827 = vpack.c.b16 %v1330, %v1323
    %v1828 = vpack.c.b16 %v1331, %v1324
    %v1829 = vpack.c.b16 %v1332, %v1325
    %v1830 = vpack.c.b16 %v1333, %v1326
    %v1831 = vpack.c.b16 %v1334, %v1327
    %v1832 = vpack.c.b16 %v1335, %v1328
    %v1833 = vpack.c.b16 %v1336, %v1329
    %v1834 = vpack.c.b16 %v1344, %v1337
    %v1835 = vpack.c.b16 %v1345, %v1338
    %v1836 = vpack.c.b16 %v1346, %v1339
    %v1837 = vpack.c.b16 %v1347, %v1340
    %v1838 = vpack.c.b16 %v1348, %v1341
    %v1839 = vpack.c.b16 %v1349, %v1342
    %v1840 = vpack.c.b16 %v1350, %v1343
    %v1841 = vpack.c.b16 %v1358, %v1351
    %v1842 = vpack.c.b16 %v1359, %v1352
    %v1843 = vpack.c.b16 %v1360, %v1353
    %v1844 = vpack.c.b16 %v1361, %v1354
    %v1845 = vpack.c.b16 %v1362, %v1355
    %v1846 = vpack.c.b16 %v1363, %v1356
    %v1847 = vpack.c.b16 %v1364, %v1357
    %v1848 = vpack.c.b16 %v1372, %v1365
    %v1849 = vpack.c.b16 %v1373, %v1366
    %v1850 = vpack.c.b16 %v1374, %v1367
    %v1851 = vpack.c.b16 %v1375, %v1368
    %v1852 = vpack.c.b16 %v1376, %v1369
    %v1853 = vpack.c.b16 %v1377, %v1370
    %v1854 = vpack.c.b16 %v1378, %v1371
    %v1855 = vpack.c.b16 %v1386, %v1379
    %v1856 = vpack.c.b16 %v1387, %v1380
    %v1857 = vpack.c.b16 %v1388, %v1381
    %v1858 = vpack.c.b16 %v1389, %v1382
    %v1859 = vpack.c.b16 %v1390, %v1383
    %v1860 = vpack.c.b16 %v1391, %v1384
    %v1861 = vpack.c.b16 %v1392, %v1385
    %v1862 = vpack.c.b16 %v1400, %v1393
    %v1863 = vpack.c.b16 %v1401, %v1394
    %v1864 = vpack.c.b16 %v1402, %v1395
    %v1865 = vpack.c.b16 %v1403, %v1396
    %v1866 = vpack.c.b16 %v1404, %v1397
    %v1867 = vpack.c.b16 %v1405, %v1398
    %v1868 = vpack.c.b16 %v1406, %v1399
    %v1869 = vpack.c.b16 %v1414, %v1407
    %v1870 = vpack.c.b16 %v1415, %v1408
    %v1871 = vpack.c.b16 %v1416, %v1409
    %v1872 = vpack.c.b16 %v1417, %v1410
    %v1873 = vpack.c.b16 %v1418, %v1411
    %v1874 = vpack.c.b16 %v1419, %v1412
    %v1875 = vpack.c.b16 %v1420, %v1413
    %v1876 = vpack.c.b16 %v1428, %v1421
    %v1877 = vpack.c.b16 %v1429, %v1422
    %v1878 = vpack.c.b16 %v1430, %v1423
    %v1879 = vpack.c.b16 %v1431, %v1424
    %v1880 = vpack.c.b16 %v1432, %v1425
    %v1881 = vpack.c.b16 %v1433, %v1426
    %v1882 = vpack.c.b16 %v1434, %v1427
    %v1883 = vpack.c.b16 %v1442, %v1435
    %v1884 = vpack.c.b16 %v1443, %v1436
    %v1885 = vpack.c.b16 %v1444, %v1437
    %v1886 = vpack.c.b16 %v1445, %v1438
    %v1887 = vpack.c.b16 %v1446, %v1439
    %v1888 = vpack.c.b16 %v1447, %v1440
    %v1889 = vpack.c.b16 %v1448, %v1441
    %v1890 = vpack.c.b16 %v1456, %v1449
    %v1891 = vpack.c.b16 %v1457, %v1450
    %v1892 = vpack.c.b16 %v1458, %v1451
    %v1893 = vpack.c.b16 %v1459, %v1452
    %v1894 = vpack.c.b16 %v1460, %v1453
    %v1895 = vpack.c.b16 %v1461, %v1454
    %v1896 = vpack.c.b16 %v1462, %v1455
    %v1897 = vpack.c.b16 %v1470, %v1463
    %v1898 = vpack.c.b16 %v1471, %v1464
    %v1899 = vpack.c.b16 %v1472, %v1465
    %v1900 = vpack.c.b16 %v1473, %v1466
    %v1901 = vpack.c.b16 %v1474, %v1467
    %v1902 = vpack.c.b16 %v1475, %v1468
    %v1903 = vpack.c.b16 %v1476, %v1469
    %v1904 = vpack.c.b16 %v1484, %v1477
    %v1905 = vpack.c.b16 %v1485, %v1478
    %v1906 = vpack.c.b16 %v1486, %v1479
    %v1907 = vpack.c.b16 %v1487, %v1480
    %v1908 = vpack.c.b16 %v1488, %v1481
    %v1909 = vpack.c.b16 %v1489, %v1482
    %v1910 = vpack.c.b16 %v1490, %v1483
    %v1911 = vpack.c.b16 %v1498, %v1491
    %v1912 = vpack.c.b16 %v1499, %v1492
    %v1913 = vpack.c.b16 %v1500, %v1493
    %v1914 = vpack.c.b16 %v1501, %v1494
    %v1915 = vpack.c.b16 %v1502, %v1495
    %v1916 = vpack.c.b16 %v1503, %v1496
    %v1917 = vpack.c.b16 %v1504, %v1497
    %v1918 = vpack.c.b16 %v1512, %v1505
    %v1919 = vpack.c.b16 %v1513, %v1506
    %v1920 = vpack.c.b16 %v1514, %v1507
    %v1921 = vpack.c.b16 %v1515, %v1508
    %v1922 = vpack.c.b16 %v1516, %v1509
    %v1923 = vpack.c.b16 %v1517, %v1510
    %v1924 = vpack.c.b16 %v1518, %v1511
    %v1925 = vpack.c.b16 %v1526, %v1519
    %v1926 = vpack.c.b16 %v1527, %v1520
    %v1927 = vpack.c.b16 %v1528, %v1521
    %v1928 = vpack.c.b16 %v1529, %v1522
    %v1929 = vpack.c.b16 %v1530, %v1523
    %v1930 = vpack.c.b16 %v1531, %v1524
    %v1931 = vpack.c.b16 %v1532, %v1525
    %v1932 = vpack.c.b16 %v1540, %v1533
    %v1933 = vpack.c.b16 %v1541, %v1534
    %v1934 = vpack.c.b16 %v1542, %v1535
    %v1935 = vpack.c.b16 %v1543, %v1536
    %v1936 = vpack.c.b16 %v1544, %v1537
    %v1937 = vpack.c.b16 %v1545, %v1538
    %v1938 = vpack.c.b16 %v1546, %v1539
    %v1939 = vpack.c.b16 %v1554, %v1547
    %v1940 = vpack.c.b16 %v1555, %v1548
    %v1941 = vpack.c.b16 %v1556, %v1549
    %v1942 = vpack.c.b16 %v1557, %v1550
    %v1943 = vpack.c.b16 %v1558, %v1551
    %v1944 = vpack.c.b16 %v1559, %v1552
    %v1945 = vpack.c.b16 %v1560, %v1553
    %v1946 = vpack.c.b16 %v1568, %v1561
    %v1947 = vpack.c.b16 %v1569, %v1562
    %v1948 = vpack.c.b16 %v1570, %v1563
    %v1949 = vpack.c.b16 %v1571, %v1564
    %v1950 = vpack.c.b16 %v1572, %v1565
    %v1951 = vpack.c.b16 %v1573, %v1566
    %v1952 = vpack.c.b16 %v1574, %v1567
    %v1953 = vpack.c.b16 %v1582, %v1575
    %v1954 = vpack.c.b16 %v1583, %v1576
    %v1955 = vpack.c.b16 %v1584, %v1577
    %v1956 = vpack.c.b16 %v1585, %v1578
    %v1957 = vpack.c.b16 %v1586, %v1579
    %v1958 = vpack.c.b16 %v1587, %v1580
    %v1959 = vpack.c.b16 %v1588, %v1581
    %v1960 = vpack.c.b16 %v1596, %v1589
    %v1961 = vpack.c.b16 %v1597, %v1590
    %v1962 = vpack.c.b16 %v1598, %v1591
    %v1963 = vpack.c.b16 %v1599, %v1592
    %v1964 = vpack.c.b16 %v1600, %v1593
    %v1965 = vpack.c.b16 %v1601, %v1594
    %v1966 = vpack.c.b16 %v1602, %v1595
    %v1967 = vpack.c.b16 %v1610, %v1603
    %v1968 = vpack.c.b16 %v1611, %v1604
    %v1969 = vpack.c.b16 %v1612, %v1605
    %v1970 = vpack.c.b16 %v1613, %v1606
    %v1971 = vpack.c.b16 %v1614, %v1607
    %v1972 = vpack.c.b16 %v1615, %v1608
    %v1973 = vpack.c.b16 %v1616, %v1609
    %v1974 = vpack.c.b16 %v1624, %v1617
    %v1975 = vpack.c.b16 %v1625, %v1618
    %v1976 = vpack.c.b16 %v1626, %v1619
    %v1977 = vpack.c.b16 %v1627, %v1620
    %v1978 = vpack.c.b16 %v1628, %v1621
    %v1979 = vpack.c.b16 %v1629, %v1622
    %v1980 = vpack.c.b16 %v1630, %v1623
    %v1981 = vpack.c.b16 %v1638, %v1631
    %v1982 = vpack.c.b16 %v1639, %v1632
    %v1983 = vpack.c.b16 %v1640, %v1633
    %v1984 = vpack.c.b16 %v1641, %v1634
    %v1985 = vpack.c.b16 %v1642, %v1635
    %v1986 = vpack.c.b16 %v1643, %v1636
    %v1987 = vpack.c.b16 %v1644, %v1637
    %vm2331 = vcmask 130048
    %v2333 = vsel %vm2331, %v137, 0
    %2335 = vmatprep.subr.bf16.mxu0 %v1695
    %2336 = vmatpush1.bf16.msra.mxu0 %v1694
    %2337 = vmatprep.subr.bf16.mxu0 %v1688
    %2338 = vmatpush1.bf16.msra.mxu0 %v1687
    %2339 = vmatprep.subr.bf16.mxu0 %v1681
    %2340 = vmatpush1.bf16.msra.mxu0 %v1680
    %2341 = vmatprep.subr.bf16.mxu0 %v1674
    %2342 = vmatpush1.bf16.msra.mxu0 %v1673
    %2343 = vmatprep.subr.bf16.mxu0 %v1667
    %2344 = vmatpush1.bf16.msra.mxu0 %v1666
    %2345 = vmatprep.subr.bf16.mxu0 %v1660
    %2346 = vmatpush1.bf16.msra.mxu0 %v1659
    %2347 = vmatprep.subr.bf16.mxu0 %v1653
    %2348 = vmatpush1.bf16.msra.mxu0 %v1652
    %2349 = vmatprep.subr.bf16.mxu0 %v1646
    %2350 = vmatpush1.bf16.msra.mxu0 %v1645
    %2351 = vmatprep.subr.bf16.mxu0 %v1751
    %2352 = vmatpush2.bf16.msra.mxu0 %v1750
    %2353 = vmatprep.subr.bf16.mxu0 %v1744
    %2354 = vmatpush2.bf16.msra.mxu0 %v1743
    %2355 = vmatprep.subr.bf16.mxu0 %v1737
    %2356 = vmatpush2.bf16.msra.mxu0 %v1736
    %2357 = vmatprep.subr.bf16.mxu0 %v1730
    %2358 = vmatpush2.bf16.msra.mxu0 %v1729
    %2359 = vmatprep.subr.bf16.mxu0 %v1723
    %2360 = vmatpush2.bf16.msra.mxu0 %v1722
    %2361 = vmatprep.subr.bf16.mxu0 %v1716
    %2362 = vmatpush2.bf16.msra.mxu0 %v1715
    %2363 = vmatprep.subr.bf16.mxu0 %v1709
    %2364 = vmatpush2.bf16.msra.mxu0 %v1708
    %2365 = vmatprep.subr.bf16.mxu0 %v1702
    %2366 = vmatpush2.bf16.msra.mxu0 %v1701
    %2367 = vmatprep.mubr.bf16.mxu0 %v132
    %2368 = vmatmul.mubr.bf16.gmra.mxu0 %v131
    %v2369 = vpop.f32.mrf.mxu0
    %v2370 = vadd.f32 %v535, %v2369
    %v2371 = vpop.f32.mrf.mxu0
    %v2372 = vadd.f32 %v539, %v2371
    %v2373 = vpop.f32.mrf.mxu0
    %v2374 = vadd.f32 %v535, %v2373
    %v2375 = vpop.f32.mrf.mxu0
    %v2376 = vadd.f32 %v539, %v2375
    %2377 = vdwg.mxu0
    %2378 = vmatprep.subr.bf16.mxu0 %v1807
    %2379 = vmatpush1.bf16.msra.mxu0 %v1806
    %2380 = vmatprep.subr.bf16.mxu0 %v1800
    %2381 = vmatpush1.bf16.msra.mxu0 %v1799
    %2382 = vmatprep.subr.bf16.mxu0 %v1793
    %2383 = vmatpush1.bf16.msra.mxu0 %v1792
    %2384 = vmatprep.subr.bf16.mxu0 %v1786
    %2385 = vmatpush1.bf16.msra.mxu0 %v1785
    %2386 = vmatprep.subr.bf16.mxu0 %v1779
    %2387 = vmatpush1.bf16.msra.mxu0 %v1778
    %2388 = vmatprep.subr.bf16.mxu0 %v1772
    %2389 = vmatpush1.bf16.msra.mxu0 %v1771
    %2390 = vmatprep.subr.bf16.mxu0 %v1765
    %2391 = vmatpush1.bf16.msra.mxu0 %v1764
    %2392 = vmatprep.subr.bf16.mxu0 %v1758
    %2393 = vmatpush1.bf16.msra.mxu0 %v1757
    %2394 = vmatprep.subr.bf16.mxu0 %v1863
    %2395 = vmatpush2.bf16.msra.mxu0 %v1862
    %2396 = vmatprep.subr.bf16.mxu0 %v1856
    %2397 = vmatpush2.bf16.msra.mxu0 %v1855
    %2398 = vmatprep.subr.bf16.mxu0 %v1849
    %2399 = vmatpush2.bf16.msra.mxu0 %v1848
    %2400 = vmatprep.subr.bf16.mxu0 %v1842
    %2401 = vmatpush2.bf16.msra.mxu0 %v1841
    %2402 = vmatprep.subr.bf16.mxu0 %v1835
    %2403 = vmatpush2.bf16.msra.mxu0 %v1834
    %2404 = vmatprep.subr.bf16.mxu0 %v1828
    %2405 = vmatpush2.bf16.msra.mxu0 %v1827
    %2406 = vmatprep.subr.bf16.mxu0 %v1821
    %2407 = vmatpush2.bf16.msra.mxu0 %v1820
    %2408 = vmatprep.subr.bf16.mxu0 %v1814
    %2409 = vmatpush2.bf16.msra.mxu0 %v1813
    %2410 = vmatprep.mubr.bf16.mxu0 %v134
    %2411 = vmatmul.mubr.bf16.gmra.mxu0 %v133
    %v2412 = vpop.f32.mrf.mxu0
    %v2413 = vadd.f32 %v2370, %v2412
    %v2414 = vpop.f32.mrf.mxu0
    %v2415 = vadd.f32 %v2372, %v2414
    %v2416 = vpop.f32.mrf.mxu0
    %v2417 = vadd.f32 %v2374, %v2416
    %v2418 = vpop.f32.mrf.mxu0
    %v2419 = vadd.f32 %v2376, %v2418
    %2420 = vdwg.mxu0
    %2421 = vmatprep.subr.bf16.mxu0 %v1919
    %2422 = vmatpush1.bf16.msra.mxu0 %v1918
    %2423 = vmatprep.subr.bf16.mxu0 %v1912
    %2424 = vmatpush1.bf16.msra.mxu0 %v1911
    %2425 = vmatprep.subr.bf16.mxu0 %v1905
    %2426 = vmatpush1.bf16.msra.mxu0 %v1904
    %2427 = vmatprep.subr.bf16.mxu0 %v1898
    %2428 = vmatpush1.bf16.msra.mxu0 %v1897
    %2429 = vmatprep.subr.bf16.mxu0 %v1891
    %2430 = vmatpush1.bf16.msra.mxu0 %v1890
    %2431 = vmatprep.subr.bf16.mxu0 %v1884
    %2432 = vmatpush1.bf16.msra.mxu0 %v1883
    %2433 = vmatprep.subr.bf16.mxu0 %v1877
    %2434 = vmatpush1.bf16.msra.mxu0 %v1876
    %2435 = vmatprep.subr.bf16.mxu0 %v1870
    %2436 = vmatpush1.bf16.msra.mxu0 %v1869
    %2437 = vmatprep.subr.bf16.mxu0 %v1975
    %2438 = vmatpush2.bf16.msra.mxu0 %v1974
    %2439 = vmatprep.subr.bf16.mxu0 %v1968
    %2440 = vmatpush2.bf16.msra.mxu0 %v1967
    %2441 = vmatprep.subr.bf16.mxu0 %v1961
    %2442 = vmatpush2.bf16.msra.mxu0 %v1960
    %2443 = vmatprep.subr.bf16.mxu0 %v1954
    %2444 = vmatpush2.bf16.msra.mxu0 %v1953
    %2445 = vmatprep.subr.bf16.mxu0 %v1947
    %2446 = vmatpush2.bf16.msra.mxu0 %v1946
    %2447 = vmatprep.subr.bf16.mxu0 %v1940
    %2448 = vmatpush2.bf16.msra.mxu0 %v1939
    %2449 = vmatprep.subr.bf16.mxu0 %v1933
    %2450 = vmatpush2.bf16.msra.mxu0 %v1932
    %2451 = vmatprep.subr.bf16.mxu0 %v1926
    %2452 = vmatpush2.bf16.msra.mxu0 %v1925
    %2453 = vmatprep.mubr.bf16.mxu0 %v136
    %2454 = vmatmul.mubr.bf16.gmra.mxu0 %v135
    %v2455 = vpop.f32.mrf.mxu0
    %v2456 = vadd.f32 %v2413, %v2455
    %v2457 = vpop.f32.mrf.mxu0
    %v2458 = vadd.f32 %v2415, %v2457
    %v2459 = vpop.f32.mrf.mxu0
    %v2460 = vadd.f32 %v2417, %v2459
    %v2461 = vpop.f32.mrf.mxu0
    %v2462 = vadd.f32 %v2419, %v2461
    %2463 = vdwg.mxu0
    %2464 = vmatprep.subr.bf16.mxu0 0
    %2465 = vmatpush1.bf16.msra.mxu0 0
    %2466 = vmatprep.subr.bf16.mxu0 0
    %2467 = vmatpush1.bf16.msra.mxu0 0
    %2468 = vmatprep.subr.bf16.mxu0 0
    %2469 = vmatpush1.bf16.msra.mxu0 0
    %2470 = vmatprep.subr.bf16.mxu0 0
    %2471 = vmatpush1.bf16.msra.mxu0 0
    %2472 = vmatprep.subr.bf16.mxu0 0
    %2473 = vmatpush1.bf16.msra.mxu0 0
    %2474 = vmatprep.subr.bf16.mxu0 0
    %2475 = vmatpush1.bf16.msra.mxu0 0
    %2476 = vmatprep.subr.bf16.mxu0 0
    %2477 = vmatpush1.bf16.msra.mxu0 0
    %2478 = vmatprep.subr.bf16.mxu0 %v1982
    %2479 = vmatpush1.bf16.msra.mxu0 %v1981
    %2480 = vmatprep.subr.bf16.mxu0 0
    %2481 = vmatpush2.bf16.msra.mxu0 0
    %2482 = vmatprep.subr.bf16.mxu0 0
    %2483 = vmatpush2.bf16.msra.mxu0 0
    %2484 = vmatprep.subr.bf16.mxu0 0
    %2485 = vmatpush2.bf16.msra.mxu0 0
    %2486 = vmatprep.subr.bf16.mxu0 0
    %2487 = vmatpush2.bf16.msra.mxu0 0
    %2488 = vmatprep.subr.bf16.mxu0 0
    %2489 = vmatpush2.bf16.msra.mxu0 0
    %2490 = vmatprep.subr.bf16.mxu0 0
    %2491 = vmatpush2.bf16.msra.mxu0 0
    %2492 = vmatprep.subr.bf16.mxu0 0
    %2493 = vmatpush2.bf16.msra.mxu0 0
    %2494 = vmatprep.subr.bf16.mxu0 0
    %2495 = vmatpush2.bf16.msra.mxu0 0
    %2496 = vmatprep.mubr.bf16.mxu0 0
    %2497 = vmatmul.mubr.bf16.gmra.mxu0 %v2333
    %v2498 = vpop.f32.mrf.mxu0
    %v2499 = vadd.f32 %v2456, %v2498
    %v2500 = vpop.f32.mrf.mxu0
    %v2501 = vadd.f32 %v2458, %v2500
    %v2502 = vpop.f32.mrf.mxu0
    %v2503 = vadd.f32 %v2460, %v2502
    %v2504 = vpop.f32.mrf.mxu0
    %v2505 = vadd.f32 %v2462, %v2504
    %2506 = vdwg.mxu0
    %2507 = vmatprep.subr.bf16.mxu0 %v1697
    %2508 = vmatpush1.bf16.msra.mxu0 %v1696
    %2509 = vmatprep.subr.bf16.mxu0 %v1690
    %2510 = vmatpush1.bf16.msra.mxu0 %v1689
    %2511 = vmatprep.subr.bf16.mxu0 %v1683
    %2512 = vmatpush1.bf16.msra.mxu0 %v1682
    %2513 = vmatprep.subr.bf16.mxu0 %v1676
    %2514 = vmatpush1.bf16.msra.mxu0 %v1675
    %2515 = vmatprep.subr.bf16.mxu0 %v1669
    %2516 = vmatpush1.bf16.msra.mxu0 %v1668
    %2517 = vmatprep.subr.bf16.mxu0 %v1662
    %2518 = vmatpush1.bf16.msra.mxu0 %v1661
    %2519 = vmatprep.subr.bf16.mxu0 %v1655
    %2520 = vmatpush1.bf16.msra.mxu0 %v1654
    %2521 = vmatprep.subr.bf16.mxu0 %v1648
    %2522 = vmatpush1.bf16.msra.mxu0 %v1647
    %2523 = vmatprep.subr.bf16.mxu0 %v1753
    %2524 = vmatpush2.bf16.msra.mxu0 %v1752
    %2525 = vmatprep.subr.bf16.mxu0 %v1746
    %2526 = vmatpush2.bf16.msra.mxu0 %v1745
    %2527 = vmatprep.subr.bf16.mxu0 %v1739
    %2528 = vmatpush2.bf16.msra.mxu0 %v1738
    %2529 = vmatprep.subr.bf16.mxu0 %v1732
    %2530 = vmatpush2.bf16.msra.mxu0 %v1731
    %2531 = vmatprep.subr.bf16.mxu0 %v1725
    %2532 = vmatpush2.bf16.msra.mxu0 %v1724
    %2533 = vmatprep.subr.bf16.mxu0 %v1718
    %2534 = vmatpush2.bf16.msra.mxu0 %v1717
    %2535 = vmatprep.subr.bf16.mxu0 %v1711
    %2536 = vmatpush2.bf16.msra.mxu0 %v1710
    %2537 = vmatprep.subr.bf16.mxu0 %v1704
    %2538 = vmatpush2.bf16.msra.mxu0 %v1703
    %2539 = vmatprep.mubr.bf16.mxu0 %v132
    %2540 = vmatmul.mubr.bf16.gmra.mxu0 %v131
    %v2541 = vpop.f32.mrf.mxu0
    %v2542 = vadd.f32 %v543, %v2541
    %v2543 = vpop.f32.mrf.mxu0
    %v2544 = vadd.f32 %v547, %v2543
    %v2545 = vpop.f32.mrf.mxu0
    %v2546 = vadd.f32 %v543, %v2545
    %v2547 = vpop.f32.mrf.mxu0
    %v2548 = vadd.f32 %v547, %v2547
    %2549 = vdwg.mxu0
    %2550 = vmatprep.subr.bf16.mxu0 %v1809
    %2551 = vmatpush1.bf16.msra.mxu0 %v1808
    %2552 = vmatprep.subr.bf16.mxu0 %v1802
    %2553 = vmatpush1.bf16.msra.mxu0 %v1801
    %2554 = vmatprep.subr.bf16.mxu0 %v1795
    %2555 = vmatpush1.bf16.msra.mxu0 %v1794
    %2556 = vmatprep.subr.bf16.mxu0 %v1788
    %2557 = vmatpush1.bf16.msra.mxu0 %v1787
    %2558 = vmatprep.subr.bf16.mxu0 %v1781
    %2559 = vmatpush1.bf16.msra.mxu0 %v1780
    %2560 = vmatprep.subr.bf16.mxu0 %v1774
    %2561 = vmatpush1.bf16.msra.mxu0 %v1773
    %2562 = vmatprep.subr.bf16.mxu0 %v1767
    %2563 = vmatpush1.bf16.msra.mxu0 %v1766
    %2564 = vmatprep.subr.bf16.mxu0 %v1760
    %2565 = vmatpush1.bf16.msra.mxu0 %v1759
    %2566 = vmatprep.subr.bf16.mxu0 %v1865
    %2567 = vmatpush2.bf16.msra.mxu0 %v1864
    %2568 = vmatprep.subr.bf16.mxu0 %v1858
    %2569 = vmatpush2.bf16.msra.mxu0 %v1857
    %2570 = vmatprep.subr.bf16.mxu0 %v1851
    %2571 = vmatpush2.bf16.msra.mxu0 %v1850
    %2572 = vmatprep.subr.bf16.mxu0 %v1844
    %2573 = vmatpush2.bf16.msra.mxu0 %v1843
    %2574 = vmatprep.subr.bf16.mxu0 %v1837
    %2575 = vmatpush2.bf16.msra.mxu0 %v1836
    %2576 = vmatprep.subr.bf16.mxu0 %v1830
    %2577 = vmatpush2.bf16.msra.mxu0 %v1829
    %2578 = vmatprep.subr.bf16.mxu0 %v1823
    %2579 = vmatpush2.bf16.msra.mxu0 %v1822
    %2580 = vmatprep.subr.bf16.mxu0 %v1816
    %2581 = vmatpush2.bf16.msra.mxu0 %v1815
    %2582 = vmatprep.mubr.bf16.mxu0 %v134
    %2583 = vmatmul.mubr.bf16.gmra.mxu0 %v133
    %v2584 = vpop.f32.mrf.mxu0
    %v2585 = vadd.f32 %v2542, %v2584
    %v2586 = vpop.f32.mrf.mxu0
    %v2587 = vadd.f32 %v2544, %v2586
    %v2588 = vpop.f32.mrf.mxu0
    %v2589 = vadd.f32 %v2546, %v2588
    %v2590 = vpop.f32.mrf.mxu0
    %v2591 = vadd.f32 %v2548, %v2590
    %2592 = vdwg.mxu0
    %2593 = vmatprep.subr.bf16.mxu0 %v1921
    %2594 = vmatpush1.bf16.msra.mxu0 %v1920
    %2595 = vmatprep.subr.bf16.mxu0 %v1914
    %2596 = vmatpush1.bf16.msra.mxu0 %v1913
    %2597 = vmatprep.subr.bf16.mxu0 %v1907
    %2598 = vmatpush1.bf16.msra.mxu0 %v1906
    %2599 = vmatprep.subr.bf16.mxu0 %v1900
    %2600 = vmatpush1.bf16.msra.mxu0 %v1899
    %2601 = vmatprep.subr.bf16.mxu0 %v1893
    %2602 = vmatpush1.bf16.msra.mxu0 %v1892
    %2603 = vmatprep.subr.bf16.mxu0 %v1886
    %2604 = vmatpush1.bf16.msra.mxu0 %v1885
    %2605 = vmatprep.subr.bf16.mxu0 %v1879
    %2606 = vmatpush1.bf16.msra.mxu0 %v1878
    %2607 = vmatprep.subr.bf16.mxu0 %v1872
    %2608 = vmatpush1.bf16.msra.mxu0 %v1871
    %2609 = vmatprep.subr.bf16.mxu0 %v1977
    %2610 = vmatpush2.bf16.msra.mxu0 %v1976
    %2611 = vmatprep.subr.bf16.mxu0 %v1970
    %2612 = vmatpush2.bf16.msra.mxu0 %v1969
    %2613 = vmatprep.subr.bf16.mxu0 %v1963
    %2614 = vmatpush2.bf16.msra.mxu0 %v1962
    %2615 = vmatprep.subr.bf16.mxu0 %v1956
    %2616 = vmatpush2.bf16.msra.mxu0 %v1955
    %2617 = vmatprep.subr.bf16.mxu0 %v1949
    %2618 = vmatpush2.bf16.msra.mxu0 %v1948
    %2619 = vmatprep.subr.bf16.mxu0 %v1942
    %2620 = vmatpush2.bf16.msra.mxu0 %v1941
    %2621 = vmatprep.subr.bf16.mxu0 %v1935
    %2622 = vmatpush2.bf16.msra.mxu0 %v1934
    %2623 = vmatprep.subr.bf16.mxu0 %v1928
    %2624 = vmatpush2.bf16.msra.mxu0 %v1927
    %2625 = vmatprep.mubr.bf16.mxu0 %v136
    %2626 = vmatmul.mubr.bf16.gmra.mxu0 %v135
    %v2627 = vpop.f32.mrf.mxu0
    %v2628 = vadd.f32 %v2585, %v2627
    %v2629 = vpop.f32.mrf.mxu0
    %v2630 = vadd.f32 %v2587, %v2629
    %v2631 = vpop.f32.mrf.mxu0
    %v2632 = vadd.f32 %v2589, %v2631
    %v2633 = vpop.f32.mrf.mxu0
    %v2634 = vadd.f32 %v2591, %v2633
    %2635 = vdwg.mxu0
    %2636 = vmatprep.subr.bf16.mxu0 0
    %2637 = vmatpush1.bf16.msra.mxu0 0
    %2638 = vmatprep.subr.bf16.mxu0 0
    %2639 = vmatpush1.bf16.msra.mxu0 0
    %2640 = vmatprep.subr.bf16.mxu0 0
    %2641 = vmatpush1.bf16.msra.mxu0 0
    %2642 = vmatprep.subr.bf16.mxu0 0
    %2643 = vmatpush1.bf16.msra.mxu0 0
    %2644 = vmatprep.subr.bf16.mxu0 0
    %2645 = vmatpush1.bf16.msra.mxu0 0
    %2646 = vmatprep.subr.bf16.mxu0 0
    %2647 = vmatpush1.bf16.msra.mxu0 0
    %2648 = vmatprep.subr.bf16.mxu0 0
    %2649 = vmatpush1.bf16.msra.mxu0 0
    %2650 = vmatprep.subr.bf16.mxu0 %v1984
    %2651 = vmatpush1.bf16.msra.mxu0 %v1983
    %2652 = vmatprep.subr.bf16.mxu0 0
    %2653 = vmatpush2.bf16.msra.mxu0 0
    %2654 = vmatprep.subr.bf16.mxu0 0
    %2655 = vmatpush2.bf16.msra.mxu0 0
    %2656 = vmatprep.subr.bf16.mxu0 0
    %2657 = vmatpush2.bf16.msra.mxu0 0
    %2658 = vmatprep.subr.bf16.mxu0 0
    %2659 = vmatpush2.bf16.msra.mxu0 0
    %2660 = vmatprep.subr.bf16.mxu0 0
    %2661 = vmatpush2.bf16.msra.mxu0 0
    %2662 = vmatprep.subr.bf16.mxu0 0
    %2663 = vmatpush2.bf16.msra.mxu0 0
    %2664 = vmatprep.subr.bf16.mxu0 0
    %2665 = vmatpush2.bf16.msra.mxu0 0
    %2666 = vmatprep.subr.bf16.mxu0 0
    %2667 = vmatpush2.bf16.msra.mxu0 0
    %2668 = vmatprep.mubr.bf16.mxu0 0
    %2669 = vmatmul.mubr.bf16.gmra.mxu0 %v2333
    %v2670 = vpop.f32.mrf.mxu0
    %v2671 = vadd.f32 %v2628, %v2670
    %v2672 = vpop.f32.mrf.mxu0
    %v2673 = vadd.f32 %v2630, %v2672
    %v2674 = vpop.f32.mrf.mxu0
    %v2675 = vadd.f32 %v2632, %v2674
    %v2676 = vpop.f32.mrf.mxu0
    %v2677 = vadd.f32 %v2634, %v2676
    %2678 = vdwg.mxu0
    %2679 = vmatprep.subr.bf16.mxu0 %v1699
    %2680 = vmatpush1.bf16.msra.mxu0 %v1698
    %2681 = vmatprep.subr.bf16.mxu0 %v1692
    %2682 = vmatpush1.bf16.msra.mxu0 %v1691
    %2683 = vmatprep.subr.bf16.mxu0 %v1685
    %2684 = vmatpush1.bf16.msra.mxu0 %v1684
    %2685 = vmatprep.subr.bf16.mxu0 %v1678
    %2686 = vmatpush1.bf16.msra.mxu0 %v1677
    %2687 = vmatprep.subr.bf16.mxu0 %v1671
    %2688 = vmatpush1.bf16.msra.mxu0 %v1670
    %2689 = vmatprep.subr.bf16.mxu0 %v1664
    %2690 = vmatpush1.bf16.msra.mxu0 %v1663
    %2691 = vmatprep.subr.bf16.mxu0 %v1657
    %2692 = vmatpush1.bf16.msra.mxu0 %v1656
    %2693 = vmatprep.subr.bf16.mxu0 %v1650
    %2694 = vmatpush1.bf16.msra.mxu0 %v1649
    %2695 = vmatprep.subr.bf16.mxu0 %v1755
    %2696 = vmatpush2.bf16.msra.mxu0 %v1754
    %2697 = vmatprep.subr.bf16.mxu0 %v1748
    %2698 = vmatpush2.bf16.msra.mxu0 %v1747
    %2699 = vmatprep.subr.bf16.mxu0 %v1741
    %2700 = vmatpush2.bf16.msra.mxu0 %v1740
    %2701 = vmatprep.subr.bf16.mxu0 %v1734
    %2702 = vmatpush2.bf16.msra.mxu0 %v1733
    %2703 = vmatprep.subr.bf16.mxu0 %v1727
    %2704 = vmatpush2.bf16.msra.mxu0 %v1726
    %2705 = vmatprep.subr.bf16.mxu0 %v1720
    %2706 = vmatpush2.bf16.msra.mxu0 %v1719
    %2707 = vmatprep.subr.bf16.mxu0 %v1713
    %2708 = vmatpush2.bf16.msra.mxu0 %v1712
    %2709 = vmatprep.subr.bf16.mxu0 %v1706
    %2710 = vmatpush2.bf16.msra.mxu0 %v1705
    %2711 = vmatprep.mubr.bf16.mxu0 %v132
    %2712 = vmatmul.mubr.bf16.gmra.mxu0 %v131
    %v2713 = vpop.f32.mrf.mxu0
    %v2714 = vadd.f32 %v551, %v2713
    %v2715 = vpop.f32.mrf.mxu0
    %v2716 = vadd.f32 %v555, %v2715
    %v2717 = vpop.f32.mrf.mxu0
    %v2718 = vadd.f32 %v551, %v2717
    %v2719 = vpop.f32.mrf.mxu0
    %v2720 = vadd.f32 %v555, %v2719
    %2721 = vdwg.mxu0
    %2722 = vmatprep.subr.bf16.mxu0 %v1811
    %2723 = vmatpush1.bf16.msra.mxu0 %v1810
    %2724 = vmatprep.subr.bf16.mxu0 %v1804
    %2725 = vmatpush1.bf16.msra.mxu0 %v1803
    %2726 = vmatprep.subr.bf16.mxu0 %v1797
    %2727 = vmatpush1.bf16.msra.mxu0 %v1796
    %2728 = vmatprep.subr.bf16.mxu0 %v1790
    %2729 = vmatpush1.bf16.msra.mxu0 %v1789
    %2730 = vmatprep.subr.bf16.mxu0 %v1783
    %2731 = vmatpush1.bf16.msra.mxu0 %v1782
    %2732 = vmatprep.subr.bf16.mxu0 %v1776
    %2733 = vmatpush1.bf16.msra.mxu0 %v1775
    %2734 = vmatprep.subr.bf16.mxu0 %v1769
    %2735 = vmatpush1.bf16.msra.mxu0 %v1768
    %2736 = vmatprep.subr.bf16.mxu0 %v1762
    %2737 = vmatpush1.bf16.msra.mxu0 %v1761
    %2738 = vmatprep.subr.bf16.mxu0 %v1867
    %2739 = vmatpush2.bf16.msra.mxu0 %v1866
    %2740 = vmatprep.subr.bf16.mxu0 %v1860
    %2741 = vmatpush2.bf16.msra.mxu0 %v1859
    %2742 = vmatprep.subr.bf16.mxu0 %v1853
    %2743 = vmatpush2.bf16.msra.mxu0 %v1852
    %2744 = vmatprep.subr.bf16.mxu0 %v1846
    %2745 = vmatpush2.bf16.msra.mxu0 %v1845
    %2746 = vmatprep.subr.bf16.mxu0 %v1839
    %2747 = vmatpush2.bf16.msra.mxu0 %v1838
    %2748 = vmatprep.subr.bf16.mxu0 %v1832
    %2749 = vmatpush2.bf16.msra.mxu0 %v1831
    %2750 = vmatprep.subr.bf16.mxu0 %v1825
    %2751 = vmatpush2.bf16.msra.mxu0 %v1824
    %2752 = vmatprep.subr.bf16.mxu0 %v1818
    %2753 = vmatpush2.bf16.msra.mxu0 %v1817
    %2754 = vmatprep.mubr.bf16.mxu0 %v134
    %2755 = vmatmul.mubr.bf16.gmra.mxu0 %v133
    %v2756 = vpop.f32.mrf.mxu0
    %v2757 = vadd.f32 %v2714, %v2756
    %v2758 = vpop.f32.mrf.mxu0
    %v2759 = vadd.f32 %v2716, %v2758
    %v2760 = vpop.f32.mrf.mxu0
    %v2761 = vadd.f32 %v2718, %v2760
    %v2762 = vpop.f32.mrf.mxu0
    %v2763 = vadd.f32 %v2720, %v2762
    %2764 = vdwg.mxu0
    %2765 = vmatprep.subr.bf16.mxu0 %v1923
    %2766 = vmatpush1.bf16.msra.mxu0 %v1922
    %2767 = vmatprep.subr.bf16.mxu0 %v1916
    %2768 = vmatpush1.bf16.msra.mxu0 %v1915
    %2769 = vmatprep.subr.bf16.mxu0 %v1909
    %2770 = vmatpush1.bf16.msra.mxu0 %v1908
    %2771 = vmatprep.subr.bf16.mxu0 %v1902
    %2772 = vmatpush1.bf16.msra.mxu0 %v1901
    %2773 = vmatprep.subr.bf16.mxu0 %v1895
    %2774 = vmatpush1.bf16.msra.mxu0 %v1894
    %2775 = vmatprep.subr.bf16.mxu0 %v1888
    %2776 = vmatpush1.bf16.msra.mxu0 %v1887
    %2777 = vmatprep.subr.bf16.mxu0 %v1881
    %2778 = vmatpush1.bf16.msra.mxu0 %v1880
    %2779 = vmatprep.subr.bf16.mxu0 %v1874
    %2780 = vmatpush1.bf16.msra.mxu0 %v1873
    %2781 = vmatprep.subr.bf16.mxu0 %v1979
    %2782 = vmatpush2.bf16.msra.mxu0 %v1978
    %2783 = vmatprep.subr.bf16.mxu0 %v1972
    %2784 = vmatpush2.bf16.msra.mxu0 %v1971
    %2785 = vmatprep.subr.bf16.mxu0 %v1965
    %2786 = vmatpush2.bf16.msra.mxu0 %v1964
    %2787 = vmatprep.subr.bf16.mxu0 %v1958
    %2788 = vmatpush2.bf16.msra.mxu0 %v1957
    %2789 = vmatprep.subr.bf16.mxu0 %v1951
    %2790 = vmatpush2.bf16.msra.mxu0 %v1950
    %2791 = vmatprep.subr.bf16.mxu0 %v1944
    %2792 = vmatpush2.bf16.msra.mxu0 %v1943
    %2793 = vmatprep.subr.bf16.mxu0 %v1937
    %2794 = vmatpush2.bf16.msra.mxu0 %v1936
    %2795 = vmatprep.subr.bf16.mxu0 %v1930
    %2796 = vmatpush2.bf16.msra.mxu0 %v1929
    %2797 = vmatprep.mubr.bf16.mxu0 %v136
    %2798 = vmatmul.mubr.bf16.gmra.mxu0 %v135
    %v2799 = vpop.f32.mrf.mxu0
    %v2800 = vadd.f32 %v2757, %v2799
    %v2801 = vpop.f32.mrf.mxu0
    %v2802 = vadd.f32 %v2759, %v2801
    %v2803 = vpop.f32.mrf.mxu0
    %v2804 = vadd.f32 %v2761, %v2803
    %v2805 = vpop.f32.mrf.mxu0
    %v2806 = vadd.f32 %v2763, %v2805
    %2807 = vdwg.mxu0
    %2808 = vmatprep.subr.bf16.mxu0 0
    %2809 = vmatpush1.bf16.msra.mxu0 0
    %2810 = vmatprep.subr.bf16.mxu0 0
    %2811 = vmatpush1.bf16.msra.mxu0 0
    %2812 = vmatprep.subr.bf16.mxu0 0
    %2813 = vmatpush1.bf16.msra.mxu0 0
    %2814 = vmatprep.subr.bf16.mxu0 0
    %2815 = vmatpush1.bf16.msra.mxu0 0
    %2816 = vmatprep.subr.bf16.mxu0 0
    %2817 = vmatpush1.bf16.msra.mxu0 0
    %2818 = vmatprep.subr.bf16.mxu0 0
    %2819 = vmatpush1.bf16.msra.mxu0 0
    %2820 = vmatprep.subr.bf16.mxu0 0
    %2821 = vmatpush1.bf16.msra.mxu0 0
    %2822 = vmatprep.subr.bf16.mxu0 %v1986
    %2823 = vmatpush1.bf16.msra.mxu0 %v1985
    %2824 = vmatprep.subr.bf16.mxu0 0
    %2825 = vmatpush2.bf16.msra.mxu0 0
    %2826 = vmatprep.subr.bf16.mxu0 0
    %2827 = vmatpush2.bf16.msra.mxu0 0
    %2828 = vmatprep.subr.bf16.mxu0 0
    %2829 = vmatpush2.bf16.msra.mxu0 0
    %2830 = vmatprep.subr.bf16.mxu0 0
    %2831 = vmatpush2.bf16.msra.mxu0 0
    %2832 = vmatprep.subr.bf16.mxu0 0
    %2833 = vmatpush2.bf16.msra.mxu0 0
    %2834 = vmatprep.subr.bf16.mxu0 0
    %2835 = vmatpush2.bf16.msra.mxu0 0
    %2836 = vmatprep.subr.bf16.mxu0 0
    %2837 = vmatpush2.bf16.msra.mxu0 0
    %2838 = vmatprep.subr.bf16.mxu0 0
    %2839 = vmatpush2.bf16.msra.mxu0 0
    %2840 = vmatprep.mubr.bf16.mxu0 0
    %2841 = vmatmul.mubr.bf16.gmra.mxu0 %v2333
    %v2842 = vpop.f32.mrf.mxu0
    %v2843 = vadd.f32 %v2800, %v2842
    %v2844 = vpop.f32.mrf.mxu0
    %v2845 = vadd.f32 %v2802, %v2844
    %v2846 = vpop.f32.mrf.mxu0
    %v2847 = vadd.f32 %v2804, %v2846
    %v2848 = vpop.f32.mrf.mxu0
    %v2849 = vadd.f32 %v2806, %v2848
    %2850 = vdwg.mxu0
    %2851 = vmatprep.subr.bf16.mxu0 0
    %2852 = vmatpush1.bf16.msra.mxu0 %v1700
    %2853 = vmatprep.subr.bf16.mxu0 0
    %2854 = vmatpush1.bf16.msra.mxu0 %v1693
    %2855 = vmatprep.subr.bf16.mxu0 0
    %2856 = vmatpush1.bf16.msra.mxu0 %v1686
    %2857 = vmatprep.subr.bf16.mxu0 0
    %2858 = vmatpush1.bf16.msra.mxu0 %v1679
    %2859 = vmatprep.subr.bf16.mxu0 0
    %2860 = vmatpush1.bf16.msra.mxu0 %v1672
    %2861 = vmatprep.subr.bf16.mxu0 0
    %2862 = vmatpush1.bf16.msra.mxu0 %v1665
    %2863 = vmatprep.subr.bf16.mxu0 0
    %2864 = vmatpush1.bf16.msra.mxu0 %v1658
    %2865 = vmatprep.subr.bf16.mxu0 0
    %2866 = vmatpush1.bf16.msra.mxu0 %v1651
    %2867 = vmatprep.subr.bf16.mxu0 0
    %2868 = vmatpush2.bf16.msra.mxu0 %v1756
    %2869 = vmatprep.subr.bf16.mxu0 0
    %2870 = vmatpush2.bf16.msra.mxu0 %v1749
    %2871 = vmatprep.subr.bf16.mxu0 0
    %2872 = vmatpush2.bf16.msra.mxu0 %v1742
    %2873 = vmatprep.subr.bf16.mxu0 0
    %2874 = vmatpush2.bf16.msra.mxu0 %v1735
    %2875 = vmatprep.subr.bf16.mxu0 0
    %2876 = vmatpush2.bf16.msra.mxu0 %v1728
    %2877 = vmatprep.subr.bf16.mxu0 0
    %2878 = vmatpush2.bf16.msra.mxu0 %v1721
    %2879 = vmatprep.subr.bf16.mxu0 0
    %2880 = vmatpush2.bf16.msra.mxu0 %v1714
    %2881 = vmatprep.subr.bf16.mxu0 0
    %2882 = vmatpush2.bf16.msra.mxu0 %v1707
    %2883 = vmatprep.mubr.bf16.mxu0 %v132
    %2884 = vmatmul.mubr.bf16.gmra.mxu0 %v131
    %v2885 = vpop.f32.mrf.mxu0
    %v2886 = vadd.f32 %v559, %v2885
    %v2887 = vpop.f32.mrf.mxu0
    %v2888 = vpop.f32.mrf.mxu0
    %v2889 = vadd.f32 %v559, %v2888
    %v2890 = vpop.f32.mrf.mxu0
    %2891 = vdwg.mxu0
    %2892 = vmatprep.subr.bf16.mxu0 0
    %2893 = vmatpush1.bf16.msra.mxu0 %v1812
    %2894 = vmatprep.subr.bf16.mxu0 0
    %2895 = vmatpush1.bf16.msra.mxu0 %v1805
    %2896 = vmatprep.subr.bf16.mxu0 0
    %2897 = vmatpush1.bf16.msra.mxu0 %v1798
    %2898 = vmatprep.subr.bf16.mxu0 0
    %2899 = vmatpush1.bf16.msra.mxu0 %v1791
    %2900 = vmatprep.subr.bf16.mxu0 0
    %2901 = vmatpush1.bf16.msra.mxu0 %v1784
    %2902 = vmatprep.subr.bf16.mxu0 0
    %2903 = vmatpush1.bf16.msra.mxu0 %v1777
    %2904 = vmatprep.subr.bf16.mxu0 0
    %2905 = vmatpush1.bf16.msra.mxu0 %v1770
    %2906 = vmatprep.subr.bf16.mxu0 0
    %2907 = vmatpush1.bf16.msra.mxu0 %v1763
    %2908 = vmatprep.subr.bf16.mxu0 0
    %2909 = vmatpush2.bf16.msra.mxu0 %v1868
    %2910 = vmatprep.subr.bf16.mxu0 0
    %2911 = vmatpush2.bf16.msra.mxu0 %v1861
    %2912 = vmatprep.subr.bf16.mxu0 0
    %2913 = vmatpush2.bf16.msra.mxu0 %v1854
    %2914 = vmatprep.subr.bf16.mxu0 0
    %2915 = vmatpush2.bf16.msra.mxu0 %v1847
    %2916 = vmatprep.subr.bf16.mxu0 0
    %2917 = vmatpush2.bf16.msra.mxu0 %v1840
    %2918 = vmatprep.subr.bf16.mxu0 0
    %2919 = vmatpush2.bf16.msra.mxu0 %v1833
    %2920 = vmatprep.subr.bf16.mxu0 0
    %2921 = vmatpush2.bf16.msra.mxu0 %v1826
    %2922 = vmatprep.subr.bf16.mxu0 0
    %2923 = vmatpush2.bf16.msra.mxu0 %v1819
    %2924 = vmatprep.mubr.bf16.mxu0 %v134
    %2925 = vmatmul.mubr.bf16.gmra.mxu0 %v133
    %v2926 = vpop.f32.mrf.mxu0
    %v2927 = vadd.f32 %v2886, %v2926
    %v2928 = vpop.f32.mrf.mxu0
    %v2929 = vpop.f32.mrf.mxu0
    %v2930 = vadd.f32 %v2889, %v2929
    %v2931 = vpop.f32.mrf.mxu0
    %2932 = vdwg.mxu0
    %2933 = vmatprep.subr.bf16.mxu0 0
    %2934 = vmatpush1.bf16.msra.mxu0 %v1924
    %2935 = vmatprep.subr.bf16.mxu0 0
    %2936 = vmatpush1.bf16.msra.mxu0 %v1917
    %2937 = vmatprep.subr.bf16.mxu0 0
    %2938 = vmatpush1.bf16.msra.mxu0 %v1910
    %2939 = vmatprep.subr.bf16.mxu0 0
    %2940 = vmatpush1.bf16.msra.mxu0 %v1903
    %2941 = vmatprep.subr.bf16.mxu0 0
    %2942 = vmatpush1.bf16.msra.mxu0 %v1896
    %2943 = vmatprep.subr.bf16.mxu0 0
    %2944 = vmatpush1.bf16.msra.mxu0 %v1889
    %2945 = vmatprep.subr.bf16.mxu0 0
    %2946 = vmatpush1.bf16.msra.mxu0 %v1882
    %2947 = vmatprep.subr.bf16.mxu0 0
    %2948 = vmatpush1.bf16.msra.mxu0 %v1875
    %2949 = vmatprep.subr.bf16.mxu0 0
    %2950 = vmatpush2.bf16.msra.mxu0 %v1980
    %2951 = vmatprep.subr.bf16.mxu0 0
    %2952 = vmatpush2.bf16.msra.mxu0 %v1973
    %2953 = vmatprep.subr.bf16.mxu0 0
    %2954 = vmatpush2.bf16.msra.mxu0 %v1966
    %2955 = vmatprep.subr.bf16.mxu0 0
    %2956 = vmatpush2.bf16.msra.mxu0 %v1959
    %2957 = vmatprep.subr.bf16.mxu0 0
    %2958 = vmatpush2.bf16.msra.mxu0 %v1952
    %2959 = vmatprep.subr.bf16.mxu0 0
    %2960 = vmatpush2.bf16.msra.mxu0 %v1945
    %2961 = vmatprep.subr.bf16.mxu0 0
    %2962 = vmatpush2.bf16.msra.mxu0 %v1938
    %2963 = vmatprep.subr.bf16.mxu0 0
    %2964 = vmatpush2.bf16.msra.mxu0 %v1931
    %2965 = vmatprep.mubr.bf16.mxu0 %v136
    %2966 = vmatmul.mubr.bf16.gmra.mxu0 %v135
    %v2967 = vpop.f32.mrf.mxu0
    %v2968 = vadd.f32 %v2927, %v2967
    %v2969 = vpop.f32.mrf.mxu0
    %v2970 = vpop.f32.mrf.mxu0
    %v2971 = vadd.f32 %v2930, %v2970
    %v2972 = vpop.f32.mrf.mxu0
    %2973 = vdwg.mxu0
    %2974 = vmatprep.subr.bf16.mxu0 0
    %2975 = vmatpush1.bf16.msra.mxu0 0
    %2976 = vmatprep.subr.bf16.mxu0 0
    %2977 = vmatpush1.bf16.msra.mxu0 0
    %2978 = vmatprep.subr.bf16.mxu0 0
    %2979 = vmatpush1.bf16.msra.mxu0 0
    %2980 = vmatprep.subr.bf16.mxu0 0
    %2981 = vmatpush1.bf16.msra.mxu0 0
    %2982 = vmatprep.subr.bf16.mxu0 0
    %2983 = vmatpush1.bf16.msra.mxu0 0
    %2984 = vmatprep.subr.bf16.mxu0 0
    %2985 = vmatpush1.bf16.msra.mxu0 0
    %2986 = vmatprep.subr.bf16.mxu0 0
    %2987 = vmatpush1.bf16.msra.mxu0 0
    %2988 = vmatprep.subr.bf16.mxu0 0
    %2989 = vmatpush1.bf16.msra.mxu0 %v1987
    %2990 = vmatprep.subr.bf16.mxu0 0
    %2991 = vmatpush2.bf16.msra.mxu0 0
    %2992 = vmatprep.subr.bf16.mxu0 0
    %2993 = vmatpush2.bf16.msra.mxu0 0
    %2994 = vmatprep.subr.bf16.mxu0 0
    %2995 = vmatpush2.bf16.msra.mxu0 0
    %2996 = vmatprep.subr.bf16.mxu0 0
    %2997 = vmatpush2.bf16.msra.mxu0 0
    %2998 = vmatprep.subr.bf16.mxu0 0
    %2999 = vmatpush2.bf16.msra.mxu0 0
    %3000 = vmatprep.subr.bf16.mxu0 0
    %3001 = vmatpush2.bf16.msra.mxu0 0
    %3002 = vmatprep.subr.bf16.mxu0 0
    %3003 = vmatpush2.bf16.msra.mxu0 0
    %3004 = vmatprep.subr.bf16.mxu0 0
    %3005 = vmatpush2.bf16.msra.mxu0 0
    %3006 = vmatprep.mubr.bf16.mxu0 0
    %3007 = vmatmul.mubr.bf16.gmra.mxu0 %v2333
    %v3008 = vpop.f32.mrf.mxu0
    %v3009 = vadd.f32 %v2968, %v3008
    %v3010 = vpop.f32.mrf.mxu0
    %v3011 = vpop.f32.mrf.mxu0
    %v3012 = vadd.f32 %v2971, %v3011
    %v3013 = vpop.f32.mrf.mxu0
    %3014 = vdwg.mxu0
    %v3015 = vtanh.pop %v2499
    %v3016 = vtanh.pop %v2501
    %v3017 = vtanh.pop %v2671
    %v3018 = vtanh.pop %v2673
    %v3019 = vtanh.pop %v2843
    %v3020 = vtanh.pop %v2845
    %v3021 = vtanh.pop %v3009
    %v3022 = vtanh.pop %v2503
    %v3023 = vtanh.pop %v2505
    %v3024 = vtanh.pop %v2675
    %v3025 = vtanh.pop %v2677
    %v3026 = vtanh.pop %v2847
    %v3027 = vtanh.pop %v2849
    %v3028 = vtanh.pop %v3012
    %v3029 = vpack.c.bf16 %v3022, %v3015
    %v3030 = vpack.c.bf16 %v3023, %v3016
    %v3031 = vpack.c.bf16 %v3024, %v3017
    %v3032 = vpack.c.bf16 %v3025, %v3018
    %v3033 = vpack.c.bf16 %v3026, %v3019
    %v3034 = vpack.c.bf16 %v3027, %v3020
    %v3035 = vpack.c.bf16 %v3028, %v3021
    %v3036 = vld [vmem:[#allocation8] sm:$0xff]
    %v3037 = vld [vmem:[#allocation8 + $0x8] sm:$0xff]
    %v3038 = vld [vmem:[#allocation8 + $0x10] sm:$0xff]
    %v3039 = vld [vmem:[#allocation8 + $0x18] sm:$0xf]
    %v3040 = vld [vmem:[#allocation8 + $0x1c] sm:$0xff]
    %v3041 = vld [vmem:[#allocation8 + $0x24] sm:$0xff]
    %v3042 = vld [vmem:[#allocation8 + $0x2c] sm:$0xff]
    %v3043 = vld [vmem:[#allocation8 + $0x34] sm:$0xf]
    %v3044 = vld [vmem:[#allocation8 + $0x38] sm:$0xff]
    %v3045 = vld [vmem:[#allocation8 + $0x40] sm:$0xff]
    %v3046 = vld [vmem:[#allocation8 + $0x48] sm:$0xff]
    %v3047 = vld [vmem:[#allocation8 + $0x50] sm:$0xf]
    %v3048 = vld [vmem:[#allocation8 + $0x54] sm:$0xff]
    %v3049 = vld [vmem:[#allocation8 + $0x5c] sm:$0xff]
    %v3050 = vld [vmem:[#allocation8 + $0x64] sm:$0xff]
    %v3051 = vld [vmem:[#allocation8 + $0x6c] sm:$0xf]
    %v3052 = vld [vmem:[#allocation8 + $0x70] sm:$0xff]
    %v3053 = vld [vmem:[#allocation8 + $0x78] sm:$0xff]
    %v3054 = vld [vmem:[#allocation8 + $0x80] sm:$0xff]
    %v3055 = vld [vmem:[#allocation8 + $0x88] sm:$0xf]
    %v3056 = vld [vmem:[#allocation8 + $0x8c] sm:$0xff]
    %v3057 = vld [vmem:[#allocation8 + $0x94] sm:$0xff]
    %v3058 = vld [vmem:[#allocation8 + $0x9c] sm:$0xff]
    %v3059 = vld [vmem:[#allocation8 + $0xa4] sm:$0xf]
    %v3060 = vld [vmem:[#allocation8 + $0xa8] sm:$0xff]
    %v3061 = vld [vmem:[#allocation8 + $0xb0] sm:$0xff]
    %v3062 = vld [vmem:[#allocation8 + $0xb8] sm:$0xff]
    %v3063 = vld [vmem:[#allocation8 + $0xc0] sm:$0xf]
    %v3064 = vld [vmem:[#allocation8 + $0xc4] sm:$0xff]
    %v3065 = vld [vmem:[#allocation8 + $0xcc] sm:$0xff]
    %v3066 = vld [vmem:[#allocation8 + $0xd4] sm:$0xff]
    %v3067 = vld [vmem:[#allocation8 + $0xdc] sm:$0xf]
    %v3068 = vld [vmem:[#allocation8 + $0xe0] sm:$0xff]
    %v3069 = vld [vmem:[#allocation8 + $0xe8] sm:$0xff]
    %v3070 = vld [vmem:[#allocation8 + $0xf0] sm:$0xff]
    %v3071 = vld [vmem:[#allocation8 + $0xf8] sm:$0xf]
    %v3072 = vld [vmem:[#allocation8 + $0xfc] sm:$0xff]
    %v3073 = vld [vmem:[#allocation8 + $0x104] sm:$0xff]
    %v3074 = vld [vmem:[#allocation8 + $0x10c] sm:$0xff]
    %v3075 = vld [vmem:[#allocation8 + $0x114] sm:$0xf]
    %v3076 = vld [vmem:[#allocation8 + $0x118] sm:$0xff]
    %v3077 = vld [vmem:[#allocation8 + $0x120] sm:$0xff]
    %v3078 = vld [vmem:[#allocation8 + $0x128] sm:$0xff]
    %v3079 = vld [vmem:[#allocation8 + $0x130] sm:$0xf]
    %v3080 = vld [vmem:[#allocation8 + $0x134] sm:$0xff]
    %v3081 = vld [vmem:[#allocation8 + $0x13c] sm:$0xff]
    %v3082 = vld [vmem:[#allocation8 + $0x144] sm:$0xff]
    %v3083 = vld [vmem:[#allocation8 + $0x14c] sm:$0xf]
    %v3084 = vld [vmem:[#allocation8 + $0x150] sm:$0xff]
    %v3085 = vld [vmem:[#allocation8 + $0x158] sm:$0xff]
    %v3086 = vld [vmem:[#allocation8 + $0x160] sm:$0xff]
    %v3087 = vld [vmem:[#allocation8 + $0x168] sm:$0xf]
    %v3088 = vld [vmem:[#allocation8 + $0x16c] sm:$0xff]
    %v3089 = vld [vmem:[#allocation8 + $0x174] sm:$0xff]
    %v3090 = vld [vmem:[#allocation8 + $0x17c] sm:$0xff]
    %v3091 = vld [vmem:[#allocation8 + $0x184] sm:$0xf]
    %v3092 = vld [vmem:[#allocation8 + $0x188] sm:$0xff]
    %v3093 = vld [vmem:[#allocation8 + $0x190] sm:$0xff]
    %v3094 = vld [vmem:[#allocation8 + $0x198] sm:$0xff]
    %v3095 = vld [vmem:[#allocation8 + $0x1a0] sm:$0xf]
    %v3096 = vld [vmem:[#allocation8 + $0x1a4] sm:$0xff]
    %v3097 = vld [vmem:[#allocation8 + $0x1ac] sm:$0xff]
    %v3098 = vld [vmem:[#allocation8 + $0x1b4] sm:$0xff]
    %v3099 = vld [vmem:[#allocation8 + $0x1bc] sm:$0xf]
    %v3100 = vld [vmem:[#allocation8 + $0x1c0] sm:$0xff]
    %v3101 = vld [vmem:[#allocation8 + $0x1c8] sm:$0xff]
    %v3102 = vld [vmem:[#allocation8 + $0x1d0] sm:$0xff]
    %v3103 = vld [vmem:[#allocation8 + $0x1d8] sm:$0xf]
    %v3104 = vld [vmem:[#allocation8 + $0x1dc] sm:$0xff]
    %v3105 = vld [vmem:[#allocation8 + $0x1e4] sm:$0xff]
    %v3106 = vld [vmem:[#allocation8 + $0x1ec] sm:$0xff]
    %v3107 = vld [vmem:[#allocation8 + $0x1f4] sm:$0xf]
    %v3108 = vld [vmem:[#allocation8 + $0x1f8] sm:$0xff]
    %v3109 = vld [vmem:[#allocation8 + $0x200] sm:$0xff]
    %v3110 = vld [vmem:[#allocation8 + $0x208] sm:$0xff]
    %v3111 = vld [vmem:[#allocation8 + $0x210] sm:$0xf]
    %v3112 = vld [vmem:[#allocation8 + $0x214] sm:$0xff]
    %v3113 = vld [vmem:[#allocation8 + $0x21c] sm:$0xff]
    %v3114 = vld [vmem:[#allocation8 + $0x224] sm:$0xff]
    %v3115 = vld [vmem:[#allocation8 + $0x22c] sm:$0xf]
    %v3116 = vld [vmem:[#allocation8 + $0x230] sm:$0xff]
    %v3117 = vld [vmem:[#allocation8 + $0x238] sm:$0xff]
    %v3118 = vld [vmem:[#allocation8 + $0x240] sm:$0xff]
    %v3119 = vld [vmem:[#allocation8 + $0x248] sm:$0xf]
    %v3120 = vld [vmem:[#allocation8 + $0x24c] sm:$0xff]
    %v3121 = vld [vmem:[#allocation8 + $0x254] sm:$0xff]
    %v3122 = vld [vmem:[#allocation8 + $0x25c] sm:$0xff]
    %v3123 = vld [vmem:[#allocation8 + $0x264] sm:$0xf]
    %v3124 = vld [vmem:[#allocation8 + $0x268] sm:$0xff]
    %v3125 = vld [vmem:[#allocation8 + $0x270] sm:$0xff]
    %v3126 = vld [vmem:[#allocation8 + $0x278] sm:$0xff]
    %v3127 = vld [vmem:[#allocation8 + $0x280] sm:$0xf]
    %v3128 = vld [vmem:[#allocation8 + $0x284] sm:$0xff]
    %v3129 = vld [vmem:[#allocation8 + $0x28c] sm:$0xff]
    %v3130 = vld [vmem:[#allocation8 + $0x294] sm:$0xff]
    %v3131 = vld [vmem:[#allocation8 + $0x29c] sm:$0xf]
    %v3132 = vld [vmem:[#allocation8 + $0x2a0] sm:$0xff]
    %v3133 = vld [vmem:[#allocation8 + $0x2a8] sm:$0xff]
    %v3134 = vld [vmem:[#allocation8 + $0x2b0] sm:$0xff]
    %v3135 = vld [vmem:[#allocation8 + $0x2b8] sm:$0xf]
    %v3136 = vld [vmem:[#allocation8 + $0x2bc] sm:$0xff]
    %v3137 = vld [vmem:[#allocation8 + $0x2c4] sm:$0xff]
    %v3138 = vld [vmem:[#allocation8 + $0x2cc] sm:$0xff]
    %v3139 = vld [vmem:[#allocation8 + $0x2d4] sm:$0xf]
    %v3140 = vld [vmem:[#allocation8 + $0x2d8] sm:$0xff]
    %v3141 = vld [vmem:[#allocation8 + $0x2e0] sm:$0xff]
    %v3142 = vld [vmem:[#allocation8 + $0x2e8] sm:$0xff]
    %v3143 = vld [vmem:[#allocation8 + $0x2f0] sm:$0xf]
    %v3144 = vld [vmem:[#allocation8 + $0x2f4] sm:$0xff]
    %v3145 = vld [vmem:[#allocation8 + $0x2fc] sm:$0xff]
    %v3146 = vld [vmem:[#allocation8 + $0x304] sm:$0xff]
    %v3147 = vld [vmem:[#allocation8 + $0x30c] sm:$0xf]
    %v3148 = vld [vmem:[#allocation8 + $0x310] sm:$0xff]
    %v3149 = vld [vmem:[#allocation8 + $0x318] sm:$0xff]
    %v3150 = vld [vmem:[#allocation8 + $0x320] sm:$0xff]
    %v3151 = vld [vmem:[#allocation8 + $0x328] sm:$0xf]
    %v3152 = vld [vmem:[#allocation8 + $0x32c] sm:$0xff]
    %v3153 = vld [vmem:[#allocation8 + $0x334] sm:$0xff]
    %v3154 = vld [vmem:[#allocation8 + $0x33c] sm:$0xff]
    %v3155 = vld [vmem:[#allocation8 + $0x344] sm:$0xf]
    %v3156 = vld [vmem:[#allocation8 + $0x348] sm:$0xff]
    %v3157 = vld [vmem:[#allocation8 + $0x350] sm:$0xff]
    %v3158 = vld [vmem:[#allocation8 + $0x358] sm:$0xff]
    %v3159 = vld [vmem:[#allocation8 + $0x360] sm:$0xf]
    %v3160 = vld [vmem:[#allocation8 + $0x364] sm:$0xff]
    %v3161 = vld [vmem:[#allocation8 + $0x36c] sm:$0xff]
    %v3162 = vld [vmem:[#allocation8 + $0x374] sm:$0xff]
    %v3163 = vld [vmem:[#allocation8 + $0x37c] sm:$0xf]
    %v3164 = vld [vmem:[#allocation8 + $0x380] sm:$0xff]
    %v3165 = vld [vmem:[#allocation8 + $0x388] sm:$0xff]
    %v3166 = vld [vmem:[#allocation8 + $0x390] sm:$0xff]
    %v3167 = vld [vmem:[#allocation8 + $0x398] sm:$0xf]
    %v3168 = vld [vmem:[#allocation8 + $0x39c] sm:$0xff]
    %v3169 = vld [vmem:[#allocation8 + $0x3a4] sm:$0xff]
    %v3170 = vld [vmem:[#allocation8 + $0x3ac] sm:$0xff]
    %v3171 = vld [vmem:[#allocation8 + $0x3b4] sm:$0xf]
    %v3172 = vld [vmem:[#allocation8 + $0x3b8] sm:$0xff]
    %v3173 = vld [vmem:[#allocation8 + $0x3c0] sm:$0xff]
    %v3174 = vld [vmem:[#allocation8 + $0x3c8] sm:$0xff]
    %v3175 = vld [vmem:[#allocation8 + $0x3d0] sm:$0xf]
    %v3176 = vld [vmem:[#allocation8 + $0x3d4] sm:$0xff]
    %v3177 = vld [vmem:[#allocation8 + $0x3dc] sm:$0xff]
    %v3178 = vld [vmem:[#allocation8 + $0x3e4] sm:$0xff]
    %v3179 = vld [vmem:[#allocation8 + $0x3ec] sm:$0xf]
    %v3180 = vld [vmem:[#allocation8 + $0x3f0] sm:$0xff]
    %v3181 = vld [vmem:[#allocation8 + $0x3f8] sm:$0xff]
    %v3182 = vld [vmem:[#allocation8 + $0x400] sm:$0xff]
    %v3183 = vld [vmem:[#allocation8 + $0x408] sm:$0xf]
    %v3184 = vld [vmem:[#allocation8 + $0x40c] sm:$0xff]
    %v3185 = vld [vmem:[#allocation8 + $0x414] sm:$0xff]
    %v3186 = vld [vmem:[#allocation8 + $0x41c] sm:$0xff]
    %v3187 = vld [vmem:[#allocation8 + $0x424] sm:$0xf]
    %v3188 = vld [vmem:[#allocation8 + $0x428] sm:$0xff]
    %v3189 = vld [vmem:[#allocation8 + $0x430] sm:$0xff]
    %v3190 = vld [vmem:[#allocation8 + $0x438] sm:$0xff]
    %v3191 = vld [vmem:[#allocation8 + $0x440] sm:$0xf]
    %v3192 = vld [vmem:[#allocation8 + $0x444] sm:$0xff]
    %v3193 = vld [vmem:[#allocation8 + $0x44c] sm:$0xff]
    %v3194 = vld [vmem:[#allocation8 + $0x454] sm:$0xff]
    %v3195 = vld [vmem:[#allocation8 + $0x45c] sm:$0xf]
    %v3196 = vld [vmem:[#allocation8 + $0x460] sm:$0xff]
    %v3197 = vld [vmem:[#allocation8 + $0x468] sm:$0xff]
    %v3198 = vld [vmem:[#allocation8 + $0x470] sm:$0xff]
    %v3199 = vld [vmem:[#allocation8 + $0x478] sm:$0xf]
    %v3200 = vld [vmem:[#allocation8 + $0x47c] sm:$0xff]
    %v3201 = vld [vmem:[#allocation8 + $0x484] sm:$0xff]
    %v3202 = vld [vmem:[#allocation8 + $0x48c] sm:$0xff]
    %v3203 = vld [vmem:[#allocation8 + $0x494] sm:$0xf]
    %v3204 = vld [vmem:[#allocation8 + $0x498] sm:$0xff]
    %v3205 = vld [vmem:[#allocation8 + $0x4a0] sm:$0xff]
    %v3206 = vld [vmem:[#allocation8 + $0x4a8] sm:$0xff]
    %v3207 = vld [vmem:[#allocation8 + $0x4b0] sm:$0xf]
    %v3208 = vld [vmem:[#allocation8 + $0x4b4] sm:$0xff]
    %v3209 = vld [vmem:[#allocation8 + $0x4bc] sm:$0xff]
    %v3210 = vld [vmem:[#allocation8 + $0x4c4] sm:$0xff]
    %v3211 = vld [vmem:[#allocation8 + $0x4cc] sm:$0xf]
    %v3212 = vld [vmem:[#allocation8 + $0x4d0] sm:$0xff]
    %v3213 = vld [vmem:[#allocation8 + $0x4d8] sm:$0xff]
    %v3214 = vld [vmem:[#allocation8 + $0x4e0] sm:$0xff]
    %v3215 = vld [vmem:[#allocation8 + $0x4e8] sm:$0xf]
    %v3216 = vld [vmem:[#allocation8 + $0x4ec] sm:$0xff]
    %v3217 = vld [vmem:[#allocation8 + $0x4f4] sm:$0xff]
    %v3218 = vld [vmem:[#allocation8 + $0x4fc] sm:$0xff]
    %v3219 = vld [vmem:[#allocation8 + $0x504] sm:$0xf]
    %v3220 = vld [vmem:[#allocation8 + $0x508] sm:$0xff]
    %v3221 = vld [vmem:[#allocation8 + $0x510] sm:$0xff]
    %v3222 = vld [vmem:[#allocation8 + $0x518] sm:$0xff]
    %v3223 = vld [vmem:[#allocation8 + $0x520] sm:$0xf]
    %v3224 = vld [vmem:[#allocation8 + $0x524] sm:$0xff]
    %v3225 = vld [vmem:[#allocation8 + $0x52c] sm:$0xff]
    %v3226 = vld [vmem:[#allocation8 + $0x534] sm:$0xff]
    %v3227 = vld [vmem:[#allocation8 + $0x53c] sm:$0xf]
    %v3228 = vld [vmem:[#allocation8 + $0x540] sm:$0xff]
    %v3229 = vld [vmem:[#allocation8 + $0x548] sm:$0xff]
    %v3230 = vld [vmem:[#allocation8 + $0x550] sm:$0xff]
    %v3231 = vld [vmem:[#allocation8 + $0x558] sm:$0xf]
    %v3232 = vld [vmem:[#allocation8 + $0x55c] sm:$0xff]
    %v3233 = vld [vmem:[#allocation8 + $0x564] sm:$0xff]
    %v3234 = vld [vmem:[#allocation8 + $0x56c] sm:$0xff]
    %v3235 = vld [vmem:[#allocation8 + $0x574] sm:$0xf]
    %v3236 = vld [vmem:[#allocation8 + $0x578] sm:$0xff]
    %v3237 = vld [vmem:[#allocation8 + $0x580] sm:$0xff]
    %v3238 = vld [vmem:[#allocation8 + $0x588] sm:$0xff]
    %v3239 = vld [vmem:[#allocation8 + $0x590] sm:$0xf]
    %v3240 = vld [vmem:[#allocation8 + $0x594] sm:$0xff]
    %v3241 = vld [vmem:[#allocation8 + $0x59c] sm:$0xff]
    %v3242 = vld [vmem:[#allocation8 + $0x5a4] sm:$0xff]
    %v3243 = vld [vmem:[#allocation8 + $0x5ac] sm:$0xf]
    %v3244 = vld [vmem:[#allocation8 + $0x5b0] sm:$0xff]
    %v3245 = vld [vmem:[#allocation8 + $0x5b8] sm:$0xff]
    %v3246 = vld [vmem:[#allocation8 + $0x5c0] sm:$0xff]
    %v3247 = vld [vmem:[#allocation8 + $0x5c8] sm:$0xf]
    %v3248 = vld [vmem:[#allocation8 + $0x5cc] sm:$0xff]
    %v3249 = vld [vmem:[#allocation8 + $0x5d4] sm:$0xff]
    %v3250 = vld [vmem:[#allocation8 + $0x5dc] sm:$0xff]
    %v3251 = vld [vmem:[#allocation8 + $0x5e4] sm:$0xf]
    %v3252 = vld [vmem:[#allocation8 + $0x5e8] sm:$0xff]
    %v3253 = vld [vmem:[#allocation8 + $0x5f0] sm:$0xff]
    %v3254 = vld [vmem:[#allocation8 + $0x5f8] sm:$0xff]
    %v3255 = vld [vmem:[#allocation8 + $0x600] sm:$0xf]
    %v3256 = vld [vmem:[#allocation8 + $0x604] sm:$0xff]
    %v3257 = vld [vmem:[#allocation8 + $0x60c] sm:$0xff]
    %v3258 = vld [vmem:[#allocation8 + $0x614] sm:$0xff]
    %v3259 = vld [vmem:[#allocation8 + $0x61c] sm:$0xf]
    %v3260 = vld [vmem:[#allocation8 + $0x620] sm:$0xff]
    %v3261 = vld [vmem:[#allocation8 + $0x628] sm:$0xff]
    %v3262 = vld [vmem:[#allocation8 + $0x630] sm:$0xff]
    %v3263 = vld [vmem:[#allocation8 + $0x638] sm:$0xf]
    %v3264 = vld [vmem:[#allocation8 + $0x63c] sm:$0xff]
    %v3265 = vld [vmem:[#allocation8 + $0x644] sm:$0xff]
    %v3266 = vld [vmem:[#allocation8 + $0x64c] sm:$0xff]
    %v3267 = vld [vmem:[#allocation8 + $0x654] sm:$0xf]
    %v3268 = vld [vmem:[#allocation8 + $0x658] sm:$0xff]
    %v3269 = vld [vmem:[#allocation8 + $0x660] sm:$0xff]
    %v3270 = vld [vmem:[#allocation8 + $0x668] sm:$0xff]
    %v3271 = vld [vmem:[#allocation8 + $0x670] sm:$0xf]
    %v3272 = vld [vmem:[#allocation8 + $0x674] sm:$0xff]
    %v3273 = vld [vmem:[#allocation8 + $0x67c] sm:$0xff]
    %v3274 = vld [vmem:[#allocation8 + $0x684] sm:$0xff]
    %v3275 = vld [vmem:[#allocation8 + $0x68c] sm:$0xf]
    %v3276 = vld [vmem:[#allocation8 + $0x690] sm:$0xff]
    %v3277 = vld [vmem:[#allocation8 + $0x698] sm:$0xff]
    %v3278 = vld [vmem:[#allocation8 + $0x6a0] sm:$0xff]
    %v3279 = vld [vmem:[#allocation8 + $0x6a8] sm:$0xf]
    %v3280 = vld [vmem:[#allocation8 + $0x6ac] sm:$0xff]
    %v3281 = vld [vmem:[#allocation8 + $0x6b4] sm:$0xff]
    %v3282 = vld [vmem:[#allocation8 + $0x6bc] sm:$0xff]
    %v3283 = vld [vmem:[#allocation8 + $0x6c4] sm:$0xf]
    %v3284 = vld [vmem:[#allocation8 + $0x6c8] sm:$0xff]
    %v3285 = vld [vmem:[#allocation8 + $0x6d0] sm:$0xff]
    %v3286 = vld [vmem:[#allocation8 + $0x6d8] sm:$0xff]
    %v3287 = vld [vmem:[#allocation8 + $0x6e0] sm:$0xf]
    %v3288 = vld [vmem:[#allocation8 + $0x6e4] sm:$0xff]
    %v3289 = vld [vmem:[#allocation8 + $0x6ec] sm:$0xff]
    %v3290 = vld [vmem:[#allocation8 + $0x6f4] sm:$0xff]
    %v3291 = vld [vmem:[#allocation8 + $0x6fc] sm:$0xf]
    %v3292 = vld [vmem:[#allocation8 + $0x700] sm:$0xff]
    %v3293 = vld [vmem:[#allocation8 + $0x708] sm:$0xff]
    %v3294 = vld [vmem:[#allocation8 + $0x710] sm:$0xff]
    %v3295 = vld [vmem:[#allocation8 + $0x718] sm:$0xf]
    %v3296 = vld [vmem:[#allocation8 + $0x71c] sm:$0xff]
    %v3297 = vld [vmem:[#allocation8 + $0x724] sm:$0xff]
    %v3298 = vld [vmem:[#allocation8 + $0x72c] sm:$0xff]
    %v3299 = vld [vmem:[#allocation8 + $0x734] sm:$0xf]
    %v3300 = vld [vmem:[#allocation8 + $0x738] sm:$0xff]
    %v3301 = vld [vmem:[#allocation8 + $0x740] sm:$0xff]
    %v3302 = vld [vmem:[#allocation8 + $0x748] sm:$0xff]
    %v3303 = vld [vmem:[#allocation8 + $0x750] sm:$0xf]
    %v3304 = vld [vmem:[#allocation8 + $0x754] sm:$0xff]
    %v3305 = vld [vmem:[#allocation8 + $0x75c] sm:$0xff]
    %v3306 = vld [vmem:[#allocation8 + $0x764] sm:$0xff]
    %v3307 = vld [vmem:[#allocation8 + $0x76c] sm:$0xf]
    %v3308 = vld [vmem:[#allocation8 + $0x770] sm:$0xff]
    %v3309 = vld [vmem:[#allocation8 + $0x778] sm:$0xff]
    %v3310 = vld [vmem:[#allocation8 + $0x780] sm:$0xff]
    %v3311 = vld [vmem:[#allocation8 + $0x788] sm:$0xf]
    %v3312 = vld [vmem:[#allocation8 + $0x78c] sm:$0xff]
    %v3313 = vld [vmem:[#allocation8 + $0x794] sm:$0xff]
    %v3314 = vld [vmem:[#allocation8 + $0x79c] sm:$0xff]
    %v3315 = vld [vmem:[#allocation8 + $0x7a4] sm:$0xf]
    %v3316 = vld [vmem:[#allocation8 + $0x7a8] sm:$0xff]
    %v3317 = vld [vmem:[#allocation8 + $0x7b0] sm:$0xff]
    %v3318 = vld [vmem:[#allocation8 + $0x7b8] sm:$0xff]
    %v3319 = vld [vmem:[#allocation8 + $0x7c0] sm:$0xf]
    %v3320 = vld [vmem:[#allocation8 + $0x7c4] sm:$0xff]
    %v3321 = vld [vmem:[#allocation8 + $0x7cc] sm:$0xff]
    %v3322 = vld [vmem:[#allocation8 + $0x7d4] sm:$0xff]
    %v3323 = vld [vmem:[#allocation8 + $0x7dc] sm:$0xf]
    %v3324 = vld [vmem:[#allocation8 + $0x7e0] sm:$0xff]
    %v3325 = vld [vmem:[#allocation8 + $0x7e8] sm:$0xff]
    %v3326 = vld [vmem:[#allocation8 + $0x7f0] sm:$0xff]
    %v3327 = vld [vmem:[#allocation8 + $0x7f8] sm:$0xf]
    %v3328 = vld [vmem:[#allocation8 + $0x7fc] sm:$0xff]
    %v3329 = vld [vmem:[#allocation8 + $0x804] sm:$0xff]
    %v3330 = vld [vmem:[#allocation8 + $0x80c] sm:$0xff]
    %v3331 = vld [vmem:[#allocation8 + $0x814] sm:$0xf]
    %v3332 = vld [vmem:[#allocation8 + $0x818] sm:$0xff]
    %v3333 = vld [vmem:[#allocation8 + $0x820] sm:$0xff]
    %v3334 = vld [vmem:[#allocation8 + $0x828] sm:$0xff]
    %v3335 = vld [vmem:[#allocation8 + $0x830] sm:$0xf]
    %v3336 = vld [vmem:[#allocation8 + $0x834] sm:$0xff]
    %v3337 = vld [vmem:[#allocation8 + $0x83c] sm:$0xff]
    %v3338 = vld [vmem:[#allocation8 + $0x844] sm:$0xff]
    %v3339 = vld [vmem:[#allocation8 + $0x84c] sm:$0xf]
    %v3340 = vld [vmem:[#allocation8 + $0x850] sm:$0xff]
    %v3341 = vld [vmem:[#allocation8 + $0x858] sm:$0xff]
    %v3342 = vld [vmem:[#allocation8 + $0x860] sm:$0xff]
    %v3343 = vld [vmem:[#allocation8 + $0x868] sm:$0xf]
    %v3344 = vld [vmem:[#allocation8 + $0x86c] sm:$0xff]
    %v3345 = vld [vmem:[#allocation8 + $0x874] sm:$0xff]
    %v3346 = vld [vmem:[#allocation8 + $0x87c] sm:$0xff]
    %v3347 = vld [vmem:[#allocation8 + $0x884] sm:$0xf]
    %v3348 = vld [vmem:[#allocation8 + $0x888] sm:$0xff]
    %v3349 = vld [vmem:[#allocation8 + $0x890] sm:$0xff]
    %v3350 = vld [vmem:[#allocation8 + $0x898] sm:$0xff]
    %v3351 = vld [vmem:[#allocation8 + $0x8a0] sm:$0xf]
    %v3352 = vld [vmem:[#allocation8 + $0x8a4] sm:$0xff]
    %v3353 = vld [vmem:[#allocation8 + $0x8ac] sm:$0xff]
    %v3354 = vld [vmem:[#allocation8 + $0x8b4] sm:$0xff]
    %v3355 = vld [vmem:[#allocation8 + $0x8bc] sm:$0xf]
    %v3356 = vld [vmem:[#allocation8 + $0x8c0] sm:$0xff]
    %v3357 = vld [vmem:[#allocation8 + $0x8c8] sm:$0xff]
    %v3358 = vld [vmem:[#allocation8 + $0x8d0] sm:$0xff]
    %v3359 = vld [vmem:[#allocation8 + $0x8d8] sm:$0xf]
    %v3360 = vld [vmem:[#allocation8 + $0x8dc] sm:$0xff]
    %v3361 = vld [vmem:[#allocation8 + $0x8e4] sm:$0xff]
    %v3362 = vld [vmem:[#allocation8 + $0x8ec] sm:$0xff]
    %v3363 = vld [vmem:[#allocation8 + $0x8f4] sm:$0xf]
    %v3364 = vld [vmem:[#allocation8 + $0x8f8] sm:$0xff]
    %v3365 = vld [vmem:[#allocation8 + $0x900] sm:$0xff]
    %v3366 = vld [vmem:[#allocation8 + $0x908] sm:$0xff]
    %v3367 = vld [vmem:[#allocation8 + $0x910] sm:$0xf]
    %v3368 = vld [vmem:[#allocation8 + $0x914] sm:$0xff]
    %v3369 = vld [vmem:[#allocation8 + $0x91c] sm:$0xff]
    %v3370 = vld [vmem:[#allocation8 + $0x924] sm:$0xff]
    %v3371 = vld [vmem:[#allocation8 + $0x92c] sm:$0xf]
    %v3372 = vld [vmem:[#allocation8 + $0x930] sm:$0xff]
    %v3373 = vld [vmem:[#allocation8 + $0x938] sm:$0xff]
    %v3374 = vld [vmem:[#allocation8 + $0x940] sm:$0xff]
    %v3375 = vld [vmem:[#allocation8 + $0x948] sm:$0xf]
    %v3376 = vld [vmem:[#allocation8 + $0x94c] sm:$0xff]
    %v3377 = vld [vmem:[#allocation8 + $0x954] sm:$0xff]
    %v3378 = vld [vmem:[#allocation8 + $0x95c] sm:$0xff]
    %v3379 = vld [vmem:[#allocation8 + $0x964] sm:$0xf]
    %v3380 = vld [vmem:[#allocation8 + $0x968] sm:$0xff]
    %v3381 = vld [vmem:[#allocation8 + $0x970] sm:$0xff]
    %v3382 = vld [vmem:[#allocation8 + $0x978] sm:$0xff]
    %v3383 = vld [vmem:[#allocation8 + $0x980] sm:$0xf]
    %v3384 = vld [vmem:[#allocation8 + $0x984] sm:$0xff]
    %v3385 = vld [vmem:[#allocation8 + $0x98c] sm:$0xff]
    %v3386 = vld [vmem:[#allocation8 + $0x994] sm:$0xff]
    %v3387 = vld [vmem:[#allocation8 + $0x99c] sm:$0xf]
    %v3388 = vld [vmem:[#allocation8 + $0x9a0] sm:$0xff]
    %v3389 = vld [vmem:[#allocation8 + $0x9a8] sm:$0xff]
    %v3390 = vld [vmem:[#allocation8 + $0x9b0] sm:$0xff]
    %v3391 = vld [vmem:[#allocation8 + $0x9b8] sm:$0xf]
    %v3392 = vld [vmem:[#allocation8 + $0x9bc] sm:$0xff]
    %v3393 = vld [vmem:[#allocation8 + $0x9c4] sm:$0xff]
    %v3394 = vld [vmem:[#allocation8 + $0x9cc] sm:$0xff]
    %v3395 = vld [vmem:[#allocation8 + $0x9d4] sm:$0xf]
    %v3396 = vld [vmem:[#allocation8 + $0x9d8] sm:$0xff]
    %v3397 = vld [vmem:[#allocation8 + $0x9e0] sm:$0xff]
    %v3398 = vld [vmem:[#allocation8 + $0x9e8] sm:$0xff]
    %v3399 = vld [vmem:[#allocation8 + $0x9f0] sm:$0xf]
    %v3400 = vld [vmem:[#allocation8 + $0x9f4] sm:$0xff]
    %v3401 = vld [vmem:[#allocation8 + $0x9fc] sm:$0xff]
    %v3402 = vld [vmem:[#allocation8 + $0xa04] sm:$0xff]
    %v3403 = vld [vmem:[#allocation8 + $0xa0c] sm:$0xf]
    %v3404 = vld [vmem:[#allocation8 + $0xa10] sm:$0xff]
    %v3405 = vld [vmem:[#allocation8 + $0xa18] sm:$0xff]
    %v3406 = vld [vmem:[#allocation8 + $0xa20] sm:$0xff]
    %v3407 = vld [vmem:[#allocation8 + $0xa28] sm:$0xf]
    %v3408 = vld [vmem:[#allocation8 + $0xa2c] sm:$0xff]
    %v3409 = vld [vmem:[#allocation8 + $0xa34] sm:$0xff]
    %v3410 = vld [vmem:[#allocation8 + $0xa3c] sm:$0xff]
    %v3411 = vld [vmem:[#allocation8 + $0xa44] sm:$0xf]
    %v3412 = vld [vmem:[#allocation8 + $0xa48] sm:$0xff]
    %v3413 = vld [vmem:[#allocation8 + $0xa50] sm:$0xff]
    %v3414 = vld [vmem:[#allocation8 + $0xa58] sm:$0xff]
    %v3415 = vld [vmem:[#allocation8 + $0xa60] sm:$0xf]
    %v3416 = vld [vmem:[#allocation8 + $0xa64] sm:$0xff]
    %v3417 = vld [vmem:[#allocation8 + $0xa6c] sm:$0xff]
    %v3418 = vld [vmem:[#allocation8 + $0xa74] sm:$0xff]
    %v3419 = vld [vmem:[#allocation8 + $0xa7c] sm:$0xf]
    %v3420 = vld [vmem:[#allocation8 + $0xa80] sm:$0xff]
    %v3421 = vld [vmem:[#allocation8 + $0xa88] sm:$0xff]
    %v3422 = vld [vmem:[#allocation8 + $0xa90] sm:$0xff]
    %v3423 = vld [vmem:[#allocation8 + $0xa98] sm:$0xf]
    %v3424 = vld [vmem:[#allocation8 + $0xa9c] sm:$0xff]
    %v3425 = vld [vmem:[#allocation8 + $0xaa4] sm:$0xff]
    %v3426 = vld [vmem:[#allocation8 + $0xaac] sm:$0xff]
    %v3427 = vld [vmem:[#allocation8 + $0xab4] sm:$0xf]
    %v3428 = vld [vmem:[#allocation8 + $0xab8] sm:$0xff]
    %v3429 = vld [vmem:[#allocation8 + $0xac0] sm:$0xff]
    %v3430 = vld [vmem:[#allocation8 + $0xac8] sm:$0xff]
    %v3431 = vld [vmem:[#allocation8 + $0xad0] sm:$0xf]
    %v3432 = vld [vmem:[#allocation8 + $0xad4] sm:$0xff]
    %v3433 = vld [vmem:[#allocation8 + $0xadc] sm:$0xff]
    %v3434 = vld [vmem:[#allocation8 + $0xae4] sm:$0xff]
    %v3435 = vld [vmem:[#allocation8 + $0xaec] sm:$0xf]
    %v3436 = vld [vmem:[#allocation8 + $0xaf0] sm:$0xff]
    %v3437 = vld [vmem:[#allocation8 + $0xaf8] sm:$0xff]
    %v3438 = vld [vmem:[#allocation8 + $0xb00] sm:$0xff]
    %v3439 = vld [vmem:[#allocation8 + $0xb08] sm:$0xf]
    %v3440 = vld [vmem:[#allocation8 + $0xb0c] sm:$0xff]
    %v3441 = vld [vmem:[#allocation8 + $0xb14] sm:$0xff]
    %v3442 = vld [vmem:[#allocation8 + $0xb1c] sm:$0xff]
    %v3443 = vld [vmem:[#allocation8 + $0xb24] sm:$0xf]
    %v3444 = vld [vmem:[#allocation8 + $0xb28] sm:$0xff]
    %v3445 = vld [vmem:[#allocation8 + $0xb30] sm:$0xff]
    %v3446 = vld [vmem:[#allocation8 + $0xb38] sm:$0xff]
    %v3447 = vld [vmem:[#allocation8 + $0xb40] sm:$0xf]
    %v3448 = vld [vmem:[#allocation8 + $0xb44] sm:$0xff]
    %v3449 = vld [vmem:[#allocation8 + $0xb4c] sm:$0xff]
    %v3450 = vld [vmem:[#allocation8 + $0xb54] sm:$0xff]
    %v3451 = vld [vmem:[#allocation8 + $0xb5c] sm:$0xf]
    %v3452 = vld [vmem:[#allocation8 + $0xb60] sm:$0xff]
    %v3453 = vld [vmem:[#allocation8 + $0xb68] sm:$0xff]
    %v3454 = vld [vmem:[#allocation8 + $0xb70] sm:$0xff]
    %v3455 = vld [vmem:[#allocation8 + $0xb78] sm:$0xf]
    %v3456 = vld [vmem:[#allocation8 + $0xb7c] sm:$0xff]
    %v3457 = vld [vmem:[#allocation8 + $0xb84] sm:$0xff]
    %v3458 = vld [vmem:[#allocation8 + $0xb8c] sm:$0xff]
    %v3459 = vld [vmem:[#allocation8 + $0xb94] sm:$0xf]
    %v3460 = vld [vmem:[#allocation8 + $0xb98] sm:$0xff]
    %v3461 = vld [vmem:[#allocation8 + $0xba0] sm:$0xff]
    %v3462 = vld [vmem:[#allocation8 + $0xba8] sm:$0xff]
    %v3463 = vld [vmem:[#allocation8 + $0xbb0] sm:$0xf]
    %v3464 = vld [vmem:[#allocation8 + $0xbb4] sm:$0xff]
    %v3465 = vld [vmem:[#allocation8 + $0xbbc] sm:$0xff]
    %v3466 = vld [vmem:[#allocation8 + $0xbc4] sm:$0xff]
    %v3467 = vld [vmem:[#allocation8 + $0xbcc] sm:$0xf]
    %v3468 = vld [vmem:[#allocation8 + $0xbd0] sm:$0xff]
    %v3469 = vld [vmem:[#allocation8 + $0xbd8] sm:$0xff]
    %v3470 = vld [vmem:[#allocation8 + $0xbe0] sm:$0xff]
    %v3471 = vld [vmem:[#allocation8 + $0xbe8] sm:$0xf]
    %v3472 = vld [vmem:[#allocation8 + $0xbec] sm:$0xff]
    %v3473 = vld [vmem:[#allocation8 + $0xbf4] sm:$0xff]
    %v3474 = vld [vmem:[#allocation8 + $0xbfc] sm:$0xff]
    %v3475 = vld [vmem:[#allocation8 + $0xc04] sm:$0xf]
    %v3476 = vld [vmem:[#allocation8 + $0xc08] sm:$0xff]
    %v3477 = vld [vmem:[#allocation8 + $0xc10] sm:$0xff]
    %v3478 = vld [vmem:[#allocation8 + $0xc18] sm:$0xff]
    %v3479 = vld [vmem:[#allocation8 + $0xc20] sm:$0xf]
    %v3480 = vld [vmem:[#allocation8 + $0xc24] sm:$0xff]
    %v3481 = vld [vmem:[#allocation8 + $0xc2c] sm:$0xff]
    %v3482 = vld [vmem:[#allocation8 + $0xc34] sm:$0xff]
    %v3483 = vld [vmem:[#allocation8 + $0xc3c] sm:$0xf]
    %v3484 = vld [vmem:[#allocation10] sm:$0xff]
    %v3486 = vlaneseq
    %v3487 = vshrl.u32 %v3486, 7
    %v3488 = vsub.s32 0, %v3487
    %v3489 = vrot.slane %v3484, %v3488
    %v3490 = vlaneseq
    %v3491 = vshrl.u32 %v3490, 7
    %v3492 = vsub.s32 1, %v3491
    %v3493 = vrot.slane %v3484, %v3492
    %v3494 = vlaneseq
    %v3495 = vshrl.u32 %v3494, 7
    %v3496 = vsub.s32 2, %v3495
    %v3497 = vrot.slane %v3484, %v3496
    %v3498 = vlaneseq
    %v3499 = vshrl.u32 %v3498, 7
    %v3500 = vsub.s32 3, %v3499
    %v3501 = vrot.slane %v3484, %v3500
    %v3502 = vlaneseq
    %v3503 = vshrl.u32 %v3502, 7
    %v3504 = vsub.s32 4, %v3503
    %v3505 = vrot.slane %v3484, %v3504
    %v3506 = vlaneseq
    %v3507 = vshrl.u32 %v3506, 7
    %v3508 = vsub.s32 5, %v3507
    %v3509 = vrot.slane %v3484, %v3508
    %v3510 = vlaneseq
    %v3511 = vshrl.u32 %v3510, 7
    %v3512 = vsub.s32 6, %v3511
    %v3513 = vrot.slane %v3484, %v3512
    %v3969 = vunpack.c.l.b16 %v3036
    %v3970 = vunpack.c.h.b16 %v3036
    %v3971 = vunpack.c.l.b16 %v3037
    %v3972 = vunpack.c.h.b16 %v3037
    %v3973 = vunpack.c.l.b16 %v3038
    %v3974 = vunpack.c.h.b16 %v3038
    %v3975 = vunpack.c.l.b16 %v3039
    %v3976 = vunpack.c.l.b16 %v3040
    %v3977 = vunpack.c.h.b16 %v3040
    %v3978 = vunpack.c.l.b16 %v3041
    %v3979 = vunpack.c.h.b16 %v3041
    %v3980 = vunpack.c.l.b16 %v3042
    %v3981 = vunpack.c.h.b16 %v3042
    %v3982 = vunpack.c.l.b16 %v3043
    %v3983 = vunpack.c.l.b16 %v3044
    %v3984 = vunpack.c.h.b16 %v3044
    %v3985 = vunpack.c.l.b16 %v3045
    %v3986 = vunpack.c.h.b16 %v3045
    %v3987 = vunpack.c.l.b16 %v3046
    %v3988 = vunpack.c.h.b16 %v3046
    %v3989 = vunpack.c.l.b16 %v3047
    %v3990 = vunpack.c.l.b16 %v3048
    %v3991 = vunpack.c.h.b16 %v3048
    %v3992 = vunpack.c.l.b16 %v3049
    %v3993 = vunpack.c.h.b16 %v3049
    %v3994 = vunpack.c.l.b16 %v3050
    %v3995 = vunpack.c.h.b16 %v3050
    %v3996 = vunpack.c.l.b16 %v3051
    %v3997 = vunpack.c.l.b16 %v3052
    %v3998 = vunpack.c.h.b16 %v3052
    %v3999 = vunpack.c.l.b16 %v3053
    %v4000 = vunpack.c.h.b16 %v3053
    %v4001 = vunpack.c.l.b16 %v3054
    %v4002 = vunpack.c.h.b16 %v3054
    %v4003 = vunpack.c.l.b16 %v3055
    %v4004 = vunpack.c.l.b16 %v3056
    %v4005 = vunpack.c.h.b16 %v3056
    %v4006 = vunpack.c.l.b16 %v3057
    %v4007 = vunpack.c.h.b16 %v3057
    %v4008 = vunpack.c.l.b16 %v3058
    %v4009 = vunpack.c.h.b16 %v3058
    %v4010 = vunpack.c.l.b16 %v3059
    %v4011 = vunpack.c.l.b16 %v3060
    %v4012 = vunpack.c.h.b16 %v3060
    %v4013 = vunpack.c.l.b16 %v3061
    %v4014 = vunpack.c.h.b16 %v3061
    %v4015 = vunpack.c.l.b16 %v3062
    %v4016 = vunpack.c.h.b16 %v3062
    %v4017 = vunpack.c.l.b16 %v3063
    %v4018 = vunpack.c.l.b16 %v3064
    %v4019 = vunpack.c.h.b16 %v3064
    %v4020 = vunpack.c.l.b16 %v3065
    %v4021 = vunpack.c.h.b16 %v3065
    %v4022 = vunpack.c.l.b16 %v3066
    %v4023 = vunpack.c.h.b16 %v3066
    %v4024 = vunpack.c.l.b16 %v3067
    %v4025 = vunpack.c.l.b16 %v3068
    %v4026 = vunpack.c.h.b16 %v3068
    %v4027 = vunpack.c.l.b16 %v3069
    %v4028 = vunpack.c.h.b16 %v3069
    %v4029 = vunpack.c.l.b16 %v3070
    %v4030 = vunpack.c.h.b16 %v3070
    %v4031 = vunpack.c.l.b16 %v3071
    %v4032 = vunpack.c.l.b16 %v3072
    %v4033 = vunpack.c.h.b16 %v3072
    %v4034 = vunpack.c.l.b16 %v3073
    %v4035 = vunpack.c.h.b16 %v3073
    %v4036 = vunpack.c.l.b16 %v3074
    %v4037 = vunpack.c.h.b16 %v3074
    %v4038 = vunpack.c.l.b16 %v3075
    %v4039 = vunpack.c.l.b16 %v3076
    %v4040 = vunpack.c.h.b16 %v3076
    %v4041 = vunpack.c.l.b16 %v3077
    %v4042 = vunpack.c.h.b16 %v3077
    %v4043 = vunpack.c.l.b16 %v3078
    %v4044 = vunpack.c.h.b16 %v3078
    %v4045 = vunpack.c.l.b16 %v3079
    %v4046 = vunpack.c.l.b16 %v3080
    %v4047 = vunpack.c.h.b16 %v3080
    %v4048 = vunpack.c.l.b16 %v3081
    %v4049 = vunpack.c.h.b16 %v3081
    %v4050 = vunpack.c.l.b16 %v3082
    %v4051 = vunpack.c.h.b16 %v3082
    %v4052 = vunpack.c.l.b16 %v3083
    %v4053 = vunpack.c.l.b16 %v3084
    %v4054 = vunpack.c.h.b16 %v3084
    %v4055 = vunpack.c.l.b16 %v3085
    %v4056 = vunpack.c.h.b16 %v3085
    %v4057 = vunpack.c.l.b16 %v3086
    %v4058 = vunpack.c.h.b16 %v3086
    %v4059 = vunpack.c.l.b16 %v3087
    %v4060 = vunpack.c.l.b16 %v3088
    %v4061 = vunpack.c.h.b16 %v3088
    %v4062 = vunpack.c.l.b16 %v3089
    %v4063 = vunpack.c.h.b16 %v3089
    %v4064 = vunpack.c.l.b16 %v3090
    %v4065 = vunpack.c.h.b16 %v3090
    %v4066 = vunpack.c.l.b16 %v3091
    %v4067 = vunpack.c.l.b16 %v3092
    %v4068 = vunpack.c.h.b16 %v3092
    %v4069 = vunpack.c.l.b16 %v3093
    %v4070 = vunpack.c.h.b16 %v3093
    %v4071 = vunpack.c.l.b16 %v3094
    %v4072 = vunpack.c.h.b16 %v3094
    %v4073 = vunpack.c.l.b16 %v3095
    %v4074 = vunpack.c.l.b16 %v3096
    %v4075 = vunpack.c.h.b16 %v3096
    %v4076 = vunpack.c.l.b16 %v3097
    %v4077 = vunpack.c.h.b16 %v3097
    %v4078 = vunpack.c.l.b16 %v3098
    %v4079 = vunpack.c.h.b16 %v3098
    %v4080 = vunpack.c.l.b16 %v3099
    %v4081 = vunpack.c.l.b16 %v3100
    %v4082 = vunpack.c.h.b16 %v3100
    %v4083 = vunpack.c.l.b16 %v3101
    %v4084 = vunpack.c.h.b16 %v3101
    %v4085 = vunpack.c.l.b16 %v3102
    %v4086 = vunpack.c.h.b16 %v3102
    %v4087 = vunpack.c.l.b16 %v3103
    %v4088 = vunpack.c.l.b16 %v3104
    %v4089 = vunpack.c.h.b16 %v3104
    %v4090 = vunpack.c.l.b16 %v3105
    %v4091 = vunpack.c.h.b16 %v3105
    %v4092 = vunpack.c.l.b16 %v3106
    %v4093 = vunpack.c.h.b16 %v3106
    %v4094 = vunpack.c.l.b16 %v3107
    %v4095 = vunpack.c.l.b16 %v3108
    %v4096 = vunpack.c.h.b16 %v3108
    %v4097 = vunpack.c.l.b16 %v3109
    %v4098 = vunpack.c.h.b16 %v3109
    %v4099 = vunpack.c.l.b16 %v3110
    %v4100 = vunpack.c.h.b16 %v3110
    %v4101 = vunpack.c.l.b16 %v3111
    %v4102 = vunpack.c.l.b16 %v3112
    %v4103 = vunpack.c.h.b16 %v3112
    %v4104 = vunpack.c.l.b16 %v3113
    %v4105 = vunpack.c.h.b16 %v3113
    %v4106 = vunpack.c.l.b16 %v3114
    %v4107 = vunpack.c.h.b16 %v3114
    %v4108 = vunpack.c.l.b16 %v3115
    %v4109 = vunpack.c.l.b16 %v3116
    %v4110 = vunpack.c.h.b16 %v3116
    %v4111 = vunpack.c.l.b16 %v3117
    %v4112 = vunpack.c.h.b16 %v3117
    %v4113 = vunpack.c.l.b16 %v3118
    %v4114 = vunpack.c.h.b16 %v3118
    %v4115 = vunpack.c.l.b16 %v3119
    %v4116 = vunpack.c.l.b16 %v3120
    %v4117 = vunpack.c.h.b16 %v3120
    %v4118 = vunpack.c.l.b16 %v3121
    %v4119 = vunpack.c.h.b16 %v3121
    %v4120 = vunpack.c.l.b16 %v3122
    %v4121 = vunpack.c.h.b16 %v3122
    %v4122 = vunpack.c.l.b16 %v3123
    %v4123 = vunpack.c.l.b16 %v3124
    %v4124 = vunpack.c.h.b16 %v3124
    %v4125 = vunpack.c.l.b16 %v3125
    %v4126 = vunpack.c.h.b16 %v3125
    %v4127 = vunpack.c.l.b16 %v3126
    %v4128 = vunpack.c.h.b16 %v3126
    %v4129 = vunpack.c.l.b16 %v3127
    %v4130 = vunpack.c.l.b16 %v3128
    %v4131 = vunpack.c.h.b16 %v3128
    %v4132 = vunpack.c.l.b16 %v3129
    %v4133 = vunpack.c.h.b16 %v3129
    %v4134 = vunpack.c.l.b16 %v3130
    %v4135 = vunpack.c.h.b16 %v3130
    %v4136 = vunpack.c.l.b16 %v3131
    %v4137 = vunpack.c.l.b16 %v3132
    %v4138 = vunpack.c.h.b16 %v3132
    %v4139 = vunpack.c.l.b16 %v3133
    %v4140 = vunpack.c.h.b16 %v3133
    %v4141 = vunpack.c.l.b16 %v3134
    %v4142 = vunpack.c.h.b16 %v3134
    %v4143 = vunpack.c.l.b16 %v3135
    %v4144 = vunpack.c.l.b16 %v3136
    %v4145 = vunpack.c.h.b16 %v3136
    %v4146 = vunpack.c.l.b16 %v3137
    %v4147 = vunpack.c.h.b16 %v3137
    %v4148 = vunpack.c.l.b16 %v3138
    %v4149 = vunpack.c.h.b16 %v3138
    %v4150 = vunpack.c.l.b16 %v3139
    %v4151 = vunpack.c.l.b16 %v3140
    %v4152 = vunpack.c.h.b16 %v3140
    %v4153 = vunpack.c.l.b16 %v3141
    %v4154 = vunpack.c.h.b16 %v3141
    %v4155 = vunpack.c.l.b16 %v3142
    %v4156 = vunpack.c.h.b16 %v3142
    %v4157 = vunpack.c.l.b16 %v3143
    %v4158 = vunpack.c.l.b16 %v3144
    %v4159 = vunpack.c.h.b16 %v3144
    %v4160 = vunpack.c.l.b16 %v3145
    %v4161 = vunpack.c.h.b16 %v3145
    %v4162 = vunpack.c.l.b16 %v3146
    %v4163 = vunpack.c.h.b16 %v3146
    %v4164 = vunpack.c.l.b16 %v3147
    %v4165 = vunpack.c.l.b16 %v3148
    %v4166 = vunpack.c.h.b16 %v3148
    %v4167 = vunpack.c.l.b16 %v3149
    %v4168 = vunpack.c.h.b16 %v3149
    %v4169 = vunpack.c.l.b16 %v3150
    %v4170 = vunpack.c.h.b16 %v3150
    %v4171 = vunpack.c.l.b16 %v3151
    %v4172 = vunpack.c.l.b16 %v3152
    %v4173 = vunpack.c.h.b16 %v3152
    %v4174 = vunpack.c.l.b16 %v3153
    %v4175 = vunpack.c.h.b16 %v3153
    %v4176 = vunpack.c.l.b16 %v3154
    %v4177 = vunpack.c.h.b16 %v3154
    %v4178 = vunpack.c.l.b16 %v3155
    %v4179 = vunpack.c.l.b16 %v3156
    %v4180 = vunpack.c.h.b16 %v3156
    %v4181 = vunpack.c.l.b16 %v3157
    %v4182 = vunpack.c.h.b16 %v3157
    %v4183 = vunpack.c.l.b16 %v3158
    %v4184 = vunpack.c.h.b16 %v3158
    %v4185 = vunpack.c.l.b16 %v3159
    %v4186 = vunpack.c.l.b16 %v3160
    %v4187 = vunpack.c.h.b16 %v3160
    %v4188 = vunpack.c.l.b16 %v3161
    %v4189 = vunpack.c.h.b16 %v3161
    %v4190 = vunpack.c.l.b16 %v3162
    %v4191 = vunpack.c.h.b16 %v3162
    %v4192 = vunpack.c.l.b16 %v3163
    %v4193 = vunpack.c.l.b16 %v3164
    %v4194 = vunpack.c.h.b16 %v3164
    %v4195 = vunpack.c.l.b16 %v3165
    %v4196 = vunpack.c.h.b16 %v3165
    %v4197 = vunpack.c.l.b16 %v3166
    %v4198 = vunpack.c.h.b16 %v3166
    %v4199 = vunpack.c.l.b16 %v3167
    %v4200 = vunpack.c.l.b16 %v3168
    %v4201 = vunpack.c.h.b16 %v3168
    %v4202 = vunpack.c.l.b16 %v3169
    %v4203 = vunpack.c.h.b16 %v3169
    %v4204 = vunpack.c.l.b16 %v3170
    %v4205 = vunpack.c.h.b16 %v3170
    %v4206 = vunpack.c.l.b16 %v3171
    %v4207 = vunpack.c.l.b16 %v3172
    %v4208 = vunpack.c.h.b16 %v3172
    %v4209 = vunpack.c.l.b16 %v3173
    %v4210 = vunpack.c.h.b16 %v3173
    %v4211 = vunpack.c.l.b16 %v3174
    %v4212 = vunpack.c.h.b16 %v3174
    %v4213 = vunpack.c.l.b16 %v3175
    %v4214 = vunpack.c.l.b16 %v3176
    %v4215 = vunpack.c.h.b16 %v3176
    %v4216 = vunpack.c.l.b16 %v3177
    %v4217 = vunpack.c.h.b16 %v3177
    %v4218 = vunpack.c.l.b16 %v3178
    %v4219 = vunpack.c.h.b16 %v3178
    %v4220 = vunpack.c.l.b16 %v3179
    %v4221 = vunpack.c.l.b16 %v3180
    %v4222 = vunpack.c.h.b16 %v3180
    %v4223 = vunpack.c.l.b16 %v3181
    %v4224 = vunpack.c.h.b16 %v3181
    %v4225 = vunpack.c.l.b16 %v3182
    %v4226 = vunpack.c.h.b16 %v3182
    %v4227 = vunpack.c.l.b16 %v3183
    %v4228 = vunpack.c.l.b16 %v3184
    %v4229 = vunpack.c.h.b16 %v3184
    %v4230 = vunpack.c.l.b16 %v3185
    %v4231 = vunpack.c.h.b16 %v3185
    %v4232 = vunpack.c.l.b16 %v3186
    %v4233 = vunpack.c.h.b16 %v3186
    %v4234 = vunpack.c.l.b16 %v3187
    %v4235 = vunpack.c.l.b16 %v3188
    %v4236 = vunpack.c.h.b16 %v3188
    %v4237 = vunpack.c.l.b16 %v3189
    %v4238 = vunpack.c.h.b16 %v3189
    %v4239 = vunpack.c.l.b16 %v3190
    %v4240 = vunpack.c.h.b16 %v3190
    %v4241 = vunpack.c.l.b16 %v3191
    %v4242 = vunpack.c.l.b16 %v3192
    %v4243 = vunpack.c.h.b16 %v3192
    %v4244 = vunpack.c.l.b16 %v3193
    %v4245 = vunpack.c.h.b16 %v3193
    %v4246 = vunpack.c.l.b16 %v3194
    %v4247 = vunpack.c.h.b16 %v3194
    %v4248 = vunpack.c.l.b16 %v3195
    %v4249 = vunpack.c.l.b16 %v3196
    %v4250 = vunpack.c.h.b16 %v3196
    %v4251 = vunpack.c.l.b16 %v3197
    %v4252 = vunpack.c.h.b16 %v3197
    %v4253 = vunpack.c.l.b16 %v3198
    %v4254 = vunpack.c.h.b16 %v3198
    %v4255 = vunpack.c.l.b16 %v3199
    %v4256 = vunpack.c.l.b16 %v3200
    %v4257 = vunpack.c.h.b16 %v3200
    %v4258 = vunpack.c.l.b16 %v3201
    %v4259 = vunpack.c.h.b16 %v3201
    %v4260 = vunpack.c.l.b16 %v3202
    %v4261 = vunpack.c.h.b16 %v3202
    %v4262 = vunpack.c.l.b16 %v3203
    %v4263 = vunpack.c.l.b16 %v3204
    %v4264 = vunpack.c.h.b16 %v3204
    %v4265 = vunpack.c.l.b16 %v3205
    %v4266 = vunpack.c.h.b16 %v3205
    %v4267 = vunpack.c.l.b16 %v3206
    %v4268 = vunpack.c.h.b16 %v3206
    %v4269 = vunpack.c.l.b16 %v3207
    %v4270 = vunpack.c.l.b16 %v3208
    %v4271 = vunpack.c.h.b16 %v3208
    %v4272 = vunpack.c.l.b16 %v3209
    %v4273 = vunpack.c.h.b16 %v3209
    %v4274 = vunpack.c.l.b16 %v3210
    %v4275 = vunpack.c.h.b16 %v3210
    %v4276 = vunpack.c.l.b16 %v3211
    %v4277 = vunpack.c.l.b16 %v3212
    %v4278 = vunpack.c.h.b16 %v3212
    %v4279 = vunpack.c.l.b16 %v3213
    %v4280 = vunpack.c.h.b16 %v3213
    %v4281 = vunpack.c.l.b16 %v3214
    %v4282 = vunpack.c.h.b16 %v3214
    %v4283 = vunpack.c.l.b16 %v3215
    %v4284 = vunpack.c.l.b16 %v3216
    %v4285 = vunpack.c.h.b16 %v3216
    %v4286 = vunpack.c.l.b16 %v3217
    %v4287 = vunpack.c.h.b16 %v3217
    %v4288 = vunpack.c.l.b16 %v3218
    %v4289 = vunpack.c.h.b16 %v3218
    %v4290 = vunpack.c.l.b16 %v3219
    %v4291 = vunpack.c.l.b16 %v3220
    %v4292 = vunpack.c.h.b16 %v3220
    %v4293 = vunpack.c.l.b16 %v3221
    %v4294 = vunpack.c.h.b16 %v3221
    %v4295 = vunpack.c.l.b16 %v3222
    %v4296 = vunpack.c.h.b16 %v3222
    %v4297 = vunpack.c.l.b16 %v3223
    %v4298 = vunpack.c.l.b16 %v3224
    %v4299 = vunpack.c.h.b16 %v3224
    %v4300 = vunpack.c.l.b16 %v3225
    %v4301 = vunpack.c.h.b16 %v3225
    %v4302 = vunpack.c.l.b16 %v3226
    %v4303 = vunpack.c.h.b16 %v3226
    %v4304 = vunpack.c.l.b16 %v3227
    %v4305 = vunpack.c.l.b16 %v3228
    %v4306 = vunpack.c.h.b16 %v3228
    %v4307 = vunpack.c.l.b16 %v3229
    %v4308 = vunpack.c.h.b16 %v3229
    %v4309 = vunpack.c.l.b16 %v3230
    %v4310 = vunpack.c.h.b16 %v3230
    %v4311 = vunpack.c.l.b16 %v3231
    %v4312 = vunpack.c.l.b16 %v3232
    %v4313 = vunpack.c.h.b16 %v3232
    %v4314 = vunpack.c.l.b16 %v3233
    %v4315 = vunpack.c.h.b16 %v3233
    %v4316 = vunpack.c.l.b16 %v3234
    %v4317 = vunpack.c.h.b16 %v3234
    %v4318 = vunpack.c.l.b16 %v3235
    %v4319 = vunpack.c.l.b16 %v3236
    %v4320 = vunpack.c.h.b16 %v3236
    %v4321 = vunpack.c.l.b16 %v3237
    %v4322 = vunpack.c.h.b16 %v3237
    %v4323 = vunpack.c.l.b16 %v3238
    %v4324 = vunpack.c.h.b16 %v3238
    %v4325 = vunpack.c.l.b16 %v3239
    %v4326 = vunpack.c.l.b16 %v3240
    %v4327 = vunpack.c.h.b16 %v3240
    %v4328 = vunpack.c.l.b16 %v3241
    %v4329 = vunpack.c.h.b16 %v3241
    %v4330 = vunpack.c.l.b16 %v3242
    %v4331 = vunpack.c.h.b16 %v3242
    %v4332 = vunpack.c.l.b16 %v3243
    %v4333 = vunpack.c.l.b16 %v3244
    %v4334 = vunpack.c.h.b16 %v3244
    %v4335 = vunpack.c.l.b16 %v3245
    %v4336 = vunpack.c.h.b16 %v3245
    %v4337 = vunpack.c.l.b16 %v3246
    %v4338 = vunpack.c.h.b16 %v3246
    %v4339 = vunpack.c.l.b16 %v3247
    %v4340 = vunpack.c.l.b16 %v3248
    %v4341 = vunpack.c.h.b16 %v3248
    %v4342 = vunpack.c.l.b16 %v3249
    %v4343 = vunpack.c.h.b16 %v3249
    %v4344 = vunpack.c.l.b16 %v3250
    %v4345 = vunpack.c.h.b16 %v3250
    %v4346 = vunpack.c.l.b16 %v3251
    %v4347 = vunpack.c.l.b16 %v3252
    %v4348 = vunpack.c.h.b16 %v3252
    %v4349 = vunpack.c.l.b16 %v3253
    %v4350 = vunpack.c.h.b16 %v3253
    %v4351 = vunpack.c.l.b16 %v3254
    %v4352 = vunpack.c.h.b16 %v3254
    %v4353 = vunpack.c.l.b16 %v3255
    %v4354 = vunpack.c.l.b16 %v3256
    %v4355 = vunpack.c.h.b16 %v3256
    %v4356 = vunpack.c.l.b16 %v3257
    %v4357 = vunpack.c.h.b16 %v3257
    %v4358 = vunpack.c.l.b16 %v3258
    %v4359 = vunpack.c.h.b16 %v3258
    %v4360 = vunpack.c.l.b16 %v3259
    %v4361 = vunpack.c.l.b16 %v3260
    %v4362 = vunpack.c.h.b16 %v3260
    %v4363 = vunpack.c.l.b16 %v3261
    %v4364 = vunpack.c.h.b16 %v3261
    %v4365 = vunpack.c.l.b16 %v3262
    %v4366 = vunpack.c.h.b16 %v3262
    %v4367 = vunpack.c.l.b16 %v3263
    %v4368 = vunpack.c.l.b16 %v3264
    %v4369 = vunpack.c.h.b16 %v3264
    %v4370 = vunpack.c.l.b16 %v3265
    %v4371 = vunpack.c.h.b16 %v3265
    %v4372 = vunpack.c.l.b16 %v3266
    %v4373 = vunpack.c.h.b16 %v3266
    %v4374 = vunpack.c.l.b16 %v3267
    %v4375 = vunpack.c.l.b16 %v3268
    %v4376 = vunpack.c.h.b16 %v3268
    %v4377 = vunpack.c.l.b16 %v3269
    %v4378 = vunpack.c.h.b16 %v3269
    %v4379 = vunpack.c.l.b16 %v3270
    %v4380 = vunpack.c.h.b16 %v3270
    %v4381 = vunpack.c.l.b16 %v3271
    %v4382 = vunpack.c.l.b16 %v3272
    %v4383 = vunpack.c.h.b16 %v3272
    %v4384 = vunpack.c.l.b16 %v3273
    %v4385 = vunpack.c.h.b16 %v3273
    %v4386 = vunpack.c.l.b16 %v3274
    %v4387 = vunpack.c.h.b16 %v3274
    %v4388 = vunpack.c.l.b16 %v3275
    %v4389 = vunpack.c.l.b16 %v3276
    %v4390 = vunpack.c.h.b16 %v3276
    %v4391 = vunpack.c.l.b16 %v3277
    %v4392 = vunpack.c.h.b16 %v3277
    %v4393 = vunpack.c.l.b16 %v3278
    %v4394 = vunpack.c.h.b16 %v3278
    %v4395 = vunpack.c.l.b16 %v3279
    %v4396 = vunpack.c.l.b16 %v3280
    %v4397 = vunpack.c.h.b16 %v3280
    %v4398 = vunpack.c.l.b16 %v3281
    %v4399 = vunpack.c.h.b16 %v3281
    %v4400 = vunpack.c.l.b16 %v3282
    %v4401 = vunpack.c.h.b16 %v3282
    %v4402 = vunpack.c.l.b16 %v3283
    %v4403 = vunpack.c.l.b16 %v3284
    %v4404 = vunpack.c.h.b16 %v3284
    %v4405 = vunpack.c.l.b16 %v3285
    %v4406 = vunpack.c.h.b16 %v3285
    %v4407 = vunpack.c.l.b16 %v3286
    %v4408 = vunpack.c.h.b16 %v3286
    %v4409 = vunpack.c.l.b16 %v3287
    %v4410 = vunpack.c.l.b16 %v3288
    %v4411 = vunpack.c.h.b16 %v3288
    %v4412 = vunpack.c.l.b16 %v3289
    %v4413 = vunpack.c.h.b16 %v3289
    %v4414 = vunpack.c.l.b16 %v3290
    %v4415 = vunpack.c.h.b16 %v3290
    %v4416 = vunpack.c.l.b16 %v3291
    %v4417 = vunpack.c.l.b16 %v3292
    %v4418 = vunpack.c.h.b16 %v3292
    %v4419 = vunpack.c.l.b16 %v3293
    %v4420 = vunpack.c.h.b16 %v3293
    %v4421 = vunpack.c.l.b16 %v3294
    %v4422 = vunpack.c.h.b16 %v3294
    %v4423 = vunpack.c.l.b16 %v3295
    %v4424 = vunpack.c.l.b16 %v3296
    %v4425 = vunpack.c.h.b16 %v3296
    %v4426 = vunpack.c.l.b16 %v3297
    %v4427 = vunpack.c.h.b16 %v3297
    %v4428 = vunpack.c.l.b16 %v3298
    %v4429 = vunpack.c.h.b16 %v3298
    %v4430 = vunpack.c.l.b16 %v3299
    %v4431 = vunpack.c.l.b16 %v3300
    %v4432 = vunpack.c.h.b16 %v3300
    %v4433 = vunpack.c.l.b16 %v3301
    %v4434 = vunpack.c.h.b16 %v3301
    %v4435 = vunpack.c.l.b16 %v3302
    %v4436 = vunpack.c.h.b16 %v3302
    %v4437 = vunpack.c.l.b16 %v3303
    %v4438 = vunpack.c.l.b16 %v3304
    %v4439 = vunpack.c.h.b16 %v3304
    %v4440 = vunpack.c.l.b16 %v3305
    %v4441 = vunpack.c.h.b16 %v3305
    %v4442 = vunpack.c.l.b16 %v3306
    %v4443 = vunpack.c.h.b16 %v3306
    %v4444 = vunpack.c.l.b16 %v3307
    %v4445 = vunpack.c.l.b16 %v3308
    %v4446 = vunpack.c.h.b16 %v3308
    %v4447 = vunpack.c.l.b16 %v3309
    %v4448 = vunpack.c.h.b16 %v3309
    %v4449 = vunpack.c.l.b16 %v3310
    %v4450 = vunpack.c.h.b16 %v3310
    %v4451 = vunpack.c.l.b16 %v3311
    %v4452 = vunpack.c.l.b16 %v3312
    %v4453 = vunpack.c.h.b16 %v3312
    %v4454 = vunpack.c.l.b16 %v3313
    %v4455 = vunpack.c.h.b16 %v3313
    %v4456 = vunpack.c.l.b16 %v3314
    %v4457 = vunpack.c.h.b16 %v3314
    %v4458 = vunpack.c.l.b16 %v3315
    %v4459 = vunpack.c.l.b16 %v3316
    %v4460 = vunpack.c.h.b16 %v3316
    %v4461 = vunpack.c.l.b16 %v3317
    %v4462 = vunpack.c.h.b16 %v3317
    %v4463 = vunpack.c.l.b16 %v3318
    %v4464 = vunpack.c.h.b16 %v3318
    %v4465 = vunpack.c.l.b16 %v3319
    %v4466 = vunpack.c.l.b16 %v3320
    %v4467 = vunpack.c.h.b16 %v3320
    %v4468 = vunpack.c.l.b16 %v3321
    %v4469 = vunpack.c.h.b16 %v3321
    %v4470 = vunpack.c.l.b16 %v3322
    %v4471 = vunpack.c.h.b16 %v3322
    %v4472 = vunpack.c.l.b16 %v3323
    %v4473 = vunpack.c.l.b16 %v3324
    %v4474 = vunpack.c.h.b16 %v3324
    %v4475 = vunpack.c.l.b16 %v3325
    %v4476 = vunpack.c.h.b16 %v3325
    %v4477 = vunpack.c.l.b16 %v3326
    %v4478 = vunpack.c.h.b16 %v3326
    %v4479 = vunpack.c.l.b16 %v3327
    %v4480 = vunpack.c.l.b16 %v3328
    %v4481 = vunpack.c.h.b16 %v3328
    %v4482 = vunpack.c.l.b16 %v3329
    %v4483 = vunpack.c.h.b16 %v3329
    %v4484 = vunpack.c.l.b16 %v3330
    %v4485 = vunpack.c.h.b16 %v3330
    %v4486 = vunpack.c.l.b16 %v3331
    %v4487 = vunpack.c.l.b16 %v3332
    %v4488 = vunpack.c.h.b16 %v3332
    %v4489 = vunpack.c.l.b16 %v3333
    %v4490 = vunpack.c.h.b16 %v3333
    %v4491 = vunpack.c.l.b16 %v3334
    %v4492 = vunpack.c.h.b16 %v3334
    %v4493 = vunpack.c.l.b16 %v3335
    %v4494 = vunpack.c.l.b16 %v3336
    %v4495 = vunpack.c.h.b16 %v3336
    %v4496 = vunpack.c.l.b16 %v3337
    %v4497 = vunpack.c.h.b16 %v3337
    %v4498 = vunpack.c.l.b16 %v3338
    %v4499 = vunpack.c.h.b16 %v3338
    %v4500 = vunpack.c.l.b16 %v3339
    %v4501 = vunpack.c.l.b16 %v3340
    %v4502 = vunpack.c.h.b16 %v3340
    %v4503 = vunpack.c.l.b16 %v3341
    %v4504 = vunpack.c.h.b16 %v3341
    %v4505 = vunpack.c.l.b16 %v3342
    %v4506 = vunpack.c.h.b16 %v3342
    %v4507 = vunpack.c.l.b16 %v3343
    %v4508 = vunpack.c.l.b16 %v3344
    %v4509 = vunpack.c.h.b16 %v3344
    %v4510 = vunpack.c.l.b16 %v3345
    %v4511 = vunpack.c.h.b16 %v3345
    %v4512 = vunpack.c.l.b16 %v3346
    %v4513 = vunpack.c.h.b16 %v3346
    %v4514 = vunpack.c.l.b16 %v3347
    %v4515 = vunpack.c.l.b16 %v3348
    %v4516 = vunpack.c.h.b16 %v3348
    %v4517 = vunpack.c.l.b16 %v3349
    %v4518 = vunpack.c.h.b16 %v3349
    %v4519 = vunpack.c.l.b16 %v3350
    %v4520 = vunpack.c.h.b16 %v3350
    %v4521 = vunpack.c.l.b16 %v3351
    %v4522 = vunpack.c.l.b16 %v3352
    %v4523 = vunpack.c.h.b16 %v3352
    %v4524 = vunpack.c.l.b16 %v3353
    %v4525 = vunpack.c.h.b16 %v3353
    %v4526 = vunpack.c.l.b16 %v3354
    %v4527 = vunpack.c.h.b16 %v3354
    %v4528 = vunpack.c.l.b16 %v3355
    %v4529 = vunpack.c.l.b16 %v3356
    %v4530 = vunpack.c.h.b16 %v3356
    %v4531 = vunpack.c.l.b16 %v3357
    %v4532 = vunpack.c.h.b16 %v3357
    %v4533 = vunpack.c.l.b16 %v3358
    %v4534 = vunpack.c.h.b16 %v3358
    %v4535 = vunpack.c.l.b16 %v3359
    %v4536 = vunpack.c.l.b16 %v3360
    %v4537 = vunpack.c.h.b16 %v3360
    %v4538 = vunpack.c.l.b16 %v3361
    %v4539 = vunpack.c.h.b16 %v3361
    %v4540 = vunpack.c.l.b16 %v3362
    %v4541 = vunpack.c.h.b16 %v3362
    %v4542 = vunpack.c.l.b16 %v3363
    %v4543 = vunpack.c.l.b16 %v3364
    %v4544 = vunpack.c.h.b16 %v3364
    %v4545 = vunpack.c.l.b16 %v3365
    %v4546 = vunpack.c.h.b16 %v3365
    %v4547 = vunpack.c.l.b16 %v3366
    %v4548 = vunpack.c.h.b16 %v3366
    %v4549 = vunpack.c.l.b16 %v3367
    %v4550 = vunpack.c.l.b16 %v3368
    %v4551 = vunpack.c.h.b16 %v3368
    %v4552 = vunpack.c.l.b16 %v3369
    %v4553 = vunpack.c.h.b16 %v3369
    %v4554 = vunpack.c.l.b16 %v3370
    %v4555 = vunpack.c.h.b16 %v3370
    %v4556 = vunpack.c.l.b16 %v3371
    %v4557 = vunpack.c.l.b16 %v3372
    %v4558 = vunpack.c.h.b16 %v3372
    %v4559 = vunpack.c.l.b16 %v3373
    %v4560 = vunpack.c.h.b16 %v3373
    %v4561 = vunpack.c.l.b16 %v3374
    %v4562 = vunpack.c.h.b16 %v3374
    %v4563 = vunpack.c.l.b16 %v3375
    %v4564 = vunpack.c.l.b16 %v3376
    %v4565 = vunpack.c.h.b16 %v3376
    %v4566 = vunpack.c.l.b16 %v3377
    %v4567 = vunpack.c.h.b16 %v3377
    %v4568 = vunpack.c.l.b16 %v3378
    %v4569 = vunpack.c.h.b16 %v3378
    %v4570 = vunpack.c.l.b16 %v3379
    %v4571 = vunpack.c.l.b16 %v3380
    %v4572 = vunpack.c.h.b16 %v3380
    %v4573 = vunpack.c.l.b16 %v3381
    %v4574 = vunpack.c.h.b16 %v3381
    %v4575 = vunpack.c.l.b16 %v3382
    %v4576 = vunpack.c.h.b16 %v3382
    %v4577 = vunpack.c.l.b16 %v3383
    %v4578 = vunpack.c.l.b16 %v3384
    %v4579 = vunpack.c.h.b16 %v3384
    %v4580 = vunpack.c.l.b16 %v3385
    %v4581 = vunpack.c.h.b16 %v3385
    %v4582 = vunpack.c.l.b16 %v3386
    %v4583 = vunpack.c.h.b16 %v3386
    %v4584 = vunpack.c.l.b16 %v3387
    %v4585 = vunpack.c.l.b16 %v3388
    %v4586 = vunpack.c.h.b16 %v3388
    %v4587 = vunpack.c.l.b16 %v3389
    %v4588 = vunpack.c.h.b16 %v3389
    %v4589 = vunpack.c.l.b16 %v3390
    %v4590 = vunpack.c.h.b16 %v3390
    %v4591 = vunpack.c.l.b16 %v3391
    %v4592 = vunpack.c.l.b16 %v3392
    %v4593 = vunpack.c.h.b16 %v3392
    %v4594 = vunpack.c.l.b16 %v3393
    %v4595 = vunpack.c.h.b16 %v3393
    %v4596 = vunpack.c.l.b16 %v3394
    %v4597 = vunpack.c.h.b16 %v3394
    %v4598 = vunpack.c.l.b16 %v3395
    %v4599 = vunpack.c.l.b16 %v3396
    %v4600 = vunpack.c.h.b16 %v3396
    %v4601 = vunpack.c.l.b16 %v3397
    %v4602 = vunpack.c.h.b16 %v3397
    %v4603 = vunpack.c.l.b16 %v3398
    %v4604 = vunpack.c.h.b16 %v3398
    %v4605 = vunpack.c.l.b16 %v3399
    %v4606 = vunpack.c.l.b16 %v3400
    %v4607 = vunpack.c.h.b16 %v3400
    %v4608 = vunpack.c.l.b16 %v3401
    %v4609 = vunpack.c.h.b16 %v3401
    %v4610 = vunpack.c.l.b16 %v3402
    %v4611 = vunpack.c.h.b16 %v3402
    %v4612 = vunpack.c.l.b16 %v3403
    %v4613 = vunpack.c.l.b16 %v3404
    %v4614 = vunpack.c.h.b16 %v3404
    %v4615 = vunpack.c.l.b16 %v3405
    %v4616 = vunpack.c.h.b16 %v3405
    %v4617 = vunpack.c.l.b16 %v3406
    %v4618 = vunpack.c.h.b16 %v3406
    %v4619 = vunpack.c.l.b16 %v3407
    %v4620 = vunpack.c.l.b16 %v3408
    %v4621 = vunpack.c.h.b16 %v3408
    %v4622 = vunpack.c.l.b16 %v3409
    %v4623 = vunpack.c.h.b16 %v3409
    %v4624 = vunpack.c.l.b16 %v3410
    %v4625 = vunpack.c.h.b16 %v3410
    %v4626 = vunpack.c.l.b16 %v3411
    %v4627 = vunpack.c.l.b16 %v3412
    %v4628 = vunpack.c.h.b16 %v3412
    %v4629 = vunpack.c.l.b16 %v3413
    %v4630 = vunpack.c.h.b16 %v3413
    %v4631 = vunpack.c.l.b16 %v3414
    %v4632 = vunpack.c.h.b16 %v3414
    %v4633 = vunpack.c.l.b16 %v3415
    %v4634 = vunpack.c.l.b16 %v3416
    %v4635 = vunpack.c.h.b16 %v3416
    %v4636 = vunpack.c.l.b16 %v3417
    %v4637 = vunpack.c.h.b16 %v3417
    %v4638 = vunpack.c.l.b16 %v3418
    %v4639 = vunpack.c.h.b16 %v3418
    %v4640 = vunpack.c.l.b16 %v3419
    %v4641 = vunpack.c.l.b16 %v3420
    %v4642 = vunpack.c.h.b16 %v3420
    %v4643 = vunpack.c.l.b16 %v3421
    %v4644 = vunpack.c.h.b16 %v3421
    %v4645 = vunpack.c.l.b16 %v3422
    %v4646 = vunpack.c.h.b16 %v3422
    %v4647 = vunpack.c.l.b16 %v3423
    %v4648 = vunpack.c.l.b16 %v3424
    %v4649 = vunpack.c.h.b16 %v3424
    %v4650 = vunpack.c.l.b16 %v3425
    %v4651 = vunpack.c.h.b16 %v3425
    %v4652 = vunpack.c.l.b16 %v3426
    %v4653 = vunpack.c.h.b16 %v3426
    %v4654 = vunpack.c.l.b16 %v3427
    %v4655 = vunpack.c.l.b16 %v3428
    %v4656 = vunpack.c.h.b16 %v3428
    %v4657 = vunpack.c.l.b16 %v3429
    %v4658 = vunpack.c.h.b16 %v3429
    %v4659 = vunpack.c.l.b16 %v3430
    %v4660 = vunpack.c.h.b16 %v3430
    %v4661 = vunpack.c.l.b16 %v3431
    %v4662 = vunpack.c.l.b16 %v3432
    %v4663 = vunpack.c.h.b16 %v3432
    %v4664 = vunpack.c.l.b16 %v3433
    %v4665 = vunpack.c.h.b16 %v3433
    %v4666 = vunpack.c.l.b16 %v3434
    %v4667 = vunpack.c.h.b16 %v3434
    %v4668 = vunpack.c.l.b16 %v3435
    %v4669 = vunpack.c.l.b16 %v3436
    %v4670 = vunpack.c.h.b16 %v3436
    %v4671 = vunpack.c.l.b16 %v3437
    %v4672 = vunpack.c.h.b16 %v3437
    %v4673 = vunpack.c.l.b16 %v3438
    %v4674 = vunpack.c.h.b16 %v3438
    %v4675 = vunpack.c.l.b16 %v3439
    %v4676 = vunpack.c.l.b16 %v3440
    %v4677 = vunpack.c.h.b16 %v3440
    %v4678 = vunpack.c.l.b16 %v3441
    %v4679 = vunpack.c.h.b16 %v3441
    %v4680 = vunpack.c.l.b16 %v3442
    %v4681 = vunpack.c.h.b16 %v3442
    %v4682 = vunpack.c.l.b16 %v3443
    %v4683 = vunpack.c.l.b16 %v3444
    %v4684 = vunpack.c.h.b16 %v3444
    %v4685 = vunpack.c.l.b16 %v3445
    %v4686 = vunpack.c.h.b16 %v3445
    %v4687 = vunpack.c.l.b16 %v3446
    %v4688 = vunpack.c.h.b16 %v3446
    %v4689 = vunpack.c.l.b16 %v3447
    %v4690 = vunpack.c.l.b16 %v3448
    %v4691 = vunpack.c.h.b16 %v3448
    %v4692 = vunpack.c.l.b16 %v3449
    %v4693 = vunpack.c.h.b16 %v3449
    %v4694 = vunpack.c.l.b16 %v3450
    %v4695 = vunpack.c.h.b16 %v3450
    %v4696 = vunpack.c.l.b16 %v3451
    %v4697 = vunpack.c.l.b16 %v3452
    %v4698 = vunpack.c.h.b16 %v3452
    %v4699 = vunpack.c.l.b16 %v3453
    %v4700 = vunpack.c.h.b16 %v3453
    %v4701 = vunpack.c.l.b16 %v3454
    %v4702 = vunpack.c.h.b16 %v3454
    %v4703 = vunpack.c.l.b16 %v3455
    %v4704 = vunpack.c.l.b16 %v3456
    %v4705 = vunpack.c.h.b16 %v3456
    %v4706 = vunpack.c.l.b16 %v3457
    %v4707 = vunpack.c.h.b16 %v3457
    %v4708 = vunpack.c.l.b16 %v3458
    %v4709 = vunpack.c.h.b16 %v3458
    %v4710 = vunpack.c.l.b16 %v3459
    %v4711 = vunpack.c.l.b16 %v3460
    %v4712 = vunpack.c.h.b16 %v3460
    %v4713 = vunpack.c.l.b16 %v3461
    %v4714 = vunpack.c.h.b16 %v3461
    %v4715 = vunpack.c.l.b16 %v3462
    %v4716 = vunpack.c.h.b16 %v3462
    %v4717 = vunpack.c.l.b16 %v3463
    %v4718 = vunpack.c.l.b16 %v3464
    %v4719 = vunpack.c.h.b16 %v3464
    %v4720 = vunpack.c.l.b16 %v3465
    %v4721 = vunpack.c.h.b16 %v3465
    %v4722 = vunpack.c.l.b16 %v3466
    %v4723 = vunpack.c.h.b16 %v3466
    %v4724 = vunpack.c.l.b16 %v3467
    %v4725 = vunpack.c.l.b16 %v3468
    %v4726 = vunpack.c.h.b16 %v3468
    %v4727 = vunpack.c.l.b16 %v3469
    %v4728 = vunpack.c.h.b16 %v3469
    %v4729 = vunpack.c.l.b16 %v3470
    %v4730 = vunpack.c.h.b16 %v3470
    %v4731 = vunpack.c.l.b16 %v3471
    %v4732 = vunpack.c.l.b16 %v3472
    %v4733 = vunpack.c.h.b16 %v3472
    %v4734 = vunpack.c.l.b16 %v3473
    %v4735 = vunpack.c.h.b16 %v3473
    %v4736 = vunpack.c.l.b16 %v3474
    %v4737 = vunpack.c.h.b16 %v3474
    %v4738 = vunpack.c.l.b16 %v3475
    %v4739 = vunpack.c.l.b16 %v3476
    %v4740 = vunpack.c.h.b16 %v3476
    %v4741 = vunpack.c.l.b16 %v3477
    %v4742 = vunpack.c.h.b16 %v3477
    %v4743 = vunpack.c.l.b16 %v3478
    %v4744 = vunpack.c.h.b16 %v3478
    %v4745 = vunpack.c.l.b16 %v3479
    %v4746 = vunpack.c.l.b16 %v3480
    %v4747 = vunpack.c.h.b16 %v3480
    %v4748 = vunpack.c.l.b16 %v3481
    %v4749 = vunpack.c.h.b16 %v3481
    %v4750 = vunpack.c.l.b16 %v3482
    %v4751 = vunpack.c.h.b16 %v3482
    %v4752 = vunpack.c.l.b16 %v3483
    %v4753 = vpack.c.b16 %v3976, %v3969
    %v4754 = vpack.c.b16 %v3977, %v3970
    %v4755 = vpack.c.b16 %v3978, %v3971
    %v4756 = vpack.c.b16 %v3979, %v3972
    %v4757 = vpack.c.b16 %v3980, %v3973
    %v4758 = vpack.c.b16 %v3981, %v3974
    %v4759 = vpack.c.b16 %v3982, %v3975
    %v4760 = vpack.c.b16 %v3990, %v3983
    %v4761 = vpack.c.b16 %v3991, %v3984
    %v4762 = vpack.c.b16 %v3992, %v3985
    %v4763 = vpack.c.b16 %v3993, %v3986
    %v4764 = vpack.c.b16 %v3994, %v3987
    %v4765 = vpack.c.b16 %v3995, %v3988
    %v4766 = vpack.c.b16 %v3996, %v3989
    %v4767 = vpack.c.b16 %v4004, %v3997
    %v4768 = vpack.c.b16 %v4005, %v3998
    %v4769 = vpack.c.b16 %v4006, %v3999
    %v4770 = vpack.c.b16 %v4007, %v4000
    %v4771 = vpack.c.b16 %v4008, %v4001
    %v4772 = vpack.c.b16 %v4009, %v4002
    %v4773 = vpack.c.b16 %v4010, %v4003
    %v4774 = vpack.c.b16 %v4018, %v4011
    %v4775 = vpack.c.b16 %v4019, %v4012
    %v4776 = vpack.c.b16 %v4020, %v4013
    %v4777 = vpack.c.b16 %v4021, %v4014
    %v4778 = vpack.c.b16 %v4022, %v4015
    %v4779 = vpack.c.b16 %v4023, %v4016
    %v4780 = vpack.c.b16 %v4024, %v4017
    %v4781 = vpack.c.b16 %v4032, %v4025
    %v4782 = vpack.c.b16 %v4033, %v4026
    %v4783 = vpack.c.b16 %v4034, %v4027
    %v4784 = vpack.c.b16 %v4035, %v4028
    %v4785 = vpack.c.b16 %v4036, %v4029
    %v4786 = vpack.c.b16 %v4037, %v4030
    %v4787 = vpack.c.b16 %v4038, %v4031
    %v4788 = vpack.c.b16 %v4046, %v4039
    %v4789 = vpack.c.b16 %v4047, %v4040
    %v4790 = vpack.c.b16 %v4048, %v4041
    %v4791 = vpack.c.b16 %v4049, %v4042
    %v4792 = vpack.c.b16 %v4050, %v4043
    %v4793 = vpack.c.b16 %v4051, %v4044
    %v4794 = vpack.c.b16 %v4052, %v4045
    %v4795 = vpack.c.b16 %v4060, %v4053
    %v4796 = vpack.c.b16 %v4061, %v4054
    %v4797 = vpack.c.b16 %v4062, %v4055
    %v4798 = vpack.c.b16 %v4063, %v4056
    %v4799 = vpack.c.b16 %v4064, %v4057
    %v4800 = vpack.c.b16 %v4065, %v4058
    %v4801 = vpack.c.b16 %v4066, %v4059
    %v4802 = vpack.c.b16 %v4074, %v4067
    %v4803 = vpack.c.b16 %v4075, %v4068
    %v4804 = vpack.c.b16 %v4076, %v4069
    %v4805 = vpack.c.b16 %v4077, %v4070
    %v4806 = vpack.c.b16 %v4078, %v4071
    %v4807 = vpack.c.b16 %v4079, %v4072
    %v4808 = vpack.c.b16 %v4080, %v4073
    %v4809 = vpack.c.b16 %v4088, %v4081
    %v4810 = vpack.c.b16 %v4089, %v4082
    %v4811 = vpack.c.b16 %v4090, %v4083
    %v4812 = vpack.c.b16 %v4091, %v4084
    %v4813 = vpack.c.b16 %v4092, %v4085
    %v4814 = vpack.c.b16 %v4093, %v4086
    %v4815 = vpack.c.b16 %v4094, %v4087
    %v4816 = vpack.c.b16 %v4102, %v4095
    %v4817 = vpack.c.b16 %v4103, %v4096
    %v4818 = vpack.c.b16 %v4104, %v4097
    %v4819 = vpack.c.b16 %v4105, %v4098
    %v4820 = vpack.c.b16 %v4106, %v4099
    %v4821 = vpack.c.b16 %v4107, %v4100
    %v4822 = vpack.c.b16 %v4108, %v4101
    %v4823 = vpack.c.b16 %v4116, %v4109
    %v4824 = vpack.c.b16 %v4117, %v4110
    %v4825 = vpack.c.b16 %v4118, %v4111
    %v4826 = vpack.c.b16 %v4119, %v4112
    %v4827 = vpack.c.b16 %v4120, %v4113
    %v4828 = vpack.c.b16 %v4121, %v4114
    %v4829 = vpack.c.b16 %v4122, %v4115
    %v4830 = vpack.c.b16 %v4130, %v4123
    %v4831 = vpack.c.b16 %v4131, %v4124
    %v4832 = vpack.c.b16 %v4132, %v4125
    %v4833 = vpack.c.b16 %v4133, %v4126
    %v4834 = vpack.c.b16 %v4134, %v4127
    %v4835 = vpack.c.b16 %v4135, %v4128
    %v4836 = vpack.c.b16 %v4136, %v4129
    %v4837 = vpack.c.b16 %v4144, %v4137
    %v4838 = vpack.c.b16 %v4145, %v4138
    %v4839 = vpack.c.b16 %v4146, %v4139
    %v4840 = vpack.c.b16 %v4147, %v4140
    %v4841 = vpack.c.b16 %v4148, %v4141
    %v4842 = vpack.c.b16 %v4149, %v4142
    %v4843 = vpack.c.b16 %v4150, %v4143
    %v4844 = vpack.c.b16 %v4158, %v4151
    %v4845 = vpack.c.b16 %v4159, %v4152
    %v4846 = vpack.c.b16 %v4160, %v4153
    %v4847 = vpack.c.b16 %v4161, %v4154
    %v4848 = vpack.c.b16 %v4162, %v4155
    %v4849 = vpack.c.b16 %v4163, %v4156
    %v4850 = vpack.c.b16 %v4164, %v4157
    %v4851 = vpack.c.b16 %v4172, %v4165
    %v4852 = vpack.c.b16 %v4173, %v4166
    %v4853 = vpack.c.b16 %v4174, %v4167
    %v4854 = vpack.c.b16 %v4175, %v4168
    %v4855 = vpack.c.b16 %v4176, %v4169
    %v4856 = vpack.c.b16 %v4177, %v4170
    %v4857 = vpack.c.b16 %v4178, %v4171
    %v4858 = vpack.c.b16 %v4186, %v4179
    %v4859 = vpack.c.b16 %v4187, %v4180
    %v4860 = vpack.c.b16 %v4188, %v4181
    %v4861 = vpack.c.b16 %v4189, %v4182
    %v4862 = vpack.c.b16 %v4190, %v4183
    %v4863 = vpack.c.b16 %v4191, %v4184
    %v4864 = vpack.c.b16 %v4192, %v4185
    %v4865 = vpack.c.b16 %v4200, %v4193
    %v4866 = vpack.c.b16 %v4201, %v4194
    %v4867 = vpack.c.b16 %v4202, %v4195
    %v4868 = vpack.c.b16 %v4203, %v4196
    %v4869 = vpack.c.b16 %v4204, %v4197
    %v4870 = vpack.c.b16 %v4205, %v4198
    %v4871 = vpack.c.b16 %v4206, %v4199
    %v4872 = vpack.c.b16 %v4214, %v4207
    %v4873 = vpack.c.b16 %v4215, %v4208
    %v4874 = vpack.c.b16 %v4216, %v4209
    %v4875 = vpack.c.b16 %v4217, %v4210
    %v4876 = vpack.c.b16 %v4218, %v4211
    %v4877 = vpack.c.b16 %v4219, %v4212
    %v4878 = vpack.c.b16 %v4220, %v4213
    %v4879 = vpack.c.b16 %v4228, %v4221
    %v4880 = vpack.c.b16 %v4229, %v4222
    %v4881 = vpack.c.b16 %v4230, %v4223
    %v4882 = vpack.c.b16 %v4231, %v4224
    %v4883 = vpack.c.b16 %v4232, %v4225
    %v4884 = vpack.c.b16 %v4233, %v4226
    %v4885 = vpack.c.b16 %v4234, %v4227
    %v4886 = vpack.c.b16 %v4242, %v4235
    %v4887 = vpack.c.b16 %v4243, %v4236
    %v4888 = vpack.c.b16 %v4244, %v4237
    %v4889 = vpack.c.b16 %v4245, %v4238
    %v4890 = vpack.c.b16 %v4246, %v4239
    %v4891 = vpack.c.b16 %v4247, %v4240
    %v4892 = vpack.c.b16 %v4248, %v4241
    %v4893 = vpack.c.b16 %v4256, %v4249
    %v4894 = vpack.c.b16 %v4257, %v4250
    %v4895 = vpack.c.b16 %v4258, %v4251
    %v4896 = vpack.c.b16 %v4259, %v4252
    %v4897 = vpack.c.b16 %v4260, %v4253
    %v4898 = vpack.c.b16 %v4261, %v4254
    %v4899 = vpack.c.b16 %v4262, %v4255
    %v4900 = vpack.c.b16 %v4270, %v4263
    %v4901 = vpack.c.b16 %v4271, %v4264
    %v4902 = vpack.c.b16 %v4272, %v4265
    %v4903 = vpack.c.b16 %v4273, %v4266
    %v4904 = vpack.c.b16 %v4274, %v4267
    %v4905 = vpack.c.b16 %v4275, %v4268
    %v4906 = vpack.c.b16 %v4276, %v4269
    %v4907 = vpack.c.b16 %v4284, %v4277
    %v4908 = vpack.c.b16 %v4285, %v4278
    %v4909 = vpack.c.b16 %v4286, %v4279
    %v4910 = vpack.c.b16 %v4287, %v4280
    %v4911 = vpack.c.b16 %v4288, %v4281
    %v4912 = vpack.c.b16 %v4289, %v4282
    %v4913 = vpack.c.b16 %v4290, %v4283
    %v4914 = vpack.c.b16 %v4298, %v4291
    %v4915 = vpack.c.b16 %v4299, %v4292
    %v4916 = vpack.c.b16 %v4300, %v4293
    %v4917 = vpack.c.b16 %v4301, %v4294
    %v4918 = vpack.c.b16 %v4302, %v4295
    %v4919 = vpack.c.b16 %v4303, %v4296
    %v4920 = vpack.c.b16 %v4304, %v4297
    %v4921 = vpack.c.b16 %v4312, %v4305
    %v4922 = vpack.c.b16 %v4313, %v4306
    %v4923 = vpack.c.b16 %v4314, %v4307
    %v4924 = vpack.c.b16 %v4315, %v4308
    %v4925 = vpack.c.b16 %v4316, %v4309
    %v4926 = vpack.c.b16 %v4317, %v4310
    %v4927 = vpack.c.b16 %v4318, %v4311
    %v4928 = vpack.c.b16 %v4326, %v4319
    %v4929 = vpack.c.b16 %v4327, %v4320
    %v4930 = vpack.c.b16 %v4328, %v4321
    %v4931 = vpack.c.b16 %v4329, %v4322
    %v4932 = vpack.c.b16 %v4330, %v4323
    %v4933 = vpack.c.b16 %v4331, %v4324
    %v4934 = vpack.c.b16 %v4332, %v4325
    %v4935 = vpack.c.b16 %v4340, %v4333
    %v4936 = vpack.c.b16 %v4341, %v4334
    %v4937 = vpack.c.b16 %v4342, %v4335
    %v4938 = vpack.c.b16 %v4343, %v4336
    %v4939 = vpack.c.b16 %v4344, %v4337
    %v4940 = vpack.c.b16 %v4345, %v4338
    %v4941 = vpack.c.b16 %v4346, %v4339
    %v4942 = vpack.c.b16 %v4354, %v4347
    %v4943 = vpack.c.b16 %v4355, %v4348
    %v4944 = vpack.c.b16 %v4356, %v4349
    %v4945 = vpack.c.b16 %v4357, %v4350
    %v4946 = vpack.c.b16 %v4358, %v4351
    %v4947 = vpack.c.b16 %v4359, %v4352
    %v4948 = vpack.c.b16 %v4360, %v4353
    %v4949 = vpack.c.b16 %v4368, %v4361
    %v4950 = vpack.c.b16 %v4369, %v4362
    %v4951 = vpack.c.b16 %v4370, %v4363
    %v4952 = vpack.c.b16 %v4371, %v4364
    %v4953 = vpack.c.b16 %v4372, %v4365
    %v4954 = vpack.c.b16 %v4373, %v4366
    %v4955 = vpack.c.b16 %v4374, %v4367
    %v4956 = vpack.c.b16 %v4382, %v4375
    %v4957 = vpack.c.b16 %v4383, %v4376
    %v4958 = vpack.c.b16 %v4384, %v4377
    %v4959 = vpack.c.b16 %v4385, %v4378
    %v4960 = vpack.c.b16 %v4386, %v4379
    %v4961 = vpack.c.b16 %v4387, %v4380
    %v4962 = vpack.c.b16 %v4388, %v4381
    %v4963 = vpack.c.b16 %v4396, %v4389
    %v4964 = vpack.c.b16 %v4397, %v4390
    %v4965 = vpack.c.b16 %v4398, %v4391
    %v4966 = vpack.c.b16 %v4399, %v4392
    %v4967 = vpack.c.b16 %v4400, %v4393
    %v4968 = vpack.c.b16 %v4401, %v4394
    %v4969 = vpack.c.b16 %v4402, %v4395
    %v4970 = vpack.c.b16 %v4410, %v4403
    %v4971 = vpack.c.b16 %v4411, %v4404
    %v4972 = vpack.c.b16 %v4412, %v4405
    %v4973 = vpack.c.b16 %v4413, %v4406
    %v4974 = vpack.c.b16 %v4414, %v4407
    %v4975 = vpack.c.b16 %v4415, %v4408
    %v4976 = vpack.c.b16 %v4416, %v4409
    %v4977 = vpack.c.b16 %v4424, %v4417
    %v4978 = vpack.c.b16 %v4425, %v4418
    %v4979 = vpack.c.b16 %v4426, %v4419
    %v4980 = vpack.c.b16 %v4427, %v4420
    %v4981 = vpack.c.b16 %v4428, %v4421
    %v4982 = vpack.c.b16 %v4429, %v4422
    %v4983 = vpack.c.b16 %v4430, %v4423
    %v4984 = vpack.c.b16 %v4438, %v4431
    %v4985 = vpack.c.b16 %v4439, %v4432
    %v4986 = vpack.c.b16 %v4440, %v4433
    %v4987 = vpack.c.b16 %v4441, %v4434
    %v4988 = vpack.c.b16 %v4442, %v4435
    %v4989 = vpack.c.b16 %v4443, %v4436
    %v4990 = vpack.c.b16 %v4444, %v4437
    %v4991 = vpack.c.b16 %v4452, %v4445
    %v4992 = vpack.c.b16 %v4453, %v4446
    %v4993 = vpack.c.b16 %v4454, %v4447
    %v4994 = vpack.c.b16 %v4455, %v4448
    %v4995 = vpack.c.b16 %v4456, %v4449
    %v4996 = vpack.c.b16 %v4457, %v4450
    %v4997 = vpack.c.b16 %v4458, %v4451
    %v4998 = vpack.c.b16 %v4466, %v4459
    %v4999 = vpack.c.b16 %v4467, %v4460
    %v5000 = vpack.c.b16 %v4468, %v4461
    %v5001 = vpack.c.b16 %v4469, %v4462
    %v5002 = vpack.c.b16 %v4470, %v4463
    %v5003 = vpack.c.b16 %v4471, %v4464
    %v5004 = vpack.c.b16 %v4472, %v4465
    %v5005 = vpack.c.b16 %v4480, %v4473
    %v5006 = vpack.c.b16 %v4481, %v4474
    %v5007 = vpack.c.b16 %v4482, %v4475
    %v5008 = vpack.c.b16 %v4483, %v4476
    %v5009 = vpack.c.b16 %v4484, %v4477
    %v5010 = vpack.c.b16 %v4485, %v4478
    %v5011 = vpack.c.b16 %v4486, %v4479
    %v5012 = vpack.c.b16 %v4494, %v4487
    %v5013 = vpack.c.b16 %v4495, %v4488
    %v5014 = vpack.c.b16 %v4496, %v4489
    %v5015 = vpack.c.b16 %v4497, %v4490
    %v5016 = vpack.c.b16 %v4498, %v4491
    %v5017 = vpack.c.b16 %v4499, %v4492
    %v5018 = vpack.c.b16 %v4500, %v4493
    %v5019 = vpack.c.b16 %v4508, %v4501
    %v5020 = vpack.c.b16 %v4509, %v4502
    %v5021 = vpack.c.b16 %v4510, %v4503
    %v5022 = vpack.c.b16 %v4511, %v4504
    %v5023 = vpack.c.b16 %v4512, %v4505
    %v5024 = vpack.c.b16 %v4513, %v4506
    %v5025 = vpack.c.b16 %v4514, %v4507
    %v5026 = vpack.c.b16 %v4522, %v4515
    %v5027 = vpack.c.b16 %v4523, %v4516
    %v5028 = vpack.c.b16 %v4524, %v4517
    %v5029 = vpack.c.b16 %v4525, %v4518
    %v5030 = vpack.c.b16 %v4526, %v4519
    %v5031 = vpack.c.b16 %v4527, %v4520
    %v5032 = vpack.c.b16 %v4528, %v4521
    %v5033 = vpack.c.b16 %v4536, %v4529
    %v5034 = vpack.c.b16 %v4537, %v4530
    %v5035 = vpack.c.b16 %v4538, %v4531
    %v5036 = vpack.c.b16 %v4539, %v4532
    %v5037 = vpack.c.b16 %v4540, %v4533
    %v5038 = vpack.c.b16 %v4541, %v4534
    %v5039 = vpack.c.b16 %v4542, %v4535
    %v5040 = vpack.c.b16 %v4550, %v4543
    %v5041 = vpack.c.b16 %v4551, %v4544
    %v5042 = vpack.c.b16 %v4552, %v4545
    %v5043 = vpack.c.b16 %v4553, %v4546
    %v5044 = vpack.c.b16 %v4554, %v4547
    %v5045 = vpack.c.b16 %v4555, %v4548
    %v5046 = vpack.c.b16 %v4556, %v4549
    %v5047 = vpack.c.b16 %v4564, %v4557
    %v5048 = vpack.c.b16 %v4565, %v4558
    %v5049 = vpack.c.b16 %v4566, %v4559
    %v5050 = vpack.c.b16 %v4567, %v4560
    %v5051 = vpack.c.b16 %v4568, %v4561
    %v5052 = vpack.c.b16 %v4569, %v4562
    %v5053 = vpack.c.b16 %v4570, %v4563
    %v5054 = vpack.c.b16 %v4578, %v4571
    %v5055 = vpack.c.b16 %v4579, %v4572
    %v5056 = vpack.c.b16 %v4580, %v4573
    %v5057 = vpack.c.b16 %v4581, %v4574
    %v5058 = vpack.c.b16 %v4582, %v4575
    %v5059 = vpack.c.b16 %v4583, %v4576
    %v5060 = vpack.c.b16 %v4584, %v4577
    %v5061 = vpack.c.b16 %v4592, %v4585
    %v5062 = vpack.c.b16 %v4593, %v4586
    %v5063 = vpack.c.b16 %v4594, %v4587
    %v5064 = vpack.c.b16 %v4595, %v4588
    %v5065 = vpack.c.b16 %v4596, %v4589
    %v5066 = vpack.c.b16 %v4597, %v4590
    %v5067 = vpack.c.b16 %v4598, %v4591
    %v5068 = vpack.c.b16 %v4606, %v4599
    %v5069 = vpack.c.b16 %v4607, %v4600
    %v5070 = vpack.c.b16 %v4608, %v4601
    %v5071 = vpack.c.b16 %v4609, %v4602
    %v5072 = vpack.c.b16 %v4610, %v4603
    %v5073 = vpack.c.b16 %v4611, %v4604
    %v5074 = vpack.c.b16 %v4612, %v4605
    %v5075 = vpack.c.b16 %v4620, %v4613
    %v5076 = vpack.c.b16 %v4621, %v4614
    %v5077 = vpack.c.b16 %v4622, %v4615
    %v5078 = vpack.c.b16 %v4623, %v4616
    %v5079 = vpack.c.b16 %v4624, %v4617
    %v5080 = vpack.c.b16 %v4625, %v4618
    %v5081 = vpack.c.b16 %v4626, %v4619
    %v5082 = vpack.c.b16 %v4634, %v4627
    %v5083 = vpack.c.b16 %v4635, %v4628
    %v5084 = vpack.c.b16 %v4636, %v4629
    %v5085 = vpack.c.b16 %v4637, %v4630
    %v5086 = vpack.c.b16 %v4638, %v4631
    %v5087 = vpack.c.b16 %v4639, %v4632
    %v5088 = vpack.c.b16 %v4640, %v4633
    %v5089 = vpack.c.b16 %v4648, %v4641
    %v5090 = vpack.c.b16 %v4649, %v4642
    %v5091 = vpack.c.b16 %v4650, %v4643
    %v5092 = vpack.c.b16 %v4651, %v4644
    %v5093 = vpack.c.b16 %v4652, %v4645
    %v5094 = vpack.c.b16 %v4653, %v4646
    %v5095 = vpack.c.b16 %v4654, %v4647
    %v5096 = vpack.c.b16 %v4662, %v4655
    %v5097 = vpack.c.b16 %v4663, %v4656
    %v5098 = vpack.c.b16 %v4664, %v4657
    %v5099 = vpack.c.b16 %v4665, %v4658
    %v5100 = vpack.c.b16 %v4666, %v4659
    %v5101 = vpack.c.b16 %v4667, %v4660
    %v5102 = vpack.c.b16 %v4668, %v4661
    %v5103 = vpack.c.b16 %v4676, %v4669
    %v5104 = vpack.c.b16 %v4677, %v4670
    %v5105 = vpack.c.b16 %v4678, %v4671
    %v5106 = vpack.c.b16 %v4679, %v4672
    %v5107 = vpack.c.b16 %v4680, %v4673
    %v5108 = vpack.c.b16 %v4681, %v4674
    %v5109 = vpack.c.b16 %v4682, %v4675
    %v5110 = vpack.c.b16 %v4690, %v4683
    %v5111 = vpack.c.b16 %v4691, %v4684
    %v5112 = vpack.c.b16 %v4692, %v4685
    %v5113 = vpack.c.b16 %v4693, %v4686
    %v5114 = vpack.c.b16 %v4694, %v4687
    %v5115 = vpack.c.b16 %v4695, %v4688
    %v5116 = vpack.c.b16 %v4696, %v4689
    %v5117 = vpack.c.b16 %v4704, %v4697
    %v5118 = vpack.c.b16 %v4705, %v4698
    %v5119 = vpack.c.b16 %v4706, %v4699
    %v5120 = vpack.c.b16 %v4707, %v4700
    %v5121 = vpack.c.b16 %v4708, %v4701
    %v5122 = vpack.c.b16 %v4709, %v4702
    %v5123 = vpack.c.b16 %v4710, %v4703
    %v5124 = vpack.c.b16 %v4718, %v4711
    %v5125 = vpack.c.b16 %v4719, %v4712
    %v5126 = vpack.c.b16 %v4720, %v4713
    %v5127 = vpack.c.b16 %v4721, %v4714
    %v5128 = vpack.c.b16 %v4722, %v4715
    %v5129 = vpack.c.b16 %v4723, %v4716
    %v5130 = vpack.c.b16 %v4724, %v4717
    %v5131 = vpack.c.b16 %v4732, %v4725
    %v5132 = vpack.c.b16 %v4733, %v4726
    %v5133 = vpack.c.b16 %v4734, %v4727
    %v5134 = vpack.c.b16 %v4735, %v4728
    %v5135 = vpack.c.b16 %v4736, %v4729
    %v5136 = vpack.c.b16 %v4737, %v4730
    %v5137 = vpack.c.b16 %v4738, %v4731
    %v5138 = vpack.c.b16 %v4746, %v4739
    %v5139 = vpack.c.b16 %v4747, %v4740
    %v5140 = vpack.c.b16 %v4748, %v4741
    %v5141 = vpack.c.b16 %v4749, %v4742
    %v5142 = vpack.c.b16 %v4750, %v4743
    %v5143 = vpack.c.b16 %v4751, %v4744
    %v5144 = vpack.c.b16 %v4752, %v4745
    %5537 = vmatprep.subr.bf16.mxu0 %v4803
    %5538 = vmatpush1.bf16.msra.mxu0 %v4802
    %5539 = vmatprep.subr.bf16.mxu0 %v4796
    %5540 = vmatpush1.bf16.msra.mxu0 %v4795
    %5541 = vmatprep.subr.bf16.mxu0 %v4789
    %5542 = vmatpush1.bf16.msra.mxu0 %v4788
    %5543 = vmatprep.subr.bf16.mxu0 %v4782
    %5544 = vmatpush1.bf16.msra.mxu0 %v4781
    %5545 = vmatprep.subr.bf16.mxu0 %v4775
    %5546 = vmatpush1.bf16.msra.mxu0 %v4774
    %5547 = vmatprep.subr.bf16.mxu0 %v4768
    %5548 = vmatpush1.bf16.msra.mxu0 %v4767
    %5549 = vmatprep.subr.bf16.mxu0 %v4761
    %5550 = vmatpush1.bf16.msra.mxu0 %v4760
    %5551 = vmatprep.subr.bf16.mxu0 %v4754
    %5552 = vmatpush1.bf16.msra.mxu0 %v4753
    %5553 = vmatprep.subr.bf16.mxu0 %v4859
    %5554 = vmatpush2.bf16.msra.mxu0 %v4858
    %5555 = vmatprep.subr.bf16.mxu0 %v4852
    %5556 = vmatpush2.bf16.msra.mxu0 %v4851
    %5557 = vmatprep.subr.bf16.mxu0 %v4845
    %5558 = vmatpush2.bf16.msra.mxu0 %v4844
    %5559 = vmatprep.subr.bf16.mxu0 %v4838
    %5560 = vmatpush2.bf16.msra.mxu0 %v4837
    %5561 = vmatprep.subr.bf16.mxu0 %v4831
    %5562 = vmatpush2.bf16.msra.mxu0 %v4830
    %5563 = vmatprep.subr.bf16.mxu0 %v4824
    %5564 = vmatpush2.bf16.msra.mxu0 %v4823
    %5565 = vmatprep.subr.bf16.mxu0 %v4817
    %5566 = vmatpush2.bf16.msra.mxu0 %v4816
    %5567 = vmatprep.subr.bf16.mxu0 %v4810
    %5568 = vmatpush2.bf16.msra.mxu0 %v4809
    %5569 = vmatprep.mubr.bf16.mxu0 %v3030
    %5570 = vmatmul.mubr.bf16.gmra.mxu0 %v3029
    %v5571 = vpop.f32.mrf.mxu0
    %v5572 = vadd.f32 %v3489, %v5571
    %v5573 = vpop.f32.mrf.mxu0
    %v5574 = vadd.f32 %v3493, %v5573
    %v5575 = vpop.f32.mrf.mxu0
    %v5576 = vadd.f32 %v3489, %v5575
    %v5577 = vpop.f32.mrf.mxu0
    %v5578 = vadd.f32 %v3493, %v5577
    %5579 = vdwg.mxu0
    %5580 = vmatprep.subr.bf16.mxu0 %v4915
    %5581 = vmatpush1.bf16.msra.mxu0 %v4914
    %5582 = vmatprep.subr.bf16.mxu0 %v4908
    %5583 = vmatpush1.bf16.msra.mxu0 %v4907
    %5584 = vmatprep.subr.bf16.mxu0 %v4901
    %5585 = vmatpush1.bf16.msra.mxu0 %v4900
    %5586 = vmatprep.subr.bf16.mxu0 %v4894
    %5587 = vmatpush1.bf16.msra.mxu0 %v4893
    %5588 = vmatprep.subr.bf16.mxu0 %v4887
    %5589 = vmatpush1.bf16.msra.mxu0 %v4886
    %5590 = vmatprep.subr.bf16.mxu0 %v4880
    %5591 = vmatpush1.bf16.msra.mxu0 %v4879
    %5592 = vmatprep.subr.bf16.mxu0 %v4873
    %5593 = vmatpush1.bf16.msra.mxu0 %v4872
    %5594 = vmatprep.subr.bf16.mxu0 %v4866
    %5595 = vmatpush1.bf16.msra.mxu0 %v4865
    %5596 = vmatprep.subr.bf16.mxu0 %v4971
    %5597 = vmatpush2.bf16.msra.mxu0 %v4970
    %5598 = vmatprep.subr.bf16.mxu0 %v4964
    %5599 = vmatpush2.bf16.msra.mxu0 %v4963
    %5600 = vmatprep.subr.bf16.mxu0 %v4957
    %5601 = vmatpush2.bf16.msra.mxu0 %v4956
    %5602 = vmatprep.subr.bf16.mxu0 %v4950
    %5603 = vmatpush2.bf16.msra.mxu0 %v4949
    %5604 = vmatprep.subr.bf16.mxu0 %v4943
    %5605 = vmatpush2.bf16.msra.mxu0 %v4942
    %5606 = vmatprep.subr.bf16.mxu0 %v4936
    %5607 = vmatpush2.bf16.msra.mxu0 %v4935
    %5608 = vmatprep.subr.bf16.mxu0 %v4929
    %5609 = vmatpush2.bf16.msra.mxu0 %v4928
    %5610 = vmatprep.subr.bf16.mxu0 %v4922
    %5611 = vmatpush2.bf16.msra.mxu0 %v4921
    %5612 = vmatprep.mubr.bf16.mxu0 %v3032
    %5613 = vmatmul.mubr.bf16.gmra.mxu0 %v3031
    %v5614 = vpop.f32.mrf.mxu0
    %v5615 = vadd.f32 %v5572, %v5614
    %v5616 = vpop.f32.mrf.mxu0
    %v5617 = vadd.f32 %v5574, %v5616
    %v5618 = vpop.f32.mrf.mxu0
    %v5619 = vadd.f32 %v5576, %v5618
    %v5620 = vpop.f32.mrf.mxu0
    %v5621 = vadd.f32 %v5578, %v5620
    %5622 = vdwg.mxu0
    %5623 = vmatprep.subr.bf16.mxu0 %v5027
    %5624 = vmatpush1.bf16.msra.mxu0 %v5026
    %5625 = vmatprep.subr.bf16.mxu0 %v5020
    %5626 = vmatpush1.bf16.msra.mxu0 %v5019
    %5627 = vmatprep.subr.bf16.mxu0 %v5013
    %5628 = vmatpush1.bf16.msra.mxu0 %v5012
    %5629 = vmatprep.subr.bf16.mxu0 %v5006
    %5630 = vmatpush1.bf16.msra.mxu0 %v5005
    %5631 = vmatprep.subr.bf16.mxu0 %v4999
    %5632 = vmatpush1.bf16.msra.mxu0 %v4998
    %5633 = vmatprep.subr.bf16.mxu0 %v4992
    %5634 = vmatpush1.bf16.msra.mxu0 %v4991
    %5635 = vmatprep.subr.bf16.mxu0 %v4985
    %5636 = vmatpush1.bf16.msra.mxu0 %v4984
    %5637 = vmatprep.subr.bf16.mxu0 %v4978
    %5638 = vmatpush1.bf16.msra.mxu0 %v4977
    %5639 = vmatprep.subr.bf16.mxu0 %v5083
    %5640 = vmatpush2.bf16.msra.mxu0 %v5082
    %5641 = vmatprep.subr.bf16.mxu0 %v5076
    %5642 = vmatpush2.bf16.msra.mxu0 %v5075
    %5643 = vmatprep.subr.bf16.mxu0 %v5069
    %5644 = vmatpush2.bf16.msra.mxu0 %v5068
    %5645 = vmatprep.subr.bf16.mxu0 %v5062
    %5646 = vmatpush2.bf16.msra.mxu0 %v5061
    %5647 = vmatprep.subr.bf16.mxu0 %v5055
    %5648 = vmatpush2.bf16.msra.mxu0 %v5054
    %5649 = vmatprep.subr.bf16.mxu0 %v5048
    %5650 = vmatpush2.bf16.msra.mxu0 %v5047
    %5651 = vmatprep.subr.bf16.mxu0 %v5041
    %5652 = vmatpush2.bf16.msra.mxu0 %v5040
    %5653 = vmatprep.subr.bf16.mxu0 %v5034
    %5654 = vmatpush2.bf16.msra.mxu0 %v5033
    %5655 = vmatprep.mubr.bf16.mxu0 %v3034
    %5656 = vmatmul.mubr.bf16.gmra.mxu0 %v3033
    %v5657 = vpop.f32.mrf.mxu0
    %v5658 = vadd.f32 %v5615, %v5657
    %v5659 = vpop.f32.mrf.mxu0
    %v5660 = vadd.f32 %v5617, %v5659
    %v5661 = vpop.f32.mrf.mxu0
    %v5662 = vadd.f32 %v5619, %v5661
    %v5663 = vpop.f32.mrf.mxu0
    %v5664 = vadd.f32 %v5621, %v5663
    %5665 = vdwg.mxu0
    %5666 = vmatprep.subr.bf16.mxu0 %v5139
    %5667 = vmatpush1.bf16.msra.mxu0 %v5138
    %5668 = vmatprep.subr.bf16.mxu0 %v5132
    %5669 = vmatpush1.bf16.msra.mxu0 %v5131
    %5670 = vmatprep.subr.bf16.mxu0 %v5125
    %5671 = vmatpush1.bf16.msra.mxu0 %v5124
    %5672 = vmatprep.subr.bf16.mxu0 %v5118
    %5673 = vmatpush1.bf16.msra.mxu0 %v5117
    %5674 = vmatprep.subr.bf16.mxu0 %v5111
    %5675 = vmatpush1.bf16.msra.mxu0 %v5110
    %5676 = vmatprep.subr.bf16.mxu0 %v5104
    %5677 = vmatpush1.bf16.msra.mxu0 %v5103
    %5678 = vmatprep.subr.bf16.mxu0 %v5097
    %5679 = vmatpush1.bf16.msra.mxu0 %v5096
    %5680 = vmatprep.subr.bf16.mxu0 %v5090
    %5681 = vmatpush1.bf16.msra.mxu0 %v5089
    %5682 = vmatprep.subr.bf16.mxu0 0
    %5683 = vmatpush2.bf16.msra.mxu0 0
    %5684 = vmatprep.subr.bf16.mxu0 0
    %5685 = vmatpush2.bf16.msra.mxu0 0
    %5686 = vmatprep.subr.bf16.mxu0 0
    %5687 = vmatpush2.bf16.msra.mxu0 0
    %5688 = vmatprep.subr.bf16.mxu0 0
    %5689 = vmatpush2.bf16.msra.mxu0 0
    %5690 = vmatprep.subr.bf16.mxu0 0
    %5691 = vmatpush2.bf16.msra.mxu0 0
    %5692 = vmatprep.subr.bf16.mxu0 0
    %5693 = vmatpush2.bf16.msra.mxu0 0
    %5694 = vmatprep.subr.bf16.mxu0 0
    %5695 = vmatpush2.bf16.msra.mxu0 0
    %5696 = vmatprep.subr.bf16.mxu0 0
    %5697 = vmatpush2.bf16.msra.mxu0 0
    %5698 = vmatprep.mubr.bf16.mxu0 0
    %5699 = vmatmul.mubr.bf16.gmra.mxu0 %v3035
    %v5700 = vpop.f32.mrf.mxu0
    %v5701 = vadd.f32 %v5658, %v5700
    %v5702 = vpop.f32.mrf.mxu0
    %v5703 = vadd.f32 %v5660, %v5702
    %v5704 = vpop.f32.mrf.mxu0
    %v5705 = vadd.f32 %v5662, %v5704
    %v5706 = vpop.f32.mrf.mxu0
    %v5707 = vadd.f32 %v5664, %v5706
    %5708 = vdwg.mxu0
    %5709 = vmatprep.subr.bf16.mxu0 %v4805
    %5710 = vmatpush1.bf16.msra.mxu0 %v4804
    %5711 = vmatprep.subr.bf16.mxu0 %v4798
    %5712 = vmatpush1.bf16.msra.mxu0 %v4797
    %5713 = vmatprep.subr.bf16.mxu0 %v4791
    %5714 = vmatpush1.bf16.msra.mxu0 %v4790
    %5715 = vmatprep.subr.bf16.mxu0 %v4784
    %5716 = vmatpush1.bf16.msra.mxu0 %v4783
    %5717 = vmatprep.subr.bf16.mxu0 %v4777
    %5718 = vmatpush1.bf16.msra.mxu0 %v4776
    %5719 = vmatprep.subr.bf16.mxu0 %v4770
    %5720 = vmatpush1.bf16.msra.mxu0 %v4769
    %5721 = vmatprep.subr.bf16.mxu0 %v4763
    %5722 = vmatpush1.bf16.msra.mxu0 %v4762
    %5723 = vmatprep.subr.bf16.mxu0 %v4756
    %5724 = vmatpush1.bf16.msra.mxu0 %v4755
    %5725 = vmatprep.subr.bf16.mxu0 %v4861
    %5726 = vmatpush2.bf16.msra.mxu0 %v4860
    %5727 = vmatprep.subr.bf16.mxu0 %v4854
    %5728 = vmatpush2.bf16.msra.mxu0 %v4853
    %5729 = vmatprep.subr.bf16.mxu0 %v4847
    %5730 = vmatpush2.bf16.msra.mxu0 %v4846
    %5731 = vmatprep.subr.bf16.mxu0 %v4840
    %5732 = vmatpush2.bf16.msra.mxu0 %v4839
    %5733 = vmatprep.subr.bf16.mxu0 %v4833
    %5734 = vmatpush2.bf16.msra.mxu0 %v4832
    %5735 = vmatprep.subr.bf16.mxu0 %v4826
    %5736 = vmatpush2.bf16.msra.mxu0 %v4825
    %5737 = vmatprep.subr.bf16.mxu0 %v4819
    %5738 = vmatpush2.bf16.msra.mxu0 %v4818
    %5739 = vmatprep.subr.bf16.mxu0 %v4812
    %5740 = vmatpush2.bf16.msra.mxu0 %v4811
    %5741 = vmatprep.mubr.bf16.mxu0 %v3030
    %5742 = vmatmul.mubr.bf16.gmra.mxu0 %v3029
    %v5743 = vpop.f32.mrf.mxu0
    %v5744 = vadd.f32 %v3497, %v5743
    %v5745 = vpop.f32.mrf.mxu0
    %v5746 = vadd.f32 %v3501, %v5745
    %v5747 = vpop.f32.mrf.mxu0
    %v5748 = vadd.f32 %v3497, %v5747
    %v5749 = vpop.f32.mrf.mxu0
    %v5750 = vadd.f32 %v3501, %v5749
    %5751 = vdwg.mxu0
    %5752 = vmatprep.subr.bf16.mxu0 %v4917
    %5753 = vmatpush1.bf16.msra.mxu0 %v4916
    %5754 = vmatprep.subr.bf16.mxu0 %v4910
    %5755 = vmatpush1.bf16.msra.mxu0 %v4909
    %5756 = vmatprep.subr.bf16.mxu0 %v4903
    %5757 = vmatpush1.bf16.msra.mxu0 %v4902
    %5758 = vmatprep.subr.bf16.mxu0 %v4896
    %5759 = vmatpush1.bf16.msra.mxu0 %v4895
    %5760 = vmatprep.subr.bf16.mxu0 %v4889
    %5761 = vmatpush1.bf16.msra.mxu0 %v4888
    %5762 = vmatprep.subr.bf16.mxu0 %v4882
    %5763 = vmatpush1.bf16.msra.mxu0 %v4881
    %5764 = vmatprep.subr.bf16.mxu0 %v4875
    %5765 = vmatpush1.bf16.msra.mxu0 %v4874
    %5766 = vmatprep.subr.bf16.mxu0 %v4868
    %5767 = vmatpush1.bf16.msra.mxu0 %v4867
    %5768 = vmatprep.subr.bf16.mxu0 %v4973
    %5769 = vmatpush2.bf16.msra.mxu0 %v4972
    %5770 = vmatprep.subr.bf16.mxu0 %v4966
    %5771 = vmatpush2.bf16.msra.mxu0 %v4965
    %5772 = vmatprep.subr.bf16.mxu0 %v4959
    %5773 = vmatpush2.bf16.msra.mxu0 %v4958
    %5774 = vmatprep.subr.bf16.mxu0 %v4952
    %5775 = vmatpush2.bf16.msra.mxu0 %v4951
    %5776 = vmatprep.subr.bf16.mxu0 %v4945
    %5777 = vmatpush2.bf16.msra.mxu0 %v4944
    %5778 = vmatprep.subr.bf16.mxu0 %v4938
    %5779 = vmatpush2.bf16.msra.mxu0 %v4937
    %5780 = vmatprep.subr.bf16.mxu0 %v4931
    %5781 = vmatpush2.bf16.msra.mxu0 %v4930
    %5782 = vmatprep.subr.bf16.mxu0 %v4924
    %5783 = vmatpush2.bf16.msra.mxu0 %v4923
    %5784 = vmatprep.mubr.bf16.mxu0 %v3032
    %5785 = vmatmul.mubr.bf16.gmra.mxu0 %v3031
    %v5786 = vpop.f32.mrf.mxu0
    %v5787 = vadd.f32 %v5744, %v5786
    %v5788 = vpop.f32.mrf.mxu0
    %v5789 = vadd.f32 %v5746, %v5788
    %v5790 = vpop.f32.mrf.mxu0
    %v5791 = vadd.f32 %v5748, %v5790
    %v5792 = vpop.f32.mrf.mxu0
    %v5793 = vadd.f32 %v5750, %v5792
    %5794 = vdwg.mxu0
    %5795 = vmatprep.subr.bf16.mxu0 %v5029
    %5796 = vmatpush1.bf16.msra.mxu0 %v5028
    %5797 = vmatprep.subr.bf16.mxu0 %v5022
    %5798 = vmatpush1.bf16.msra.mxu0 %v5021
    %5799 = vmatprep.subr.bf16.mxu0 %v5015
    %5800 = vmatpush1.bf16.msra.mxu0 %v5014
    %5801 = vmatprep.subr.bf16.mxu0 %v5008
    %5802 = vmatpush1.bf16.msra.mxu0 %v5007
    %5803 = vmatprep.subr.bf16.mxu0 %v5001
    %5804 = vmatpush1.bf16.msra.mxu0 %v5000
    %5805 = vmatprep.subr.bf16.mxu0 %v4994
    %5806 = vmatpush1.bf16.msra.mxu0 %v4993
    %5807 = vmatprep.subr.bf16.mxu0 %v4987
    %5808 = vmatpush1.bf16.msra.mxu0 %v4986
    %5809 = vmatprep.subr.bf16.mxu0 %v4980
    %5810 = vmatpush1.bf16.msra.mxu0 %v4979
    %5811 = vmatprep.subr.bf16.mxu0 %v5085
    %5812 = vmatpush2.bf16.msra.mxu0 %v5084
    %5813 = vmatprep.subr.bf16.mxu0 %v5078
    %5814 = vmatpush2.bf16.msra.mxu0 %v5077
    %5815 = vmatprep.subr.bf16.mxu0 %v5071
    %5816 = vmatpush2.bf16.msra.mxu0 %v5070
    %5817 = vmatprep.subr.bf16.mxu0 %v5064
    %5818 = vmatpush2.bf16.msra.mxu0 %v5063
    %5819 = vmatprep.subr.bf16.mxu0 %v5057
    %5820 = vmatpush2.bf16.msra.mxu0 %v5056
    %5821 = vmatprep.subr.bf16.mxu0 %v5050
    %5822 = vmatpush2.bf16.msra.mxu0 %v5049
    %5823 = vmatprep.subr.bf16.mxu0 %v5043
    %5824 = vmatpush2.bf16.msra.mxu0 %v5042
    %5825 = vmatprep.subr.bf16.mxu0 %v5036
    %5826 = vmatpush2.bf16.msra.mxu0 %v5035
    %5827 = vmatprep.mubr.bf16.mxu0 %v3034
    %5828 = vmatmul.mubr.bf16.gmra.mxu0 %v3033
    %v5829 = vpop.f32.mrf.mxu0
    %v5830 = vadd.f32 %v5787, %v5829
    %v5831 = vpop.f32.mrf.mxu0
    %v5832 = vadd.f32 %v5789, %v5831
    %v5833 = vpop.f32.mrf.mxu0
    %v5834 = vadd.f32 %v5791, %v5833
    %v5835 = vpop.f32.mrf.mxu0
    %v5836 = vadd.f32 %v5793, %v5835
    %5837 = vdwg.mxu0
    %5838 = vmatprep.subr.bf16.mxu0 %v5141
    %5839 = vmatpush1.bf16.msra.mxu0 %v5140
    %5840 = vmatprep.subr.bf16.mxu0 %v5134
    %5841 = vmatpush1.bf16.msra.mxu0 %v5133
    %5842 = vmatprep.subr.bf16.mxu0 %v5127
    %5843 = vmatpush1.bf16.msra.mxu0 %v5126
    %5844 = vmatprep.subr.bf16.mxu0 %v5120
    %5845 = vmatpush1.bf16.msra.mxu0 %v5119
    %5846 = vmatprep.subr.bf16.mxu0 %v5113
    %5847 = vmatpush1.bf16.msra.mxu0 %v5112
    %5848 = vmatprep.subr.bf16.mxu0 %v5106
    %5849 = vmatpush1.bf16.msra.mxu0 %v5105
    %5850 = vmatprep.subr.bf16.mxu0 %v5099
    %5851 = vmatpush1.bf16.msra.mxu0 %v5098
    %5852 = vmatprep.subr.bf16.mxu0 %v5092
    %5853 = vmatpush1.bf16.msra.mxu0 %v5091
    %5854 = vmatprep.subr.bf16.mxu0 0
    %5855 = vmatpush2.bf16.msra.mxu0 0
    %5856 = vmatprep.subr.bf16.mxu0 0
    %5857 = vmatpush2.bf16.msra.mxu0 0
    %5858 = vmatprep.subr.bf16.mxu0 0
    %5859 = vmatpush2.bf16.msra.mxu0 0
    %5860 = vmatprep.subr.bf16.mxu0 0
    %5861 = vmatpush2.bf16.msra.mxu0 0
    %5862 = vmatprep.subr.bf16.mxu0 0
    %5863 = vmatpush2.bf16.msra.mxu0 0
    %5864 = vmatprep.subr.bf16.mxu0 0
    %5865 = vmatpush2.bf16.msra.mxu0 0
    %5866 = vmatprep.subr.bf16.mxu0 0
    %5867 = vmatpush2.bf16.msra.mxu0 0
    %5868 = vmatprep.subr.bf16.mxu0 0
    %5869 = vmatpush2.bf16.msra.mxu0 0
    %5870 = vmatprep.mubr.bf16.mxu0 0
    %5871 = vmatmul.mubr.bf16.gmra.mxu0 %v3035
    %v5872 = vpop.f32.mrf.mxu0
    %v5873 = vadd.f32 %v5830, %v5872
    %v5874 = vpop.f32.mrf.mxu0
    %v5875 = vadd.f32 %v5832, %v5874
    %v5876 = vpop.f32.mrf.mxu0
    %v5877 = vadd.f32 %v5834, %v5876
    %v5878 = vpop.f32.mrf.mxu0
    %v5879 = vadd.f32 %v5836, %v5878
    %5880 = vdwg.mxu0
    %5881 = vmatprep.subr.bf16.mxu0 %v4807
    %5882 = vmatpush1.bf16.msra.mxu0 %v4806
    %5883 = vmatprep.subr.bf16.mxu0 %v4800
    %5884 = vmatpush1.bf16.msra.mxu0 %v4799
    %5885 = vmatprep.subr.bf16.mxu0 %v4793
    %5886 = vmatpush1.bf16.msra.mxu0 %v4792
    %5887 = vmatprep.subr.bf16.mxu0 %v4786
    %5888 = vmatpush1.bf16.msra.mxu0 %v4785
    %5889 = vmatprep.subr.bf16.mxu0 %v4779
    %5890 = vmatpush1.bf16.msra.mxu0 %v4778
    %5891 = vmatprep.subr.bf16.mxu0 %v4772
    %5892 = vmatpush1.bf16.msra.mxu0 %v4771
    %5893 = vmatprep.subr.bf16.mxu0 %v4765
    %5894 = vmatpush1.bf16.msra.mxu0 %v4764
    %5895 = vmatprep.subr.bf16.mxu0 %v4758
    %5896 = vmatpush1.bf16.msra.mxu0 %v4757
    %5897 = vmatprep.subr.bf16.mxu0 %v4863
    %5898 = vmatpush2.bf16.msra.mxu0 %v4862
    %5899 = vmatprep.subr.bf16.mxu0 %v4856
    %5900 = vmatpush2.bf16.msra.mxu0 %v4855
    %5901 = vmatprep.subr.bf16.mxu0 %v4849
    %5902 = vmatpush2.bf16.msra.mxu0 %v4848
    %5903 = vmatprep.subr.bf16.mxu0 %v4842
    %5904 = vmatpush2.bf16.msra.mxu0 %v4841
    %5905 = vmatprep.subr.bf16.mxu0 %v4835
    %5906 = vmatpush2.bf16.msra.mxu0 %v4834
    %5907 = vmatprep.subr.bf16.mxu0 %v4828
    %5908 = vmatpush2.bf16.msra.mxu0 %v4827
    %5909 = vmatprep.subr.bf16.mxu0 %v4821
    %5910 = vmatpush2.bf16.msra.mxu0 %v4820
    %5911 = vmatprep.subr.bf16.mxu0 %v4814
    %5912 = vmatpush2.bf16.msra.mxu0 %v4813
    %5913 = vmatprep.mubr.bf16.mxu0 %v3030
    %5914 = vmatmul.mubr.bf16.gmra.mxu0 %v3029
    %v5915 = vpop.f32.mrf.mxu0
    %v5916 = vadd.f32 %v3505, %v5915
    %v5917 = vpop.f32.mrf.mxu0
    %v5918 = vadd.f32 %v3509, %v5917
    %v5919 = vpop.f32.mrf.mxu0
    %v5920 = vadd.f32 %v3505, %v5919
    %v5921 = vpop.f32.mrf.mxu0
    %v5922 = vadd.f32 %v3509, %v5921
    %5923 = vdwg.mxu0
    %5924 = vmatprep.subr.bf16.mxu0 %v4919
    %5925 = vmatpush1.bf16.msra.mxu0 %v4918
    %5926 = vmatprep.subr.bf16.mxu0 %v4912
    %5927 = vmatpush1.bf16.msra.mxu0 %v4911
    %5928 = vmatprep.subr.bf16.mxu0 %v4905
    %5929 = vmatpush1.bf16.msra.mxu0 %v4904
    %5930 = vmatprep.subr.bf16.mxu0 %v4898
    %5931 = vmatpush1.bf16.msra.mxu0 %v4897
    %5932 = vmatprep.subr.bf16.mxu0 %v4891
    %5933 = vmatpush1.bf16.msra.mxu0 %v4890
    %5934 = vmatprep.subr.bf16.mxu0 %v4884
    %5935 = vmatpush1.bf16.msra.mxu0 %v4883
    %5936 = vmatprep.subr.bf16.mxu0 %v4877
    %5937 = vmatpush1.bf16.msra.mxu0 %v4876
    %5938 = vmatprep.subr.bf16.mxu0 %v4870
    %5939 = vmatpush1.bf16.msra.mxu0 %v4869
    %5940 = vmatprep.subr.bf16.mxu0 %v4975
    %5941 = vmatpush2.bf16.msra.mxu0 %v4974
    %5942 = vmatprep.subr.bf16.mxu0 %v4968
    %5943 = vmatpush2.bf16.msra.mxu0 %v4967
    %5944 = vmatprep.subr.bf16.mxu0 %v4961
    %5945 = vmatpush2.bf16.msra.mxu0 %v4960
    %5946 = vmatprep.subr.bf16.mxu0 %v4954
    %5947 = vmatpush2.bf16.msra.mxu0 %v4953
    %5948 = vmatprep.subr.bf16.mxu0 %v4947
    %5949 = vmatpush2.bf16.msra.mxu0 %v4946
    %5950 = vmatprep.subr.bf16.mxu0 %v4940
    %5951 = vmatpush2.bf16.msra.mxu0 %v4939
    %5952 = vmatprep.subr.bf16.mxu0 %v4933
    %5953 = vmatpush2.bf16.msra.mxu0 %v4932
    %5954 = vmatprep.subr.bf16.mxu0 %v4926
    %5955 = vmatpush2.bf16.msra.mxu0 %v4925
    %5956 = vmatprep.mubr.bf16.mxu0 %v3032
    %5957 = vmatmul.mubr.bf16.gmra.mxu0 %v3031
    %v5958 = vpop.f32.mrf.mxu0
    %v5959 = vadd.f32 %v5916, %v5958
    %v5960 = vpop.f32.mrf.mxu0
    %v5961 = vadd.f32 %v5918, %v5960
    %v5962 = vpop.f32.mrf.mxu0
    %v5963 = vadd.f32 %v5920, %v5962
    %v5964 = vpop.f32.mrf.mxu0
    %v5965 = vadd.f32 %v5922, %v5964
    %5966 = vdwg.mxu0
    %5967 = vmatprep.subr.bf16.mxu0 %v5031
    %5968 = vmatpush1.bf16.msra.mxu0 %v5030
    %5969 = vmatprep.subr.bf16.mxu0 %v5024
    %5970 = vmatpush1.bf16.msra.mxu0 %v5023
    %5971 = vmatprep.subr.bf16.mxu0 %v5017
    %5972 = vmatpush1.bf16.msra.mxu0 %v5016
    %5973 = vmatprep.subr.bf16.mxu0 %v5010
    %5974 = vmatpush1.bf16.msra.mxu0 %v5009
    %5975 = vmatprep.subr.bf16.mxu0 %v5003
    %5976 = vmatpush1.bf16.msra.mxu0 %v5002
    %5977 = vmatprep.subr.bf16.mxu0 %v4996
    %5978 = vmatpush1.bf16.msra.mxu0 %v4995
    %5979 = vmatprep.subr.bf16.mxu0 %v4989
    %5980 = vmatpush1.bf16.msra.mxu0 %v4988
    %5981 = vmatprep.subr.bf16.mxu0 %v4982
    %5982 = vmatpush1.bf16.msra.mxu0 %v4981
    %5983 = vmatprep.subr.bf16.mxu0 %v5087
    %5984 = vmatpush2.bf16.msra.mxu0 %v5086
    %5985 = vmatprep.subr.bf16.mxu0 %v5080
    %5986 = vmatpush2.bf16.msra.mxu0 %v5079
    %5987 = vmatprep.subr.bf16.mxu0 %v5073
    %5988 = vmatpush2.bf16.msra.mxu0 %v5072
    %5989 = vmatprep.subr.bf16.mxu0 %v5066
    %5990 = vmatpush2.bf16.msra.mxu0 %v5065
    %5991 = vmatprep.subr.bf16.mxu0 %v5059
    %5992 = vmatpush2.bf16.msra.mxu0 %v5058
    %5993 = vmatprep.subr.bf16.mxu0 %v5052
    %5994 = vmatpush2.bf16.msra.mxu0 %v5051
    %5995 = vmatprep.subr.bf16.mxu0 %v5045
    %5996 = vmatpush2.bf16.msra.mxu0 %v5044
    %5997 = vmatprep.subr.bf16.mxu0 %v5038
    %5998 = vmatpush2.bf16.msra.mxu0 %v5037
    %5999 = vmatprep.mubr.bf16.mxu0 %v3034
    %6000 = vmatmul.mubr.bf16.gmra.mxu0 %v3033
    %v6001 = vpop.f32.mrf.mxu0
    %v6002 = vadd.f32 %v5959, %v6001
    %v6003 = vpop.f32.mrf.mxu0
    %v6004 = vadd.f32 %v5961, %v6003
    %v6005 = vpop.f32.mrf.mxu0
    %v6006 = vadd.f32 %v5963, %v6005
    %v6007 = vpop.f32.mrf.mxu0
    %v6008 = vadd.f32 %v5965, %v6007
    %6009 = vdwg.mxu0
    %6010 = vmatprep.subr.bf16.mxu0 %v5143
    %6011 = vmatpush1.bf16.msra.mxu0 %v5142
    %6012 = vmatprep.subr.bf16.mxu0 %v5136
    %6013 = vmatpush1.bf16.msra.mxu0 %v5135
    %6014 = vmatprep.subr.bf16.mxu0 %v5129
    %6015 = vmatpush1.bf16.msra.mxu0 %v5128
    %6016 = vmatprep.subr.bf16.mxu0 %v5122
    %6017 = vmatpush1.bf16.msra.mxu0 %v5121
    %6018 = vmatprep.subr.bf16.mxu0 %v5115
    %6019 = vmatpush1.bf16.msra.mxu0 %v5114
    %6020 = vmatprep.subr.bf16.mxu0 %v5108
    %6021 = vmatpush1.bf16.msra.mxu0 %v5107
    %6022 = vmatprep.subr.bf16.mxu0 %v5101
    %6023 = vmatpush1.bf16.msra.mxu0 %v5100
    %6024 = vmatprep.subr.bf16.mxu0 %v5094
    %6025 = vmatpush1.bf16.msra.mxu0 %v5093
    %6026 = vmatprep.subr.bf16.mxu0 0
    %6027 = vmatpush2.bf16.msra.mxu0 0
    %6028 = vmatprep.subr.bf16.mxu0 0
    %6029 = vmatpush2.bf16.msra.mxu0 0
    %6030 = vmatprep.subr.bf16.mxu0 0
    %6031 = vmatpush2.bf16.msra.mxu0 0
    %6032 = vmatprep.subr.bf16.mxu0 0
    %6033 = vmatpush2.bf16.msra.mxu0 0
    %6034 = vmatprep.subr.bf16.mxu0 0
    %6035 = vmatpush2.bf16.msra.mxu0 0
    %6036 = vmatprep.subr.bf16.mxu0 0
    %6037 = vmatpush2.bf16.msra.mxu0 0
    %6038 = vmatprep.subr.bf16.mxu0 0
    %6039 = vmatpush2.bf16.msra.mxu0 0
    %6040 = vmatprep.subr.bf16.mxu0 0
    %6041 = vmatpush2.bf16.msra.mxu0 0
    %6042 = vmatprep.mubr.bf16.mxu0 0
    %6043 = vmatmul.mubr.bf16.gmra.mxu0 %v3035
    %v6044 = vpop.f32.mrf.mxu0
    %v6045 = vadd.f32 %v6002, %v6044
    %v6046 = vpop.f32.mrf.mxu0
    %v6047 = vadd.f32 %v6004, %v6046
    %v6048 = vpop.f32.mrf.mxu0
    %v6049 = vadd.f32 %v6006, %v6048
    %v6050 = vpop.f32.mrf.mxu0
    %v6051 = vadd.f32 %v6008, %v6050
    %6052 = vdwg.mxu0
    %6053 = vmatprep.subr.bf16.mxu0 0
    %6054 = vmatpush1.bf16.msra.mxu0 %v4808
    %6055 = vmatprep.subr.bf16.mxu0 0
    %6056 = vmatpush1.bf16.msra.mxu0 %v4801
    %6057 = vmatprep.subr.bf16.mxu0 0
    %6058 = vmatpush1.bf16.msra.mxu0 %v4794
    %6059 = vmatprep.subr.bf16.mxu0 0
    %6060 = vmatpush1.bf16.msra.mxu0 %v4787
    %6061 = vmatprep.subr.bf16.mxu0 0
    %6062 = vmatpush1.bf16.msra.mxu0 %v4780
    %6063 = vmatprep.subr.bf16.mxu0 0
    %6064 = vmatpush1.bf16.msra.mxu0 %v4773
    %6065 = vmatprep.subr.bf16.mxu0 0
    %6066 = vmatpush1.bf16.msra.mxu0 %v4766
    %6067 = vmatprep.subr.bf16.mxu0 0
    %6068 = vmatpush1.bf16.msra.mxu0 %v4759
    %6069 = vmatprep.subr.bf16.mxu0 0
    %6070 = vmatpush2.bf16.msra.mxu0 %v4864
    %6071 = vmatprep.subr.bf16.mxu0 0
    %6072 = vmatpush2.bf16.msra.mxu0 %v4857
    %6073 = vmatprep.subr.bf16.mxu0 0
    %6074 = vmatpush2.bf16.msra.mxu0 %v4850
    %6075 = vmatprep.subr.bf16.mxu0 0
    %6076 = vmatpush2.bf16.msra.mxu0 %v4843
    %6077 = vmatprep.subr.bf16.mxu0 0
    %6078 = vmatpush2.bf16.msra.mxu0 %v4836
    %6079 = vmatprep.subr.bf16.mxu0 0
    %6080 = vmatpush2.bf16.msra.mxu0 %v4829
    %6081 = vmatprep.subr.bf16.mxu0 0
    %6082 = vmatpush2.bf16.msra.mxu0 %v4822
    %6083 = vmatprep.subr.bf16.mxu0 0
    %6084 = vmatpush2.bf16.msra.mxu0 %v4815
    %6085 = vmatprep.mubr.bf16.mxu0 %v3030
    %6086 = vmatmul.mubr.bf16.gmra.mxu0 %v3029
    %v6087 = vpop.f32.mrf.mxu0
    %v6088 = vadd.f32 %v3513, %v6087
    %v6089 = vpop.f32.mrf.mxu0
    %v6090 = vpop.f32.mrf.mxu0
    %v6091 = vadd.f32 %v3513, %v6090
    %v6092 = vpop.f32.mrf.mxu0
    %6093 = vdwg.mxu0
    %6094 = vmatprep.subr.bf16.mxu0 0
    %6095 = vmatpush1.bf16.msra.mxu0 %v4920
    %6096 = vmatprep.subr.bf16.mxu0 0
    %6097 = vmatpush1.bf16.msra.mxu0 %v4913
    %6098 = vmatprep.subr.bf16.mxu0 0
    %6099 = vmatpush1.bf16.msra.mxu0 %v4906
    %6100 = vmatprep.subr.bf16.mxu0 0
    %6101 = vmatpush1.bf16.msra.mxu0 %v4899
    %6102 = vmatprep.subr.bf16.mxu0 0
    %6103 = vmatpush1.bf16.msra.mxu0 %v4892
    %6104 = vmatprep.subr.bf16.mxu0 0
    %6105 = vmatpush1.bf16.msra.mxu0 %v4885
    %6106 = vmatprep.subr.bf16.mxu0 0
    %6107 = vmatpush1.bf16.msra.mxu0 %v4878
    %6108 = vmatprep.subr.bf16.mxu0 0
    %6109 = vmatpush1.bf16.msra.mxu0 %v4871
    %6110 = vmatprep.subr.bf16.mxu0 0
    %6111 = vmatpush2.bf16.msra.mxu0 %v4976
    %6112 = vmatprep.subr.bf16.mxu0 0
    %6113 = vmatpush2.bf16.msra.mxu0 %v4969
    %6114 = vmatprep.subr.bf16.mxu0 0
    %6115 = vmatpush2.bf16.msra.mxu0 %v4962
    %6116 = vmatprep.subr.bf16.mxu0 0
    %6117 = vmatpush2.bf16.msra.mxu0 %v4955
    %6118 = vmatprep.subr.bf16.mxu0 0
    %6119 = vmatpush2.bf16.msra.mxu0 %v4948
    %6120 = vmatprep.subr.bf16.mxu0 0
    %6121 = vmatpush2.bf16.msra.mxu0 %v4941
    %6122 = vmatprep.subr.bf16.mxu0 0
    %6123 = vmatpush2.bf16.msra.mxu0 %v4934
    %6124 = vmatprep.subr.bf16.mxu0 0
    %6125 = vmatpush2.bf16.msra.mxu0 %v4927
    %6126 = vmatprep.mubr.bf16.mxu0 %v3032
    %6127 = vmatmul.mubr.bf16.gmra.mxu0 %v3031
    %v6128 = vpop.f32.mrf.mxu0
    %v6129 = vadd.f32 %v6088, %v6128
    %v6130 = vpop.f32.mrf.mxu0
    %v6131 = vpop.f32.mrf.mxu0
    %v6132 = vadd.f32 %v6091, %v6131
    %v6133 = vpop.f32.mrf.mxu0
    %6134 = vdwg.mxu0
    %6135 = vmatprep.subr.bf16.mxu0 0
    %6136 = vmatpush1.bf16.msra.mxu0 %v5032
    %6137 = vmatprep.subr.bf16.mxu0 0
    %6138 = vmatpush1.bf16.msra.mxu0 %v5025
    %6139 = vmatprep.subr.bf16.mxu0 0
    %6140 = vmatpush1.bf16.msra.mxu0 %v5018
    %6141 = vmatprep.subr.bf16.mxu0 0
    %6142 = vmatpush1.bf16.msra.mxu0 %v5011
    %6143 = vmatprep.subr.bf16.mxu0 0
    %6144 = vmatpush1.bf16.msra.mxu0 %v5004
    %6145 = vmatprep.subr.bf16.mxu0 0
    %6146 = vmatpush1.bf16.msra.mxu0 %v4997
    %6147 = vmatprep.subr.bf16.mxu0 0
    %6148 = vmatpush1.bf16.msra.mxu0 %v4990
    %6149 = vmatprep.subr.bf16.mxu0 0
    %6150 = vmatpush1.bf16.msra.mxu0 %v4983
    %6151 = vmatprep.subr.bf16.mxu0 0
    %6152 = vmatpush2.bf16.msra.mxu0 %v5088
    %6153 = vmatprep.subr.bf16.mxu0 0
    %6154 = vmatpush2.bf16.msra.mxu0 %v5081
    %6155 = vmatprep.subr.bf16.mxu0 0
    %6156 = vmatpush2.bf16.msra.mxu0 %v5074
    %6157 = vmatprep.subr.bf16.mxu0 0
    %6158 = vmatpush2.bf16.msra.mxu0 %v5067
    %6159 = vmatprep.subr.bf16.mxu0 0
    %6160 = vmatpush2.bf16.msra.mxu0 %v5060
    %6161 = vmatprep.subr.bf16.mxu0 0
    %6162 = vmatpush2.bf16.msra.mxu0 %v5053
    %6163 = vmatprep.subr.bf16.mxu0 0
    %6164 = vmatpush2.bf16.msra.mxu0 %v5046
    %6165 = vmatprep.subr.bf16.mxu0 0
    %6166 = vmatpush2.bf16.msra.mxu0 %v5039
    %6167 = vmatprep.mubr.bf16.mxu0 %v3034
    %6168 = vmatmul.mubr.bf16.gmra.mxu0 %v3033
    %v6169 = vpop.f32.mrf.mxu0
    %v6170 = vadd.f32 %v6129, %v6169
    %v6171 = vpop.f32.mrf.mxu0
    %v6172 = vpop.f32.mrf.mxu0
    %v6173 = vadd.f32 %v6132, %v6172
    %v6174 = vpop.f32.mrf.mxu0
    %6175 = vdwg.mxu0
    %6176 = vmatprep.subr.bf16.mxu0 0
    %6177 = vmatpush1.bf16.msra.mxu0 %v5144
    %6178 = vmatprep.subr.bf16.mxu0 0
    %6179 = vmatpush1.bf16.msra.mxu0 %v5137
    %6180 = vmatprep.subr.bf16.mxu0 0
    %6181 = vmatpush1.bf16.msra.mxu0 %v5130
    %6182 = vmatprep.subr.bf16.mxu0 0
    %6183 = vmatpush1.bf16.msra.mxu0 %v5123
    %6184 = vmatprep.subr.bf16.mxu0 0
    %6185 = vmatpush1.bf16.msra.mxu0 %v5116
    %6186 = vmatprep.subr.bf16.mxu0 0
    %6187 = vmatpush1.bf16.msra.mxu0 %v5109
    %6188 = vmatprep.subr.bf16.mxu0 0
    %6189 = vmatpush1.bf16.msra.mxu0 %v5102
    %6190 = vmatprep.subr.bf16.mxu0 0
    %6191 = vmatpush1.bf16.msra.mxu0 %v5095
    %6192 = vmatprep.subr.bf16.mxu0 0
    %6193 = vmatpush2.bf16.msra.mxu0 0
    %6194 = vmatprep.subr.bf16.mxu0 0
    %6195 = vmatpush2.bf16.msra.mxu0 0
    %6196 = vmatprep.subr.bf16.mxu0 0
    %6197 = vmatpush2.bf16.msra.mxu0 0
    %6198 = vmatprep.subr.bf16.mxu0 0
    %6199 = vmatpush2.bf16.msra.mxu0 0
    %6200 = vmatprep.subr.bf16.mxu0 0
    %6201 = vmatpush2.bf16.msra.mxu0 0
    %6202 = vmatprep.subr.bf16.mxu0 0
    %6203 = vmatpush2.bf16.msra.mxu0 0
    %6204 = vmatprep.subr.bf16.mxu0 0
    %6205 = vmatpush2.bf16.msra.mxu0 0
    %6206 = vmatprep.subr.bf16.mxu0 0
    %6207 = vmatpush2.bf16.msra.mxu0 0
    %6208 = vmatprep.mubr.bf16.mxu0 0
    %6209 = vmatmul.mubr.bf16.gmra.mxu0 %v3035
    %v6210 = vpop.f32.mrf.mxu0
    %v6211 = vadd.f32 %v6170, %v6210
    %v6212 = vpop.f32.mrf.mxu0
    %v6213 = vpop.f32.mrf.mxu0
    %v6214 = vadd.f32 %v6173, %v6213
    %v6215 = vpop.f32.mrf.mxu0
    %6216 = vdwg.mxu0
    %v6217 = vtanh.pop %v5701
    %v6218 = vtanh.pop %v5703
    %v6219 = vtanh.pop %v5873
    %v6220 = vtanh.pop %v5875
    %v6221 = vtanh.pop %v6045
    %v6222 = vtanh.pop %v6047
    %v6223 = vtanh.pop %v6211
    %v6224 = vtanh.pop %v5705
    %v6225 = vtanh.pop %v5707
    %v6226 = vtanh.pop %v5877
    %v6227 = vtanh.pop %v5879
    %v6228 = vtanh.pop %v6049
    %v6229 = vtanh.pop %v6051
    %v6230 = vtanh.pop %v6214
    %v6231 = vpack.c.bf16 %v6224, %v6217
    %v6232 = vpack.c.bf16 %v6225, %v6218
    %v6233 = vpack.c.bf16 %v6226, %v6219
    %v6234 = vpack.c.bf16 %v6227, %v6220
    %v6235 = vpack.c.bf16 %v6228, %v6221
    %v6236 = vpack.c.bf16 %v6229, %v6222
    %v6237 = vpack.c.bf16 %v6230, %v6223
    %v6238 = vld [vmem:[#allocation11] sm:$0xf]
    %v6239 = vld [vmem:[#allocation11 + $0x4] sm:$0xf]
    %v6240 = vld [vmem:[#allocation11 + $0x8] sm:$0xf]
    %v6241 = vld [vmem:[#allocation11 + $0xc] sm:$0xf]
    %v6242 = vld [vmem:[#allocation11 + $0x10] sm:$0xf]
    %v6243 = vld [vmem:[#allocation11 + $0x14] sm:$0xf]
    %v6244 = vld [vmem:[#allocation11 + $0x18] sm:$0xf]
    %v6245 = vld [vmem:[#allocation11 + $0x1c] sm:$0xf]
    %v6246 = vld [vmem:[#allocation11 + $0x20] sm:$0xf]
    %v6247 = vld [vmem:[#allocation11 + $0x24] sm:$0xf]
    %v6248 = vld [vmem:[#allocation11 + $0x28] sm:$0xf]
    %v6249 = vld [vmem:[#allocation11 + $0x2c] sm:$0xf]
    %v6250 = vld [vmem:[#allocation11 + $0x30] sm:$0xf]
    %v6251 = vld [vmem:[#allocation11 + $0x34] sm:$0xf]
    %v6252 = vld [vmem:[#allocation11 + $0x38] sm:$0xf]
    %v6253 = vld [vmem:[#allocation11 + $0x3c] sm:$0xf]
    %v6254 = vld [vmem:[#allocation11 + $0x40] sm:$0xf]
    %v6255 = vld [vmem:[#allocation11 + $0x44] sm:$0xf]
    %v6256 = vld [vmem:[#allocation11 + $0x48] sm:$0xf]
    %v6257 = vld [vmem:[#allocation11 + $0x4c] sm:$0xf]
    %v6258 = vld [vmem:[#allocation11 + $0x50] sm:$0xf]
    %v6259 = vld [vmem:[#allocation11 + $0x54] sm:$0xf]
    %v6260 = vld [vmem:[#allocation11 + $0x58] sm:$0xf]
    %v6261 = vld [vmem:[#allocation11 + $0x5c] sm:$0xf]
    %v6262 = vld [vmem:[#allocation11 + $0x60] sm:$0xf]
    %v6263 = vld [vmem:[#allocation11 + $0x64] sm:$0xf]
    %v6264 = vld [vmem:[#allocation11 + $0x68] sm:$0xf]
    %v6265 = vld [vmem:[#allocation11 + $0x6c] sm:$0xf]
    %v6266 = vld [vmem:[#allocation11 + $0x70] sm:$0xf]
    %v6267 = vld [vmem:[#allocation11 + $0x74] sm:$0xf]
    %v6268 = vld [vmem:[#allocation11 + $0x78] sm:$0xf]
    %v6269 = vld [vmem:[#allocation11 + $0x7c] sm:$0xf]
    %v6270 = vld [vmem:[#allocation11 + $0x80] sm:$0xf]
    %v6271 = vld [vmem:[#allocation11 + $0x84] sm:$0xf]
    %v6272 = vld [vmem:[#allocation11 + $0x88] sm:$0xf]
    %v6273 = vld [vmem:[#allocation11 + $0x8c] sm:$0xf]
    %v6274 = vld [vmem:[#allocation11 + $0x90] sm:$0xf]
    %v6275 = vld [vmem:[#allocation11 + $0x94] sm:$0xf]
    %v6276 = vld [vmem:[#allocation11 + $0x98] sm:$0xf]
    %v6277 = vld [vmem:[#allocation11 + $0x9c] sm:$0xf]
    %v6278 = vld [vmem:[#allocation11 + $0xa0] sm:$0xf]
    %v6279 = vld [vmem:[#allocation11 + $0xa4] sm:$0xf]
    %v6280 = vld [vmem:[#allocation11 + $0xa8] sm:$0xf]
    %v6281 = vld [vmem:[#allocation11 + $0xac] sm:$0xf]
    %v6282 = vld [vmem:[#allocation11 + $0xb0] sm:$0xf]
    %v6283 = vld [vmem:[#allocation11 + $0xb4] sm:$0xf]
    %v6284 = vld [vmem:[#allocation11 + $0xb8] sm:$0xf]
    %v6285 = vld [vmem:[#allocation11 + $0xbc] sm:$0xf]
    %v6286 = vld [vmem:[#allocation11 + $0xc0] sm:$0xf]
    %v6287 = vld [vmem:[#allocation11 + $0xc4] sm:$0xf]
    %v6288 = vld [vmem:[#allocation11 + $0xc8] sm:$0xf]
    %v6289 = vld [vmem:[#allocation11 + $0xcc] sm:$0xf]
    %v6290 = vld [vmem:[#allocation11 + $0xd0] sm:$0xf]
    %v6291 = vld [vmem:[#allocation11 + $0xd4] sm:$0xf]
    %v6292 = vld [vmem:[#allocation11 + $0xd8] sm:$0xf]
    %v6293 = vld [vmem:[#allocation11 + $0xdc] sm:$0xf]
    %v6294 = vld [vmem:[#allocation11 + $0xe0] sm:$0xf]
    %v6295 = vld [vmem:[#allocation11 + $0xe4] sm:$0xf]
    %v6296 = vld [vmem:[#allocation11 + $0xe8] sm:$0xf]
    %v6297 = vld [vmem:[#allocation11 + $0xec] sm:$0xf]
    %v6298 = vld [vmem:[#allocation11 + $0xf0] sm:$0xf]
    %v6299 = vld [vmem:[#allocation11 + $0xf4] sm:$0xf]
    %v6300 = vld [vmem:[#allocation11 + $0xf8] sm:$0xf]
    %v6301 = vld [vmem:[#allocation11 + $0xfc] sm:$0xf]
    %v6302 = vld [vmem:[#allocation11 + $0x100] sm:$0xf]
    %v6303 = vld [vmem:[#allocation11 + $0x104] sm:$0xf]
    %v6304 = vld [vmem:[#allocation11 + $0x108] sm:$0xf]
    %v6305 = vld [vmem:[#allocation11 + $0x10c] sm:$0xf]
    %v6306 = vld [vmem:[#allocation11 + $0x110] sm:$0xf]
    %v6307 = vld [vmem:[#allocation11 + $0x114] sm:$0xf]
    %v6308 = vld [vmem:[#allocation11 + $0x118] sm:$0xf]
    %v6309 = vld [vmem:[#allocation11 + $0x11c] sm:$0xf]
    %v6310 = vld [vmem:[#allocation11 + $0x120] sm:$0xf]
    %v6311 = vld [vmem:[#allocation11 + $0x124] sm:$0xf]
    %v6312 = vld [vmem:[#allocation11 + $0x128] sm:$0xf]
    %v6313 = vld [vmem:[#allocation11 + $0x12c] sm:$0xf]
    %v6314 = vld [vmem:[#allocation11 + $0x130] sm:$0xf]
    %v6315 = vld [vmem:[#allocation11 + $0x134] sm:$0xf]
    %v6316 = vld [vmem:[#allocation11 + $0x138] sm:$0xf]
    %v6317 = vld [vmem:[#allocation11 + $0x13c] sm:$0xf]
    %v6318 = vld [vmem:[#allocation11 + $0x140] sm:$0xf]
    %v6319 = vld [vmem:[#allocation11 + $0x144] sm:$0xf]
    %v6320 = vld [vmem:[#allocation11 + $0x148] sm:$0xf]
    %v6321 = vld [vmem:[#allocation11 + $0x14c] sm:$0xf]
    %v6322 = vld [vmem:[#allocation11 + $0x150] sm:$0xf]
    %v6323 = vld [vmem:[#allocation11 + $0x154] sm:$0xf]
    %v6324 = vld [vmem:[#allocation11 + $0x158] sm:$0xf]
    %v6325 = vld [vmem:[#allocation11 + $0x15c] sm:$0xf]
    %v6326 = vld [vmem:[#allocation11 + $0x160] sm:$0xf]
    %v6327 = vld [vmem:[#allocation11 + $0x164] sm:$0xf]
    %v6328 = vld [vmem:[#allocation11 + $0x168] sm:$0xf]
    %v6329 = vld [vmem:[#allocation11 + $0x16c] sm:$0xf]
    %v6330 = vld [vmem:[#allocation11 + $0x170] sm:$0xf]
    %v6331 = vld [vmem:[#allocation11 + $0x174] sm:$0xf]
    %v6332 = vld [vmem:[#allocation11 + $0x178] sm:$0xf]
    %v6333 = vld [vmem:[#allocation11 + $0x17c] sm:$0xf]
    %v6334 = vld [vmem:[#allocation11 + $0x180] sm:$0xf]
    %v6335 = vld [vmem:[#allocation11 + $0x184] sm:$0xf]
    %v6336 = vld [vmem:[#allocation11 + $0x188] sm:$0xf]
    %v6337 = vld [vmem:[#allocation11 + $0x18c] sm:$0xf]
    %v6338 = vld [vmem:[#allocation11 + $0x190] sm:$0xf]
    %v6339 = vld [vmem:[#allocation11 + $0x194] sm:$0xf]
    %v6340 = vld [vmem:[#allocation11 + $0x198] sm:$0xf]
    %v6341 = vld [vmem:[#allocation11 + $0x19c] sm:$0xf]
    %v6342 = vld [vmem:[#allocation11 + $0x1a0] sm:$0xf]
    %v6343 = vld [vmem:[#allocation11 + $0x1a4] sm:$0xf]
    %v6344 = vld [vmem:[#allocation11 + $0x1a8] sm:$0xf]
    %v6345 = vld [vmem:[#allocation11 + $0x1ac] sm:$0xf]
    %v6346 = vld [vmem:[#allocation11 + $0x1b0] sm:$0xf]
    %v6347 = vld [vmem:[#allocation11 + $0x1b4] sm:$0xf]
    %v6348 = vld [vmem:[#allocation11 + $0x1b8] sm:$0xf]
    %v6349 = vld [vmem:[#allocation11 + $0x1bc] sm:$0xf]
    %v6350 = vld [vmem:[#allocation13] sm:$0x1]
    %v6352 = vlaneseq
    %v6353 = vshrl.u32 %v6352, 7
    %v6354 = vsub.s32 0, %v6353
    %v6355 = vrot.slane %v6350, %v6354
    %v6469 = vunpack.c.l.b16 %v6238
    %v6470 = vunpack.c.l.b16 %v6239
    %v6471 = vunpack.c.l.b16 %v6240
    %v6472 = vunpack.c.l.b16 %v6241
    %v6473 = vunpack.c.l.b16 %v6242
    %v6474 = vunpack.c.l.b16 %v6243
    %v6475 = vunpack.c.l.b16 %v6244
    %v6476 = vunpack.c.l.b16 %v6245
    %v6477 = vunpack.c.l.b16 %v6246
    %v6478 = vunpack.c.l.b16 %v6247
    %v6479 = vunpack.c.l.b16 %v6248
    %v6480 = vunpack.c.l.b16 %v6249
    %v6481 = vunpack.c.l.b16 %v6250
    %v6482 = vunpack.c.l.b16 %v6251
    %v6483 = vunpack.c.l.b16 %v6252
    %v6484 = vunpack.c.l.b16 %v6253
    %v6485 = vunpack.c.l.b16 %v6254
    %v6486 = vunpack.c.l.b16 %v6255
    %v6487 = vunpack.c.l.b16 %v6256
    %v6488 = vunpack.c.l.b16 %v6257
    %v6489 = vunpack.c.l.b16 %v6258
    %v6490 = vunpack.c.l.b16 %v6259
    %v6491 = vunpack.c.l.b16 %v6260
    %v6492 = vunpack.c.l.b16 %v6261
    %v6493 = vunpack.c.l.b16 %v6262
    %v6494 = vunpack.c.l.b16 %v6263
    %v6495 = vunpack.c.l.b16 %v6264
    %v6496 = vunpack.c.l.b16 %v6265
    %v6497 = vunpack.c.l.b16 %v6266
    %v6498 = vunpack.c.l.b16 %v6267
    %v6499 = vunpack.c.l.b16 %v6268
    %v6500 = vunpack.c.l.b16 %v6269
    %v6501 = vunpack.c.l.b16 %v6270
    %v6502 = vunpack.c.l.b16 %v6271
    %v6503 = vunpack.c.l.b16 %v6272
    %v6504 = vunpack.c.l.b16 %v6273
    %v6505 = vunpack.c.l.b16 %v6274
    %v6506 = vunpack.c.l.b16 %v6275
    %v6507 = vunpack.c.l.b16 %v6276
    %v6508 = vunpack.c.l.b16 %v6277
    %v6509 = vunpack.c.l.b16 %v6278
    %v6510 = vunpack.c.l.b16 %v6279
    %v6511 = vunpack.c.l.b16 %v6280
    %v6512 = vunpack.c.l.b16 %v6281
    %v6513 = vunpack.c.l.b16 %v6282
    %v6514 = vunpack.c.l.b16 %v6283
    %v6515 = vunpack.c.l.b16 %v6284
    %v6516 = vunpack.c.l.b16 %v6285
    %v6517 = vunpack.c.l.b16 %v6286
    %v6518 = vunpack.c.l.b16 %v6287
    %v6519 = vunpack.c.l.b16 %v6288
    %v6520 = vunpack.c.l.b16 %v6289
    %v6521 = vunpack.c.l.b16 %v6290
    %v6522 = vunpack.c.l.b16 %v6291
    %v6523 = vunpack.c.l.b16 %v6292
    %v6524 = vunpack.c.l.b16 %v6293
    %v6525 = vunpack.c.l.b16 %v6294
    %v6526 = vunpack.c.l.b16 %v6295
    %v6527 = vunpack.c.l.b16 %v6296
    %v6528 = vunpack.c.l.b16 %v6297
    %v6529 = vunpack.c.l.b16 %v6298
    %v6530 = vunpack.c.l.b16 %v6299
    %v6531 = vunpack.c.l.b16 %v6300
    %v6532 = vunpack.c.l.b16 %v6301
    %v6533 = vunpack.c.l.b16 %v6302
    %v6534 = vunpack.c.l.b16 %v6303
    %v6535 = vunpack.c.l.b16 %v6304
    %v6536 = vunpack.c.l.b16 %v6305
    %v6537 = vunpack.c.l.b16 %v6306
    %v6538 = vunpack.c.l.b16 %v6307
    %v6539 = vunpack.c.l.b16 %v6308
    %v6540 = vunpack.c.l.b16 %v6309
    %v6541 = vunpack.c.l.b16 %v6310
    %v6542 = vunpack.c.l.b16 %v6311
    %v6543 = vunpack.c.l.b16 %v6312
    %v6544 = vunpack.c.l.b16 %v6313
    %v6545 = vunpack.c.l.b16 %v6314
    %v6546 = vunpack.c.l.b16 %v6315
    %v6547 = vunpack.c.l.b16 %v6316
    %v6548 = vunpack.c.l.b16 %v6317
    %v6549 = vunpack.c.l.b16 %v6318
    %v6550 = vunpack.c.l.b16 %v6319
    %v6551 = vunpack.c.l.b16 %v6320
    %v6552 = vunpack.c.l.b16 %v6321
    %v6553 = vunpack.c.l.b16 %v6322
    %v6554 = vunpack.c.l.b16 %v6323
    %v6555 = vunpack.c.l.b16 %v6324
    %v6556 = vunpack.c.l.b16 %v6325
    %v6557 = vunpack.c.l.b16 %v6326
    %v6558 = vunpack.c.l.b16 %v6327
    %v6559 = vunpack.c.l.b16 %v6328
    %v6560 = vunpack.c.l.b16 %v6329
    %v6561 = vunpack.c.l.b16 %v6330
    %v6562 = vunpack.c.l.b16 %v6331
    %v6563 = vunpack.c.l.b16 %v6332
    %v6564 = vunpack.c.l.b16 %v6333
    %v6565 = vunpack.c.l.b16 %v6334
    %v6566 = vunpack.c.l.b16 %v6335
    %v6567 = vunpack.c.l.b16 %v6336
    %v6568 = vunpack.c.l.b16 %v6337
    %v6569 = vunpack.c.l.b16 %v6338
    %v6570 = vunpack.c.l.b16 %v6339
    %v6571 = vunpack.c.l.b16 %v6340
    %v6572 = vunpack.c.l.b16 %v6341
    %v6573 = vunpack.c.l.b16 %v6342
    %v6574 = vunpack.c.l.b16 %v6343
    %v6575 = vunpack.c.l.b16 %v6344
    %v6576 = vunpack.c.l.b16 %v6345
    %v6577 = vunpack.c.l.b16 %v6346
    %v6578 = vunpack.c.l.b16 %v6347
    %v6579 = vunpack.c.l.b16 %v6348
    %v6580 = vunpack.c.l.b16 %v6349
    %v6581 = vpack.c.b16 %v6470, %v6469
    %v6582 = vpack.c.b16 %v6472, %v6471
    %v6583 = vpack.c.b16 %v6474, %v6473
    %v6584 = vpack.c.b16 %v6476, %v6475
    %v6585 = vpack.c.b16 %v6478, %v6477
    %v6586 = vpack.c.b16 %v6480, %v6479
    %v6587 = vpack.c.b16 %v6482, %v6481
    %v6588 = vpack.c.b16 %v6484, %v6483
    %v6589 = vpack.c.b16 %v6486, %v6485
    %v6590 = vpack.c.b16 %v6488, %v6487
    %v6591 = vpack.c.b16 %v6490, %v6489
    %v6592 = vpack.c.b16 %v6492, %v6491
    %v6593 = vpack.c.b16 %v6494, %v6493
    %v6594 = vpack.c.b16 %v6496, %v6495
    %v6595 = vpack.c.b16 %v6498, %v6497
    %v6596 = vpack.c.b16 %v6500, %v6499
    %v6597 = vpack.c.b16 %v6502, %v6501
    %v6598 = vpack.c.b16 %v6504, %v6503
    %v6599 = vpack.c.b16 %v6506, %v6505
    %v6600 = vpack.c.b16 %v6508, %v6507
    %v6601 = vpack.c.b16 %v6510, %v6509
    %v6602 = vpack.c.b16 %v6512, %v6511
    %v6603 = vpack.c.b16 %v6514, %v6513
    %v6604 = vpack.c.b16 %v6516, %v6515
    %v6605 = vpack.c.b16 %v6518, %v6517
    %v6606 = vpack.c.b16 %v6520, %v6519
    %v6607 = vpack.c.b16 %v6522, %v6521
    %v6608 = vpack.c.b16 %v6524, %v6523
    %v6609 = vpack.c.b16 %v6526, %v6525
    %v6610 = vpack.c.b16 %v6528, %v6527
    %v6611 = vpack.c.b16 %v6530, %v6529
    %v6612 = vpack.c.b16 %v6532, %v6531
    %v6613 = vpack.c.b16 %v6534, %v6533
    %v6614 = vpack.c.b16 %v6536, %v6535
    %v6615 = vpack.c.b16 %v6538, %v6537
    %v6616 = vpack.c.b16 %v6540, %v6539
    %v6617 = vpack.c.b16 %v6542, %v6541
    %v6618 = vpack.c.b16 %v6544, %v6543
    %v6619 = vpack.c.b16 %v6546, %v6545
    %v6620 = vpack.c.b16 %v6548, %v6547
    %v6621 = vpack.c.b16 %v6550, %v6549
    %v6622 = vpack.c.b16 %v6552, %v6551
    %v6623 = vpack.c.b16 %v6554, %v6553
    %v6624 = vpack.c.b16 %v6556, %v6555
    %v6625 = vpack.c.b16 %v6558, %v6557
    %v6626 = vpack.c.b16 %v6560, %v6559
    %v6627 = vpack.c.b16 %v6562, %v6561
    %v6628 = vpack.c.b16 %v6564, %v6563
    %v6629 = vpack.c.b16 %v6566, %v6565
    %v6630 = vpack.c.b16 %v6568, %v6567
    %v6631 = vpack.c.b16 %v6570, %v6569
    %v6632 = vpack.c.b16 %v6572, %v6571
    %v6633 = vpack.c.b16 %v6574, %v6573
    %v6634 = vpack.c.b16 %v6576, %v6575
    %v6635 = vpack.c.b16 %v6578, %v6577
    %v6636 = vpack.c.b16 %v6580, %v6579
    %6693 = vmatprep.subr.bf16.mxu0 0
    %6694 = vmatpush1.bf16.msra.mxu0 %v6588
    %6695 = vmatprep.subr.bf16.mxu0 0
    %6696 = vmatpush1.bf16.msra.mxu0 %v6587
    %6697 = vmatprep.subr.bf16.mxu0 0
    %6698 = vmatpush1.bf16.msra.mxu0 %v6586
    %6699 = vmatprep.subr.bf16.mxu0 0
    %6700 = vmatpush1.bf16.msra.mxu0 %v6585
    %6701 = vmatprep.subr.bf16.mxu0 0
    %6702 = vmatpush1.bf16.msra.mxu0 %v6584
    %6703 = vmatprep.subr.bf16.mxu0 0
    %6704 = vmatpush1.bf16.msra.mxu0 %v6583
    %6705 = vmatprep.subr.bf16.mxu0 0
    %6706 = vmatpush1.bf16.msra.mxu0 %v6582
    %6707 = vmatprep.subr.bf16.mxu0 0
    %6708 = vmatpush1.bf16.msra.mxu0 %v6581
    %6709 = vmatprep.subr.bf16.mxu0 0
    %6710 = vmatpush2.bf16.msra.mxu0 %v6596
    %6711 = vmatprep.subr.bf16.mxu0 0
    %6712 = vmatpush2.bf16.msra.mxu0 %v6595
    %6713 = vmatprep.subr.bf16.mxu0 0
    %6714 = vmatpush2.bf16.msra.mxu0 %v6594
    %6715 = vmatprep.subr.bf16.mxu0 0
    %6716 = vmatpush2.bf16.msra.mxu0 %v6593
    %6717 = vmatprep.subr.bf16.mxu0 0
    %6718 = vmatpush2.bf16.msra.mxu0 %v6592
    %6719 = vmatprep.subr.bf16.mxu0 0
    %6720 = vmatpush2.bf16.msra.mxu0 %v6591
    %6721 = vmatprep.subr.bf16.mxu0 0
    %6722 = vmatpush2.bf16.msra.mxu0 %v6590
    %6723 = vmatprep.subr.bf16.mxu0 0
    %6724 = vmatpush2.bf16.msra.mxu0 %v6589
    %6725 = vmatprep.mubr.bf16.mxu0 %v6232
    %6726 = vmatmul.mubr.bf16.gmra.mxu0 %v6231
    %v6727 = vpop.f32.mrf.mxu0
    %v6728 = vadd.f32 %v6355, %v6727
    %v6729 = vpop.f32.mrf.mxu0
    %v6730 = vpop.f32.mrf.mxu0
    %v6731 = vadd.f32 %v6355, %v6730
    %v6732 = vpop.f32.mrf.mxu0
    %6733 = vdwg.mxu0
    %6734 = vmatprep.subr.bf16.mxu0 0
    %6735 = vmatpush1.bf16.msra.mxu0 %v6604
    %6736 = vmatprep.subr.bf16.mxu0 0
    %6737 = vmatpush1.bf16.msra.mxu0 %v6603
    %6738 = vmatprep.subr.bf16.mxu0 0
    %6739 = vmatpush1.bf16.msra.mxu0 %v6602
    %6740 = vmatprep.subr.bf16.mxu0 0
    %6741 = vmatpush1.bf16.msra.mxu0 %v6601
    %6742 = vmatprep.subr.bf16.mxu0 0
    %6743 = vmatpush1.bf16.msra.mxu0 %v6600
    %6744 = vmatprep.subr.bf16.mxu0 0
    %6745 = vmatpush1.bf16.msra.mxu0 %v6599
    %6746 = vmatprep.subr.bf16.mxu0 0
    %6747 = vmatpush1.bf16.msra.mxu0 %v6598
    %6748 = vmatprep.subr.bf16.mxu0 0
    %6749 = vmatpush1.bf16.msra.mxu0 %v6597
    %6750 = vmatprep.subr.bf16.mxu0 0
    %6751 = vmatpush2.bf16.msra.mxu0 %v6612
    %6752 = vmatprep.subr.bf16.mxu0 0
    %6753 = vmatpush2.bf16.msra.mxu0 %v6611
    %6754 = vmatprep.subr.bf16.mxu0 0
    %6755 = vmatpush2.bf16.msra.mxu0 %v6610
    %6756 = vmatprep.subr.bf16.mxu0 0
    %6757 = vmatpush2.bf16.msra.mxu0 %v6609
    %6758 = vmatprep.subr.bf16.mxu0 0
    %6759 = vmatpush2.bf16.msra.mxu0 %v6608
    %6760 = vmatprep.subr.bf16.mxu0 0
    %6761 = vmatpush2.bf16.msra.mxu0 %v6607
    %6762 = vmatprep.subr.bf16.mxu0 0
    %6763 = vmatpush2.bf16.msra.mxu0 %v6606
    %6764 = vmatprep.subr.bf16.mxu0 0
    %6765 = vmatpush2.bf16.msra.mxu0 %v6605
    %6766 = vmatprep.mubr.bf16.mxu0 %v6234
    %6767 = vmatmul.mubr.bf16.gmra.mxu0 %v6233
    %v6768 = vpop.f32.mrf.mxu0
    %v6769 = vadd.f32 %v6728, %v6768
    %v6770 = vpop.f32.mrf.mxu0
    %v6771 = vpop.f32.mrf.mxu0
    %v6772 = vadd.f32 %v6731, %v6771
    %v6773 = vpop.f32.mrf.mxu0
    %6774 = vdwg.mxu0
    %6775 = vmatprep.subr.bf16.mxu0 0
    %6776 = vmatpush1.bf16.msra.mxu0 %v6620
    %6777 = vmatprep.subr.bf16.mxu0 0
    %6778 = vmatpush1.bf16.msra.mxu0 %v6619
    %6779 = vmatprep.subr.bf16.mxu0 0
    %6780 = vmatpush1.bf16.msra.mxu0 %v6618
    %6781 = vmatprep.subr.bf16.mxu0 0
    %6782 = vmatpush1.bf16.msra.mxu0 %v6617
    %6783 = vmatprep.subr.bf16.mxu0 0
    %6784 = vmatpush1.bf16.msra.mxu0 %v6616
    %6785 = vmatprep.subr.bf16.mxu0 0
    %6786 = vmatpush1.bf16.msra.mxu0 %v6615
    %6787 = vmatprep.subr.bf16.mxu0 0
    %6788 = vmatpush1.bf16.msra.mxu0 %v6614
    %6789 = vmatprep.subr.bf16.mxu0 0
    %6790 = vmatpush1.bf16.msra.mxu0 %v6613
    %6791 = vmatprep.subr.bf16.mxu0 0
    %6792 = vmatpush2.bf16.msra.mxu0 %v6628
    %6793 = vmatprep.subr.bf16.mxu0 0
    %6794 = vmatpush2.bf16.msra.mxu0 %v6627
    %6795 = vmatprep.subr.bf16.mxu0 0
    %6796 = vmatpush2.bf16.msra.mxu0 %v6626
    %6797 = vmatprep.subr.bf16.mxu0 0
    %6798 = vmatpush2.bf16.msra.mxu0 %v6625
    %6799 = vmatprep.subr.bf16.mxu0 0
    %6800 = vmatpush2.bf16.msra.mxu0 %v6624
    %6801 = vmatprep.subr.bf16.mxu0 0
    %6802 = vmatpush2.bf16.msra.mxu0 %v6623
    %6803 = vmatprep.subr.bf16.mxu0 0
    %6804 = vmatpush2.bf16.msra.mxu0 %v6622
    %6805 = vmatprep.subr.bf16.mxu0 0
    %6806 = vmatpush2.bf16.msra.mxu0 %v6621
    %6807 = vmatprep.mubr.bf16.mxu0 %v6236
    %6808 = vmatmul.mubr.bf16.gmra.mxu0 %v6235
    %v6809 = vpop.f32.mrf.mxu0
    %v6810 = vadd.f32 %v6769, %v6809
    %v6811 = vpop.f32.mrf.mxu0
    %v6812 = vpop.f32.mrf.mxu0
    %v6813 = vadd.f32 %v6772, %v6812
    %v6814 = vpop.f32.mrf.mxu0
    %6815 = vdwg.mxu0
    %6816 = vmatprep.subr.bf16.mxu0 0
    %6817 = vmatpush1.bf16.msra.mxu0 %v6636
    %6818 = vmatprep.subr.bf16.mxu0 0
    %6819 = vmatpush1.bf16.msra.mxu0 %v6635
    %6820 = vmatprep.subr.bf16.mxu0 0
    %6821 = vmatpush1.bf16.msra.mxu0 %v6634
    %6822 = vmatprep.subr.bf16.mxu0 0
    %6823 = vmatpush1.bf16.msra.mxu0 %v6633
    %6824 = vmatprep.subr.bf16.mxu0 0
    %6825 = vmatpush1.bf16.msra.mxu0 %v6632
    %6826 = vmatprep.subr.bf16.mxu0 0
    %6827 = vmatpush1.bf16.msra.mxu0 %v6631
    %6828 = vmatprep.subr.bf16.mxu0 0
    %6829 = vmatpush1.bf16.msra.mxu0 %v6630
    %6830 = vmatprep.subr.bf16.mxu0 0
    %6831 = vmatpush1.bf16.msra.mxu0 %v6629
    %6832 = vmatprep.subr.bf16.mxu0 0
    %6833 = vmatpush2.bf16.msra.mxu0 0
    %6834 = vmatprep.subr.bf16.mxu0 0
    %6835 = vmatpush2.bf16.msra.mxu0 0
    %6836 = vmatprep.subr.bf16.mxu0 0
    %6837 = vmatpush2.bf16.msra.mxu0 0
    %6838 = vmatprep.subr.bf16.mxu0 0
    %6839 = vmatpush2.bf16.msra.mxu0 0
    %6840 = vmatprep.subr.bf16.mxu0 0
    %6841 = vmatpush2.bf16.msra.mxu0 0
    %6842 = vmatprep.subr.bf16.mxu0 0
    %6843 = vmatpush2.bf16.msra.mxu0 0
    %6844 = vmatprep.subr.bf16.mxu0 0
    %6845 = vmatpush2.bf16.msra.mxu0 0
    %6846 = vmatprep.subr.bf16.mxu0 0
    %6847 = vmatpush2.bf16.msra.mxu0 0
    %6848 = vmatprep.mubr.bf16.mxu0 0
    %6849 = vmatmul.mubr.bf16.gmra.mxu0 %v6237
    %v6850 = vpop.f32.mrf.mxu0
    %v6851 = vadd.f32 %v6810, %v6850
    %v6852 = vpop.f32.mrf.mxu0
    %v6853 = vpop.f32.mrf.mxu0
    %v6854 = vadd.f32 %v6813, %v6853
    %v6855 = vpop.f32.mrf.mxu0
    %6856 = vdwg.mxu0
    %6857 = vst [vmem:[#allocation14] sm:$0xff] %v6851
    %6858 = vst [vmem:[#allocation14 + $0x8] sm:$0xff] %v6854
    // Predicated region
    $region58: #{tpu_custom_call.1} parent=1 // pred_check
      _
    $region59: #{tpu_custom_call.1} parent=1 // pred_check_branch
      %6860 = sbr.rel (0) target = $region61
    $region60: #{tpu_custom_call.1} parent=1 // pred_region
      %s6862 = ssub.s32 256, 256
      %6863 = vsyncadd [#allocation4], %s6862
      %s6864 = sshll.u32 [#allocation14], 4
      %s6865 = int_to_ptr.vmem [resolvable:$true] %s6864
      %6870 = dma.vmem_to_hbm [thread:$0]  %s6865, 256, %s7, [#allocation4], 128, 128, 8
    $region61: #{tpu_custom_call.1} parent=1 // pred_fallthru
      _
    // Predicated region
    $region62: #{tpu_custom_call.1} parent=1 // pred_check
      _
    $region63: #{tpu_custom_call.1} parent=1 // pred_check_branch
      %6872 = sbr.rel (0) target = $region65
    $region64: #{tpu_custom_call.1} parent=1 // pred_region
      %6873 = dma.done [#allocation4], 256
    $region65: #{tpu_custom_call.1} parent=1 // pred_fallthru
      _
    %6874 = vsyncpa [#allocation3], 1
    %6875 = vsyncpa [#allocation6], 1
    %6876 = vsyncpa [#allocation9], 1
    %6877 = vsyncpa [#allocation12], 1
    %6878 = vsyncpa [#allocation4], 1

</llo_original>
